<compile_context>
chip_gen: v5e
topology: v5e:2x2
jax: 0.10.0
libtpu: 0.0.40
codegen_flags: <defaults>
</compile_context>

<pallas_src>
import numpy as np
import jax
import jax.numpy as jnp
from jax import lax
from jax.experimental import pallas as pl
from jax.experimental.pallas import tpu as pltpu


# ----------------------------------------------------------------------------
# Parameter setup (deterministic, mirrors _fspecial_gauss_1d in the module)
# ----------------------------------------------------------------------------
def _fspecial_gauss_1d(size, sigma):
    """1-D normalized Gaussian kernel, returned as a numpy (size,) array."""
    coords = np.arange(size, dtype=np.float32) - size // 2
    g = np.exp(-(coords ** 2) / (2.0 * sigma ** 2))
    g = g / g.sum()
    return g.astype(np.float32)


def _banded_filter_matrices(H, W, taps):
    """A_H (Hp,H), A_W (W,Wp) such that A_H @ a @ A_W == valid separable conv of a."""
    K = int(taps.shape[0])
    Hp, Wp = H - K + 1, W - K + 1
    AH = np.zeros((Hp, H), np.float32)
    AW = np.zeros((W, Wp), np.float32)
    for k in range(K):
        AH[np.arange(Hp), np.arange(Hp) + k] = taps[k]
        AW[np.arange(Wp) + k, np.arange(Wp)] = taps[k]
    return AH, AW


def _pool_matrices(H, W):
    """P_H (Hc,H), P_W (W,Wc): P_H @ x @ P_W == F.avg_pool2d(x, 2, padding=(H%2, W%2)).

    Each tap is 0.5, so the (i, j) product weight is 0.25 == 1/kernel_area
    (count_include_pad=True); padded positions simply have no tap.
    """
    ph, pw = H % 2, W % 2
    Hc, Wc = (H + ph) // 2, (W + pw) // 2
    PH = np.zeros((Hc, H), np.float32)
    PW = np.zeros((W, Wc), np.float32)
    for r in range(Hc):
        for d in range(2):
            i = 2 * r + d - ph
            if 0 <= i < H:
                PH[r, i] = 0.5
    for c in range(Wc):
        for d in range(2):
            j = 2 * c + d - pw
            if 0 <= j < W:
                PW[j, c] = 0.5
    return PH, PW, Hc, Wc


# ----------------------------------------------------------------------------
# Fused Pallas kernel: the whole MS-SSIM pyramid for one (H, W) plane per
# grid step.  All levels (Gaussian filters, SSIM/CS maps, spatial means and
# the fused 2x2 avg-pool downsamples) run in VMEM; only `levels` scalars per
# plane go back to HBM.
# ----------------------------------------------------------------------------
def _make_pyramid_kernel(levels, rows, C1, C2, in_dtype):
    c1, c2 = float(C1), float(C2)

    def kernel(*refs):
        x_ref, y_ref = refs[0], refs[1]
        filt_refs = refs[2:2 + 2 * levels]                       # AH_l, AW_l interleaved
        pool_refs = refs[2 + 2 * levels:2 + 2 * levels + 2 * (levels - 1)]
        out_ref = refs[-1]

        # Narrow input dtypes (e.g. bf16) are DMA'd as-is and widened here.
        x = x_ref[...].astype(jnp.float32)        # (H, W)
        y = y_ref[...].astype(jnp.float32)

        vals = []                                  # per-level scalar: cs_0..cs_{L-2}, ssim_{L-1}
        for lvl in range(levels):
            ah = filt_refs[2 * lvl][...]           # (Hp, H)  banded Gaussian
            aw = filt_refs[2 * lvl + 1][...]       # (W, Wp)

            def gf(a, ah=ah, aw=aw):
                # Valid separable Gaussian conv as two MXU matmuls.
                t = jnp.dot(a, aw, preferred_element_type=jnp.float32)     # (H, Wp)
                return jnp.dot(ah, t, preferred_element_type=jnp.float32)  # (Hp, Wp)

            mu1, mu2 = gf(x), gf(y)
            fxx, fyy, fxy = gf(x * x), gf(y * y), gf(x * y)

            mu1_sq, mu2_sq, mu12 = mu1 * mu1, mu2 * mu2, mu1 * mu2
            s1, s2, s12 = fxx - mu1_sq, fyy - mu2_sq, fxy - mu12

            # Exact reciprocal; approx=True (EUP vrcp) is available if ~1e-3
            # relative error in the SSIM ratios is acceptable.
            cs_map = (2.0 * s12 + c2) * pl.reciprocal(s1 + s2 + c2, approx=False)
            Hp, Wp = cs_map.shape
            inv_area = 1.0 / float(Hp * Wp)

            if lvl < levels - 1:
                vals.append(jnp.sum(cs_map, keepdims=True) * inv_area)      # (1, 1)
                # Fused 2x2 avg-pool (torch avg_pool2d, padding=(H%2, W%2),
                # count_include_pad=True) for the next level, also on the MXU.
                ph = pool_refs[2 * lvl][...]       # (Hc, H)
                pw = pool_refs[2 * lvl + 1][...]   # (W, Wc)
                xp = jnp.dot(ph, jnp.dot(x, pw, preferred_element_type=jnp.float32),
                             preferred_element_type=jnp.float32)
                yp = jnp.dot(ph, jnp.dot(y, pw, preferred_element_type=jnp.float32),
                             preferred_element_type=jnp.float32)
                # Round-trip through the input dtype so non-f32 inputs match the
                # reference, which carries pooled images in the original dtype.
                x = xp.astype(in_dtype).astype(jnp.float32)
                y = yp.astype(in_dtype).astype(jnp.float32)
            else:
                ssim_map = ((2.0 * mu12 + c1)
                            * pl.reciprocal(mu1_sq + mu2_sq + c1, approx=False)
                            * cs_map)
                vals.append(jnp.sum(ssim_map, keepdims=True) * inv_area)    # (1, 1)

        # Pack the per-level scalars into one lane-dense (rows, 128) block so
        # we do a single unmasked store + one small output DMA per grid step.
        row_ids = lax.broadcasted_iota(jnp.int32, (rows, 128), 0)
        acc = jnp.zeros((rows, 128), jnp.float32)
        for i, v in enumerate(vals):
            acc = jnp.where(row_ids == i, jnp.broadcast_to(v, (rows, 128)), acc)
        out_ref[...] = acc

    return kernel


def _ms_ssim_pallas(X, Y, win, data_range, weights, K, size_average):
    """Full MS-SSIM forward.  X, Y: (N, C, H, W)."""
    N, C, H, W = X.shape
    NC = N * C
    levels = len(weights)
    K1, K2 = K
    C1 = (K1 * data_range) ** 2
    C2 = (K2 * data_range) ** 2

    # Per-level banded-filter and pooling matrices (trace-time constants).
    filt_mats, pool_mats = [], []
    h, w = H, W
    for lvl in range(levels):
        AH, AW = _banded_filter_matrices(h, w, win)
        filt_mats.append((AH, AW))
        if lvl < levels - 1:
            PH, PW, hc, wc = _pool_matrices(h, w)
            pool_mats.append((PH, PW))
            h, w = hc, wc

    Xf = X.reshape(NC, H, W)
    Yf = Y.reshape(NC, H, W)

    # Single flattened (N*C) grid axis: simple index maps, one parallel axis
    # that megacore sharding can split even when N or C is small.
    plane_spec = pl.BlockSpec((None, H, W), lambda i: (i, 0, 0))

    def const_spec(shape):
        return pl.BlockSpec(shape, lambda i: (0, 0))

    in_specs = [plane_spec, plane_spec]
    inputs = [Xf, Yf]
    for AH, AW in filt_mats:
        in_specs += [const_spec(AH.shape), const_spec(AW.shape)]
        inputs += [jnp.asarray(AH), jnp.asarray(AW)]
    for PH, PW in pool_mats:
        in_specs += [const_spec(PH.shape), const_spec(PW.shape)]
        inputs += [jnp.asarray(PH), jnp.asarray(PW)]

    rows = max(8, ((levels + 7) // 8) * 8)          # lane/sublane-dense stats block
    out_shape = jax.ShapeDtypeStruct((NC, rows, 128), jnp.float32)
    out_spec = pl.BlockSpec((None, rows, 128), lambda i: (i, 0, 0))

    # v5e's default scoped-VMEM limit is only 16 MiB: raise it when whole-plane
    # f32 intermediates need it (small shapes stay on the default).
    # TODO(synk): for very large planes (v7x has only 64 MiB physical VMEM),
    # tile level 0 along H with a (ksize-1)-row halo instead of whole planes.
    itemsize = np.dtype(X.dtype).itemsize
    est_bytes = 24 * H * W * 4 + 4 * H * W * itemsize
    vmem_limit = None
    if est_bytes > 12 * 1024 * 1024:
        vmem_limit = min(112 * 1024 * 1024, est_bytes + (16 << 20))

    stats = pl.pallas_call(
        _make_pyramid_kernel(levels, rows, C1, C2, X.dtype),
        out_shape=out_shape,
        grid=(NC,),
        in_specs=in_specs,
        out_specs=out_spec,
        compiler_params=pltpu.CompilerParams(
            dimension_semantics=("parallel",),
            vmem_limit_bytes=vmem_limit),
    )(*inputs)

    vals = stats[:, :levels, 0].reshape(N, C, levels)        # cs_0..cs_{L-2}, ssim_{L-1}
    vals = jax.nn.relu(vals)
    wts = jnp.asarray(weights, jnp.float32).reshape(1, 1, -1)
    ms_val = jnp.prod(vals ** wts, axis=-1)                  # (N, C)
    return ms_val.mean() if size_average else ms_val.mean(axis=1)


# ----------------------------------------------------------------------------
# Module wrapper
# ----------------------------------------------------------------------------
class MS_SSIM:
    """Pallas-backed analog of the PyTorch MS_SSIM module (forward only)."""

    def __init__(self, data_range=255, size_average=True, win_size=11,
                 win_sigma=1.5, channel=3, spatial_dims=2, weights=None,
                 K=(0.01, 0.03)):
        if win_size % 2 != 1:
            raise ValueError("Window size should be odd.")
        if spatial_dims != 2:
            # TODO(synk): 3-D (N,C,T,H,W) path (F.conv3d / avg_pool3d) not implemented.
            raise NotImplementedError("Only spatial_dims=2 is supported.")
        self.win_size = win_size
        # torch stores win repeated to (channel, 1, 1, win_size); it is the same
        # 1-D kernel for every channel, so we keep the 1-D taps.
        self.win = _fspecial_gauss_1d(win_size, win_sigma)
        self.size_average = size_average
        self.data_range = data_range
        self.weights = (weights if weights is not None
                        else [0.0448, 0.2856, 0.3001, 0.2363, 0.1333])
        self.K = K
        self.channel = channel

    def __call__(self, X, Y):
        if X.shape != Y.shape:
            raise ValueError("Input images should have the same dimensions.")
        # (trailing size-1 squeeze from the reference is a no-op for NCHW inputs)
        smaller_side = min(X.shape[-2:])
        assert smaller_side > (self.win_size - 1) * 2 ** 4, (
            "Image size should be larger than %d" % ((self.win_size - 1) * 2 ** 4))
        return _ms_ssim_pallas(X, Y, self.win, self.data_range, self.weights,
                               self.K, self.size_average)


# ----------------------------------------------------------------------------
# Pure-JAX reference (depthwise convs via lax.conv_general_dilated) for checking
# ----------------------------------------------------------------------------
def _ref_gauss_filter(x, g):
    N, C, H, W = x.shape
    Kw = g.shape[0]
    g = jnp.asarray(g, jnp.float32)
    wH = jnp.tile(g.reshape(1, 1, Kw, 1), (C, 1, 1, 1))
    wW = jnp.tile(g.reshape(1, 1, 1, Kw), (C, 1, 1, 1))
    dn = ("NCHW", "OIHW", "NCHW")
    out = lax.conv_general_dilated(x, wH, (1, 1), "VALID",
                                   dimension_numbers=dn, feature_group_count=C)
    out = lax.conv_general_dilated(out, wW, (1, 1), "VALID",
                                   dimension_numbers=dn, feature_group_count=C)
    return out


def _avg_pool2(x):
    N, C, H, W = x.shape
    ph, pw = H % 2, W % 2
    if ph or pw:
        # torch pads both sides, but with stride 2 the rightmost pad element is
        # never visited, so a left-only pad reproduces the same windows.
        x = jnp.pad(x, ((0, 0), (0, 0), (ph, 0), (pw, 0)))
    N, C, H2, W2 = x.shape
    x = x.reshape(N, C, H2 // 2, 2, W2 // 2, 2)
    return x.sum(axis=(3, 5)) * 0.25  # divide by kernel area (include pad)


def _ms_ssim_ref(X, Y, win, data_range, weights, K, size_average):
    K1, K2 = K
    C1 = (K1 * data_range) ** 2
    C2 = (K2 * data_range) ** 2
    levels = len(weights)
    w = jnp.asarray(weights, jnp.float32)

    mcs = []
    ssim_pc = None
    for i in range(levels):
        mu1 = _ref_gauss_filter(X, win)
        mu2 = _ref_gauss_filter(Y, win)
        mu1_sq, mu2_sq, mu1_mu2 = mu1 * mu1, mu2 * mu2, mu1 * mu2
        s1 = _ref_gauss_filter(X * X, win) - mu1_sq
        s2 = _ref_gauss_filter(Y * Y, win) - mu2_sq
        s12 = _ref_gauss_filter(X * Y, win) - mu1_mu2
        cs_map = (2 * s12 + C2) / (s1 + s2 + C2)
        ssim_map = (2 * mu1_mu2 + C1) / (mu1_sq + mu2_sq + C1) * cs_map
        N, C = X.shape[:2]
        ssim_pc = ssim_map.reshape(N, C, -1).mean(-1)
        cs = cs_map.reshape(N, C, -1).mean(-1)
        if i < levels - 1:
            mcs.append(jax.nn.relu(cs))
            X, Y = _avg_pool2(X), _avg_pool2(Y)
    ssim_pc = jax.nn.relu(ssim_pc)
    stacked = jnp.stack(mcs + [ssim_pc], axis=0)             # (levels, N, C)
    val = jnp.prod(stacked ** w.reshape(-1, 1, 1), axis=0)   # (N, C)
    return val.mean() if size_average else val.mean(axis=1)


# ----------------------------------------------------------------------------
# Demo
# ----------------------------------------------------------------------------
if __name__ == "__main__":
    key = jax.random.PRNGKey(0)
    kx, ky = jax.random.split(key)

    # MS-SSIM needs min(H, W) > (win_size - 1) * 2**4.  With win_size=3 a 50x50
    # image is small, satisfies the constraint, and exercises the odd-size
    # avg-pool padding path (50 -> 25 -> 13 -> 7 -> 4).
    N, C, H, W = 2, 3, 50, 50
    X = jax.random.uniform(kx, (N, C, H, W), dtype=jnp.float32)
    Y = jax.random.uniform(ky, (N, C, H, W), dtype=jnp.float32)

    model = MS_SSIM(data_range=1.0, size_average=True, win_size=3,
                    win_sigma=1.5, channel=C, spatial_dims=2)

    out = jax.block_until_ready(model(X, Y))

    # Correctness check against a pure-JAX (XLA conv) reference of the same math.
    ref = _ms_ssim_ref(X, Y, model.win, model.data_range, model.weights,
                       model.K, model.size_average)
    ref = jax.block_until_ready(ref)

    assert np.isfinite(float(out)), "non-finite MS-SSIM output"
    assert np.allclose(np.asarray(out), np.asarray(ref), rtol=1e-3, atol=5e-4), (
        float(out), float(ref))

    print("KERNEL_OK")
</pallas_src>

<mosaic_0001>
module attributes {stable_mosaic.version = 11 : i64} {
  func.func @kernel(%arg0: i32, %arg1: memref<1x50x50xf32, #tpu.memory_space<vmem>>, %arg2: memref<1x50x50xf32, #tpu.memory_space<vmem>>, %arg3: memref<48x50xf32, #tpu.memory_space<vmem>>, %arg4: memref<50x48xf32, #tpu.memory_space<vmem>>, %arg5: memref<23x25xf32, #tpu.memory_space<vmem>>, %arg6: memref<25x23xf32, #tpu.memory_space<vmem>>, %arg7: memref<11x13xf32, #tpu.memory_space<vmem>>, %arg8: memref<13x11xf32, #tpu.memory_space<vmem>>, %arg9: memref<5x7xf32, #tpu.memory_space<vmem>>, %arg10: memref<7x5xf32, #tpu.memory_space<vmem>>, %arg11: memref<2x4xf32, #tpu.memory_space<vmem>>, %arg12: memref<4x2xf32, #tpu.memory_space<vmem>>, %arg13: memref<25x50xf32, #tpu.memory_space<vmem>>, %arg14: memref<50x25xf32, #tpu.memory_space<vmem>>, %arg15: memref<13x25xf32, #tpu.memory_space<vmem>>, %arg16: memref<25x13xf32, #tpu.memory_space<vmem>>, %arg17: memref<7x13xf32, #tpu.memory_space<vmem>>, %arg18: memref<13x7xf32, #tpu.memory_space<vmem>>, %arg19: memref<4x7xf32, #tpu.memory_space<vmem>>, %arg20: memref<7x4xf32, #tpu.memory_space<vmem>>, %arg21: memref<1x8x128xf32, #tpu.memory_space<vmem>>) attributes {dimension_semantics = [#tpu.dimension_semantics<parallel>], iteration_bounds = array<i64: 6>, scalar_prefetch = 0 : i64, scratch_operands = 0 : i64, tpu.core_type = #tpu.core_type<tc>, window_params = [{transform_indices = @transform_0, window_bounds = array<i64: 1, 50, 50>}, {transform_indices = @transform_1, window_bounds = array<i64: 1, 50, 50>}, {pipeline_mode = #tpu.pipeline_mode<synchronous>, transform_indices = @transform_2, window_bounds = array<i64: 48, 50>}, {pipeline_mode = #tpu.pipeline_mode<synchronous>, transform_indices = @transform_3, window_bounds = array<i64: 50, 48>}, {pipeline_mode = #tpu.pipeline_mode<synchronous>, transform_indices = @transform_4, window_bounds = array<i64: 23, 25>}, {pipeline_mode = #tpu.pipeline_mode<synchronous>, transform_indices = @transform_5, window_bounds = array<i64: 25, 23>}, {pipeline_mode = #tpu.pipeline_mode<synchronous>, transform_indices = @transform_6, window_bounds = array<i64: 11, 13>}, {pipeline_mode = #tpu.pipeline_mode<synchronous>, transform_indices = @transform_7, window_bounds = array<i64: 13, 11>}, {pipeline_mode = #tpu.pipeline_mode<synchronous>, transform_indices = @transform_8, window_bounds = array<i64: 5, 7>}, {pipeline_mode = #tpu.pipeline_mode<synchronous>, transform_indices = @transform_9, window_bounds = array<i64: 7, 5>}, {pipeline_mode = #tpu.pipeline_mode<synchronous>, transform_indices = @transform_10, window_bounds = array<i64: 2, 4>}, {pipeline_mode = #tpu.pipeline_mode<synchronous>, transform_indices = @transform_11, window_bounds = array<i64: 4, 2>}, {pipeline_mode = #tpu.pipeline_mode<synchronous>, transform_indices = @transform_12, window_bounds = array<i64: 25, 50>}, {pipeline_mode = #tpu.pipeline_mode<synchronous>, transform_indices = @transform_13, window_bounds = array<i64: 50, 25>}, {pipeline_mode = #tpu.pipeline_mode<synchronous>, transform_indices = @transform_14, window_bounds = array<i64: 13, 25>}, {pipeline_mode = #tpu.pipeline_mode<synchronous>, transform_indices = @transform_15, window_bounds = array<i64: 25, 13>}, {pipeline_mode = #tpu.pipeline_mode<synchronous>, transform_indices = @transform_16, window_bounds = array<i64: 7, 13>}, {pipeline_mode = #tpu.pipeline_mode<synchronous>, transform_indices = @transform_17, window_bounds = array<i64: 13, 7>}, {pipeline_mode = #tpu.pipeline_mode<synchronous>, transform_indices = @transform_18, window_bounds = array<i64: 4, 7>}, {pipeline_mode = #tpu.pipeline_mode<synchronous>, transform_indices = @transform_19, window_bounds = array<i64: 7, 4>}, {transform_indices = @transform_20, window_bounds = array<i64: 1, 8, 128>}]} {
    %c0 = arith.constant 0 : index
    %c0_0 = arith.constant 0 : index
    %c0_1 = arith.constant 0 : index
    %0 = vector.load %arg1[%c0, %c0_0, %c0_1] : memref<1x50x50xf32, #tpu.memory_space<vmem>>, vector<1x50x50xf32>
    %1 = vector.shape_cast %0 : vector<1x50x50xf32> to vector<50x50xf32>
    %c0_2 = arith.constant 0 : index
    %c0_3 = arith.constant 0 : index
    %c0_4 = arith.constant 0 : index
    %2 = vector.load %arg2[%c0_2, %c0_3, %c0_4] : memref<1x50x50xf32, #tpu.memory_space<vmem>>, vector<1x50x50xf32>
    %3 = vector.shape_cast %2 : vector<1x50x50xf32> to vector<50x50xf32>
    %c0_5 = arith.constant 0 : index
    %c0_6 = arith.constant 0 : index
    %4 = vector.load %arg3[%c0_5, %c0_6] : memref<48x50xf32, #tpu.memory_space<vmem>>, vector<48x50xf32>
    %c0_7 = arith.constant 0 : index
    %c0_8 = arith.constant 0 : index
    %5 = vector.load %arg4[%c0_7, %c0_8] : memref<50x48xf32, #tpu.memory_space<vmem>>, vector<50x48xf32>
    %cst = arith.constant dense<0.000000e+00> : vector<50x48xf32>
    %6 = tpu.matmul %1, %5, %cst {dimension_numbers = #tpu.dot_dimension_numbers<[1], [0], [0], [1], [0, 0, 1, 1], [], []>} : vector<50x50xf32>, vector<50x48xf32>, vector<50x48xf32> -> vector<50x48xf32>
    %cst_9 = arith.constant dense<0.000000e+00> : vector<48x48xf32>
    %7 = tpu.matmul %4, %6, %cst_9 {dimension_numbers = #tpu.dot_dimension_numbers<[1], [0], [0], [1], [0, 0, 1, 1], [], []>} : vector<48x50xf32>, vector<50x48xf32>, vector<48x48xf32> -> vector<48x48xf32>
    %cst_10 = arith.constant dense<0.000000e+00> : vector<50x48xf32>
    %8 = tpu.matmul %3, %5, %cst_10 {dimension_numbers = #tpu.dot_dimension_numbers<[1], [0], [0], [1], [0, 0, 1, 1], [], []>} : vector<50x50xf32>, vector<50x48xf32>, vector<50x48xf32> -> vector<50x48xf32>
    %cst_11 = arith.constant dense<0.000000e+00> : vector<48x48xf32>
    %9 = tpu.matmul %4, %8, %cst_11 {dimension_numbers = #tpu.dot_dimension_numbers<[1], [0], [0], [1], [0, 0, 1, 1], [], []>} : vector<48x50xf32>, vector<50x48xf32>, vector<48x48xf32> -> vector<48x48xf32>
    %10 = arith.mulf %1, %1 : vector<50x50xf32>
    %cst_12 = arith.constant dense<0.000000e+00> : vector<50x48xf32>
    %11 = tpu.matmul %10, %5, %cst_12 {dimension_numbers = #tpu.dot_dimension_numbers<[1], [0], [0], [1], [0, 0, 1, 1], [], []>} : vector<50x50xf32>, vector<50x48xf32>, vector<50x48xf32> -> vector<50x48xf32>
    %cst_13 = arith.constant dense<0.000000e+00> : vector<48x48xf32>
    %12 = tpu.matmul %4, %11, %cst_13 {dimension_numbers = #tpu.dot_dimension_numbers<[1], [0], [0], [1], [0, 0, 1, 1], [], []>} : vector<48x50xf32>, vector<50x48xf32>, vector<48x48xf32> -> vector<48x48xf32>
    %13 = arith.mulf %3, %3 : vector<50x50xf32>
    %cst_14 = arith.constant dense<0.000000e+00> : vector<50x48xf32>
    %14 = tpu.matmul %13, %5, %cst_14 {dimension_numbers = #tpu.dot_dimension_numbers<[1], [0], [0], [1], [0, 0, 1, 1], [], []>} : vector<50x50xf32>, vector<50x48xf32>, vector<50x48xf32> -> vector<50x48xf32>
    %cst_15 = arith.constant dense<0.000000e+00> : vector<48x48xf32>
    %15 = tpu.matmul %4, %14, %cst_15 {dimension_numbers = #tpu.dot_dimension_numbers<[1], [0], [0], [1], [0, 0, 1, 1], [], []>} : vector<48x50xf32>, vector<50x48xf32>, vector<48x48xf32> -> vector<48x48xf32>
    %16 = arith.mulf %1, %3 : vector<50x50xf32>
    %cst_16 = arith.constant dense<0.000000e+00> : vector<50x48xf32>
    %17 = tpu.matmul %16, %5, %cst_16 {dimension_numbers = #tpu.dot_dimension_numbers<[1], [0], [0], [1], [0, 0, 1, 1], [], []>} : vector<50x50xf32>, vector<50x48xf32>, vector<50x48xf32> -> vector<50x48xf32>
    %cst_17 = arith.constant dense<0.000000e+00> : vector<48x48xf32>
    %18 = tpu.matmul %4, %17, %cst_17 {dimension_numbers = #tpu.dot_dimension_numbers<[1], [0], [0], [1], [0, 0, 1, 1], [], []>} : vector<48x50xf32>, vector<50x48xf32>, vector<48x48xf32> -> vector<48x48xf32>
    %19 = arith.mulf %7, %7 : vector<48x48xf32>
    %20 = arith.mulf %9, %9 : vector<48x48xf32>
    %21 = arith.mulf %7, %9 : vector<48x48xf32>
    %22 = arith.subf %12, %19 : vector<48x48xf32>
    %23 = arith.subf %15, %20 : vector<48x48xf32>
    %24 = arith.subf %18, %21 : vector<48x48xf32>
    %cst_18 = arith.constant 2.000000e+00 : f32
    %25 = vector.broadcast %cst_18 : f32 to vector<48x48xf32>
    %26 = arith.mulf %25, %24 : vector<48x48xf32>
    %cst_19 = arith.constant 8.99999984E-4 : f32
    %27 = vector.broadcast %cst_19 : f32 to vector<48x48xf32>
    %28 = arith.addf %26, %27 : vector<48x48xf32>
    %29 = arith.addf %22, %23 : vector<48x48xf32>
    %cst_20 = arith.constant 8.99999984E-4 : f32
    %30 = vector.broadcast %cst_20 : f32 to vector<48x48xf32>
    %31 = arith.addf %29, %30 : vector<48x48xf32>
    %32 = tpu.reciprocal %31 : vector<48x48xf32> -> vector<48x48xf32>
    %33 = arith.mulf %28, %32 : vector<48x48xf32>
    %34 = vector.shape_cast %33 : vector<48x48xf32> to vector<1x48x48xf32>
    %cst_21 = arith.constant dense<0.000000e+00> : vector<1xf32>
    %35 = vector.multi_reduction <add>, %34, %cst_21 [1, 2] : vector<1x48x48xf32> to vector<1xf32>
    %36 = vector.shape_cast %35 : vector<1xf32> to vector<1x1x1xf32>
    %37 = vector.extract %36[0, 0, 0] : f32 from vector<1x1x1xf32>
    %38 = vector.broadcast %37 : f32 to vector<1x1xf32>
    %cst_22 = arith.constant 4.34027781E-4 : f32
    %39 = vector.broadcast %cst_22 : f32 to vector<1x1xf32>
    %40 = arith.mulf %38, %39 : vector<1x1xf32>
    %c0_23 = arith.constant 0 : index
    %c0_24 = arith.constant 0 : index
    %41 = vector.load %arg13[%c0_23, %c0_24] : memref<25x50xf32, #tpu.memory_space<vmem>>, vector<25x50xf32>
    %c0_25 = arith.constant 0 : index
    %c0_26 = arith.constant 0 : index
    %42 = vector.load %arg14[%c0_25, %c0_26] : memref<50x25xf32, #tpu.memory_space<vmem>>, vector<50x25xf32>
    %cst_27 = arith.constant dense<0.000000e+00> : vector<50x25xf32>
    %43 = tpu.matmul %1, %42, %cst_27 {dimension_numbers = #tpu.dot_dimension_numbers<[1], [0], [0], [1], [0, 0, 1, 1], [], []>} : vector<50x50xf32>, vector<50x25xf32>, vector<50x25xf32> -> vector<50x25xf32>
    %cst_28 = arith.constant dense<0.000000e+00> : vector<25x25xf32>
    %44 = tpu.matmul %41, %43, %cst_28 {dimension_numbers = #tpu.dot_dimension_numbers<[1], [0], [0], [1], [0, 0, 1, 1], [], []>} : vector<25x50xf32>, vector<50x25xf32>, vector<25x25xf32> -> vector<25x25xf32>
    %cst_29 = arith.constant dense<0.000000e+00> : vector<50x25xf32>
    %45 = tpu.matmul %3, %42, %cst_29 {dimension_numbers = #tpu.dot_dimension_numbers<[1], [0], [0], [1], [0, 0, 1, 1], [], []>} : vector<50x50xf32>, vector<50x25xf32>, vector<50x25xf32> -> vector<50x25xf32>
    %cst_30 = arith.constant dense<0.000000e+00> : vector<25x25xf32>
    %46 = tpu.matmul %41, %45, %cst_30 {dimension_numbers = #tpu.dot_dimension_numbers<[1], [0], [0], [1], [0, 0, 1, 1], [], []>} : vector<25x50xf32>, vector<50x25xf32>, vector<25x25xf32> -> vector<25x25xf32>
    %c0_31 = arith.constant 0 : index
    %c0_32 = arith.constant 0 : index
    %47 = vector.load %arg5[%c0_31, %c0_32] : memref<23x25xf32, #tpu.memory_space<vmem>>, vector<23x25xf32>
    %c0_33 = arith.constant 0 : index
    %c0_34 = arith.constant 0 : index
    %48 = vector.load %arg6[%c0_33, %c0_34] : memref<25x23xf32, #tpu.memory_space<vmem>>, vector<25x23xf32>
    %cst_35 = arith.constant dense<0.000000e+00> : vector<25x23xf32>
    %49 = tpu.matmul %44, %48, %cst_35 {dimension_numbers = #tpu.dot_dimension_numbers<[1], [0], [0], [1], [0, 0, 1, 1], [], []>} : vector<25x25xf32>, vector<25x23xf32>, vector<25x23xf32> -> vector<25x23xf32>
    %cst_36 = arith.constant dense<0.000000e+00> : vector<23x23xf32>
    %50 = tpu.matmul %47, %49, %cst_36 {dimension_numbers = #tpu.dot_dimension_numbers<[1], [0], [0], [1], [0, 0, 1, 1], [], []>} : vector<23x25xf32>, vector<25x23xf32>, vector<23x23xf32> -> vector<23x23xf32>
    %cst_37 = arith.constant dense<0.000000e+00> : vector<25x23xf32>
    %51 = tpu.matmul %46, %48, %cst_37 {dimension_numbers = #tpu.dot_dimension_numbers<[1], [0], [0], [1], [0, 0, 1, 1], [], []>} : vector<25x25xf32>, vector<25x23xf32>, vector<25x23xf32> -> vector<25x23xf32>
    %cst_38 = arith.constant dense<0.000000e+00> : vector<23x23xf32>
    %52 = tpu.matmul %47, %51, %cst_38 {dimension_numbers = #tpu.dot_dimension_numbers<[1], [0], [0], [1], [0, 0, 1, 1], [], []>} : vector<23x25xf32>, vector<25x23xf32>, vector<23x23xf32> -> vector<23x23xf32>
    %53 = arith.mulf %44, %44 : vector<25x25xf32>
    %cst_39 = arith.constant dense<0.000000e+00> : vector<25x23xf32>
    %54 = tpu.matmul %53, %48, %cst_39 {dimension_numbers = #tpu.dot_dimension_numbers<[1], [0], [0], [1], [0, 0, 1, 1], [], []>} : vector<25x25xf32>, vector<25x23xf32>, vector<25x23xf32> -> vector<25x23xf32>
    %cst_40 = arith.constant dense<0.000000e+00> : vector<23x23xf32>
    %55 = tpu.matmul %47, %54, %cst_40 {dimension_numbers = #tpu.dot_dimension_numbers<[1], [0], [0], [1], [0, 0, 1, 1], [], []>} : vector<23x25xf32>, vector<25x23xf32>, vector<23x23xf32> -> vector<23x23xf32>
    %56 = arith.mulf %46, %46 : vector<25x25xf32>
    %cst_41 = arith.constant dense<0.000000e+00> : vector<25x23xf32>
    %57 = tpu.matmul %56, %48, %cst_41 {dimension_numbers = #tpu.dot_dimension_numbers<[1], [0], [0], [1], [0, 0, 1, 1], [], []>} : vector<25x25xf32>, vector<25x23xf32>, vector<25x23xf32> -> vector<25x23xf32>
    %cst_42 = arith.constant dense<0.000000e+00> : vector<23x23xf32>
    %58 = tpu.matmul %47, %57, %cst_42 {dimension_numbers = #tpu.dot_dimension_numbers<[1], [0], [0], [1], [0, 0, 1, 1], [], []>} : vector<23x25xf32>, vector<25x23xf32>, vector<23x23xf32> -> vector<23x23xf32>
    %59 = arith.mulf %44, %46 : vector<25x25xf32>
    %cst_43 = arith.constant dense<0.000000e+00> : vector<25x23xf32>
    %60 = tpu.matmul %59, %48, %cst_43 {dimension_numbers = #tpu.dot_dimension_numbers<[1], [0], [0], [1], [0, 0, 1, 1], [], []>} : vector<25x25xf32>, vector<25x23xf32>, vector<25x23xf32> -> vector<25x23xf32>
    %cst_44 = arith.constant dense<0.000000e+00> : vector<23x23xf32>
    %61 = tpu.matmul %47, %60, %cst_44 {dimension_numbers = #tpu.dot_dimension_numbers<[1], [0], [0], [1], [0, 0, 1, 1], [], []>} : vector<23x25xf32>, vector<25x23xf32>, vector<23x23xf32> -> vector<23x23xf32>
    %62 = arith.mulf %50, %50 : vector<23x23xf32>
    %63 = arith.mulf %52, %52 : vector<23x23xf32>
    %64 = arith.mulf %50, %52 : vector<23x23xf32>
    %65 = arith.subf %55, %62 : vector<23x23xf32>
    %66 = arith.subf %58, %63 : vector<23x23xf32>
    %67 = arith.subf %61, %64 : vector<23x23xf32>
    %cst_45 = arith.constant 2.000000e+00 : f32
    %68 = vector.broadcast %cst_45 : f32 to vector<23x23xf32>
    %69 = arith.mulf %68, %67 : vector<23x23xf32>
    %cst_46 = arith.constant 8.99999984E-4 : f32
    %70 = vector.broadcast %cst_46 : f32 to vector<23x23xf32>
    %71 = arith.addf %69, %70 : vector<23x23xf32>
    %72 = arith.addf %65, %66 : vector<23x23xf32>
    %cst_47 = arith.constant 8.99999984E-4 : f32
    %73 = vector.broadcast %cst_47 : f32 to vector<23x23xf32>
    %74 = arith.addf %72, %73 : vector<23x23xf32>
    %75 = tpu.reciprocal %74 : vector<23x23xf32> -> vector<23x23xf32>
    %76 = arith.mulf %71, %75 : vector<23x23xf32>
    %77 = vector.shape_cast %76 : vector<23x23xf32> to vector<1x23x23xf32>
    %cst_48 = arith.constant dense<0.000000e+00> : vector<1xf32>
    %78 = vector.multi_reduction <add>, %77, %cst_48 [1, 2] : vector<1x23x23xf32> to vector<1xf32>
    %79 = vector.shape_cast %78 : vector<1xf32> to vector<1x1x1xf32>
    %80 = vector.extract %79[0, 0, 0] : f32 from vector<1x1x1xf32>
    %81 = vector.broadcast %80 : f32 to vector<1x1xf32>
    %cst_49 = arith.constant 0.00189035921 : f32
    %82 = vector.broadcast %cst_49 : f32 to vector<1x1xf32>
    %83 = arith.mulf %81, %82 : vector<1x1xf32>
    %c0_50 = arith.constant 0 : index
    %c0_51 = arith.constant 0 : index
    %84 = vector.load %arg15[%c0_50, %c0_51] : memref<13x25xf32, #tpu.memory_space<vmem>>, vector<13x25xf32>
    %c0_52 = arith.constant 0 : index
    %c0_53 = arith.constant 0 : index
    %85 = vector.load %arg16[%c0_52, %c0_53] : memref<25x13xf32, #tpu.memory_space<vmem>>, vector<25x13xf32>
    %cst_54 = arith.constant dense<0.000000e+00> : vector<25x13xf32>
    %86 = tpu.matmul %44, %85, %cst_54 {dimension_numbers = #tpu.dot_dimension_numbers<[1], [0], [0], [1], [0, 0, 1, 1], [], []>} : vector<25x25xf32>, vector<25x13xf32>, vector<25x13xf32> -> vector<25x13xf32>
    %cst_55 = arith.constant dense<0.000000e+00> : vector<13x13xf32>
    %87 = tpu.matmul %84, %86, %cst_55 {dimension_numbers = #tpu.dot_dimension_numbers<[1], [0], [0], [1], [0, 0, 1, 1], [], []>} : vector<13x25xf32>, vector<25x13xf32>, vector<13x13xf32> -> vector<13x13xf32>
    %cst_56 = arith.constant dense<0.000000e+00> : vector<25x13xf32>
    %88 = tpu.matmul %46, %85, %cst_56 {dimension_numbers = #tpu.dot_dimension_numbers<[1], [0], [0], [1], [0, 0, 1, 1], [], []>} : vector<25x25xf32>, vector<25x13xf32>, vector<25x13xf32> -> vector<25x13xf32>
    %cst_57 = arith.constant dense<0.000000e+00> : vector<13x13xf32>
    %89 = tpu.matmul %84, %88, %cst_57 {dimension_numbers = #tpu.dot_dimension_numbers<[1], [0], [0], [1], [0, 0, 1, 1], [], []>} : vector<13x25xf32>, vector<25x13xf32>, vector<13x13xf32> -> vector<13x13xf32>
    %c0_58 = arith.constant 0 : index
    %c0_59 = arith.constant 0 : index
    %90 = vector.load %arg7[%c0_58, %c0_59] : memref<11x13xf32, #tpu.memory_space<vmem>>, vector<11x13xf32>
    %c0_60 = arith.constant 0 : index
    %c0_61 = arith.constant 0 : index
    %91 = vector.load %arg8[%c0_60, %c0_61] : memref<13x11xf32, #tpu.memory_space<vmem>>, vector<13x11xf32>
    %cst_62 = arith.constant dense<0.000000e+00> : vector<13x11xf32>
    %92 = tpu.matmul %87, %91, %cst_62 {dimension_numbers = #tpu.dot_dimension_numbers<[1], [0], [0], [1], [0, 0, 1, 1], [], []>} : vector<13x13xf32>, vector<13x11xf32>, vector<13x11xf32> -> vector<13x11xf32>
    %cst_63 = arith.constant dense<0.000000e+00> : vector<11x11xf32>
    %93 = tpu.matmul %90, %92, %cst_63 {dimension_numbers = #tpu.dot_dimension_numbers<[1], [0], [0], [1], [0, 0, 1, 1], [], []>} : vector<11x13xf32>, vector<13x11xf32>, vector<11x11xf32> -> vector<11x11xf32>
    %cst_64 = arith.constant dense<0.000000e+00> : vector<13x11xf32>
    %94 = tpu.matmul %89, %91, %cst_64 {dimension_numbers = #tpu.dot_dimension_numbers<[1], [0], [0], [1], [0, 0, 1, 1], [], []>} : vector<13x13xf32>, vector<13x11xf32>, vector<13x11xf32> -> vector<13x11xf32>
    %cst_65 = arith.constant dense<0.000000e+00> : vector<11x11xf32>
    %95 = tpu.matmul %90, %94, %cst_65 {dimension_numbers = #tpu.dot_dimension_numbers<[1], [0], [0], [1], [0, 0, 1, 1], [], []>} : vector<11x13xf32>, vector<13x11xf32>, vector<11x11xf32> -> vector<11x11xf32>
    %96 = arith.mulf %87, %87 : vector<13x13xf32>
    %cst_66 = arith.constant dense<0.000000e+00> : vector<13x11xf32>
    %97 = tpu.matmul %96, %91, %cst_66 {dimension_numbers = #tpu.dot_dimension_numbers<[1], [0], [0], [1], [0, 0, 1, 1], [], []>} : vector<13x13xf32>, vector<13x11xf32>, vector<13x11xf32> -> vector<13x11xf32>
    %cst_67 = arith.constant dense<0.000000e+00> : vector<11x11xf32>
    %98 = tpu.matmul %90, %97, %cst_67 {dimension_numbers = #tpu.dot_dimension_numbers<[1], [0], [0], [1], [0, 0, 1, 1], [], []>} : vector<11x13xf32>, vector<13x11xf32>, vector<11x11xf32> -> vector<11x11xf32>
    %99 = arith.mulf %89, %89 : vector<13x13xf32>
    %cst_68 = arith.constant dense<0.000000e+00> : vector<13x11xf32>
    %100 = tpu.matmul %99, %91, %cst_68 {dimension_numbers = #tpu.dot_dimension_numbers<[1], [0], [0], [1], [0, 0, 1, 1], [], []>} : vector<13x13xf32>, vector<13x11xf32>, vector<13x11xf32> -> vector<13x11xf32>
    %cst_69 = arith.constant dense<0.000000e+00> : vector<11x11xf32>
    %101 = tpu.matmul %90, %100, %cst_69 {dimension_numbers = #tpu.dot_dimension_numbers<[1], [0], [0], [1], [0, 0, 1, 1], [], []>} : vector<11x13xf32>, vector<13x11xf32>, vector<11x11xf32> -> vector<11x11xf32>
    %102 = arith.mulf %87, %89 : vector<13x13xf32>
    %cst_70 = arith.constant dense<0.000000e+00> : vector<13x11xf32>
    %103 = tpu.matmul %102, %91, %cst_70 {dimension_numbers = #tpu.dot_dimension_numbers<[1], [0], [0], [1], [0, 0, 1, 1], [], []>} : vector<13x13xf32>, vector<13x11xf32>, vector<13x11xf32> -> vector<13x11xf32>
    %cst_71 = arith.constant dense<0.000000e+00> : vector<11x11xf32>
    %104 = tpu.matmul %90, %103, %cst_71 {dimension_numbers = #tpu.dot_dimension_numbers<[1], [0], [0], [1], [0, 0, 1, 1], [], []>} : vector<11x13xf32>, vector<13x11xf32>, vector<11x11xf32> -> vector<11x11xf32>
    %105 = arith.mulf %93, %93 : vector<11x11xf32>
    %106 = arith.mulf %95, %95 : vector<11x11xf32>
    %107 = arith.mulf %93, %95 : vector<11x11xf32>
    %108 = arith.subf %98, %105 : vector<11x11xf32>
    %109 = arith.subf %101, %106 : vector<11x11xf32>
    %110 = arith.subf %104, %107 : vector<11x11xf32>
    %cst_72 = arith.constant 2.000000e+00 : f32
    %111 = vector.broadcast %cst_72 : f32 to vector<11x11xf32>
    %112 = arith.mulf %111, %110 : vector<11x11xf32>
    %cst_73 = arith.constant 8.99999984E-4 : f32
    %113 = vector.broadcast %cst_73 : f32 to vector<11x11xf32>
    %114 = arith.addf %112, %113 : vector<11x11xf32>
    %115 = arith.addf %108, %109 : vector<11x11xf32>
    %cst_74 = arith.constant 8.99999984E-4 : f32
    %116 = vector.broadcast %cst_74 : f32 to vector<11x11xf32>
    %117 = arith.addf %115, %116 : vector<11x11xf32>
    %118 = tpu.reciprocal %117 : vector<11x11xf32> -> vector<11x11xf32>
    %119 = arith.mulf %114, %118 : vector<11x11xf32>
    %120 = vector.shape_cast %119 : vector<11x11xf32> to vector<1x11x11xf32>
    %cst_75 = arith.constant dense<0.000000e+00> : vector<1xf32>
    %121 = vector.multi_reduction <add>, %120, %cst_75 [1, 2] : vector<1x11x11xf32> to vector<1xf32>
    %122 = vector.shape_cast %121 : vector<1xf32> to vector<1x1x1xf32>
    %123 = vector.extract %122[0, 0, 0] : f32 from vector<1x1x1xf32>
    %124 = vector.broadcast %123 : f32 to vector<1x1xf32>
    %cst_76 = arith.constant 0.00826446246 : f32
    %125 = vector.broadcast %cst_76 : f32 to vector<1x1xf32>
    %126 = arith.mulf %124, %125 : vector<1x1xf32>
    %c0_77 = arith.constant 0 : index
    %c0_78 = arith.constant 0 : index
    %127 = vector.load %arg17[%c0_77, %c0_78] : memref<7x13xf32, #tpu.memory_space<vmem>>, vector<7x13xf32>
    %c0_79 = arith.constant 0 : index
    %c0_80 = arith.constant 0 : index
    %128 = vector.load %arg18[%c0_79, %c0_80] : memref<13x7xf32, #tpu.memory_space<vmem>>, vector<13x7xf32>
    %cst_81 = arith.constant dense<0.000000e+00> : vector<13x7xf32>
    %129 = tpu.matmul %87, %128, %cst_81 {dimension_numbers = #tpu.dot_dimension_numbers<[1], [0], [0], [1], [0, 0, 1, 1], [], []>} : vector<13x13xf32>, vector<13x7xf32>, vector<13x7xf32> -> vector<13x7xf32>
    %cst_82 = arith.constant dense<0.000000e+00> : vector<7x7xf32>
    %130 = tpu.matmul %127, %129, %cst_82 {dimension_numbers = #tpu.dot_dimension_numbers<[1], [0], [0], [1], [0, 0, 1, 1], [], []>} : vector<7x13xf32>, vector<13x7xf32>, vector<7x7xf32> -> vector<7x7xf32>
    %cst_83 = arith.constant dense<0.000000e+00> : vector<13x7xf32>
    %131 = tpu.matmul %89, %128, %cst_83 {dimension_numbers = #tpu.dot_dimension_numbers<[1], [0], [0], [1], [0, 0, 1, 1], [], []>} : vector<13x13xf32>, vector<13x7xf32>, vector<13x7xf32> -> vector<13x7xf32>
    %cst_84 = arith.constant dense<0.000000e+00> : vector<7x7xf32>
    %132 = tpu.matmul %127, %131, %cst_84 {dimension_numbers = #tpu.dot_dimension_numbers<[1], [0], [0], [1], [0, 0, 1, 1], [], []>} : vector<7x13xf32>, vector<13x7xf32>, vector<7x7xf32> -> vector<7x7xf32>
    %c0_85 = arith.constant 0 : index
    %c0_86 = arith.constant 0 : index
    %133 = vector.load %arg9[%c0_85, %c0_86] : memref<5x7xf32, #tpu.memory_space<vmem>>, vector<5x7xf32>
    %c0_87 = arith.constant 0 : index
    %c0_88 = arith.constant 0 : index
    %134 = vector.load %arg10[%c0_87, %c0_88] : memref<7x5xf32, #tpu.memory_space<vmem>>, vector<7x5xf32>
    %cst_89 = arith.constant dense<0.000000e+00> : vector<7x5xf32>
    %135 = tpu.matmul %130, %134, %cst_89 {dimension_numbers = #tpu.dot_dimension_numbers<[1], [0], [0], [1], [0, 0, 1, 1], [], []>} : vector<7x7xf32>, vector<7x5xf32>, vector<7x5xf32> -> vector<7x5xf32>
    %cst_90 = arith.constant dense<0.000000e+00> : vector<5x5xf32>
    %136 = tpu.matmul %133, %135, %cst_90 {dimension_numbers = #tpu.dot_dimension_numbers<[1], [0], [0], [1], [0, 0, 1, 1], [], []>} : vector<5x7xf32>, vector<7x5xf32>, vector<5x5xf32> -> vector<5x5xf32>
    %cst_91 = arith.constant dense<0.000000e+00> : vector<7x5xf32>
    %137 = tpu.matmul %132, %134, %cst_91 {dimension_numbers = #tpu.dot_dimension_numbers<[1], [0], [0], [1], [0, 0, 1, 1], [], []>} : vector<7x7xf32>, vector<7x5xf32>, vector<7x5xf32> -> vector<7x5xf32>
    %cst_92 = arith.constant dense<0.000000e+00> : vector<5x5xf32>
    %138 = tpu.matmul %133, %137, %cst_92 {dimension_numbers = #tpu.dot_dimension_numbers<[1], [0], [0], [1], [0, 0, 1, 1], [], []>} : vector<5x7xf32>, vector<7x5xf32>, vector<5x5xf32> -> vector<5x5xf32>
    %139 = arith.mulf %130, %130 : vector<7x7xf32>
    %cst_93 = arith.constant dense<0.000000e+00> : vector<7x5xf32>
    %140 = tpu.matmul %139, %134, %cst_93 {dimension_numbers = #tpu.dot_dimension_numbers<[1], [0], [0], [1], [0, 0, 1, 1], [], []>} : vector<7x7xf32>, vector<7x5xf32>, vector<7x5xf32> -> vector<7x5xf32>
    %cst_94 = arith.constant dense<0.000000e+00> : vector<5x5xf32>
    %141 = tpu.matmul %133, %140, %cst_94 {dimension_numbers = #tpu.dot_dimension_numbers<[1], [0], [0], [1], [0, 0, 1, 1], [], []>} : vector<5x7xf32>, vector<7x5xf32>, vector<5x5xf32> -> vector<5x5xf32>
    %142 = arith.mulf %132, %132 : vector<7x7xf32>
    %cst_95 = arith.constant dense<0.000000e+00> : vector<7x5xf32>
    %143 = tpu.matmul %142, %134, %cst_95 {dimension_numbers = #tpu.dot_dimension_numbers<[1], [0], [0], [1], [0, 0, 1, 1], [], []>} : vector<7x7xf32>, vector<7x5xf32>, vector<7x5xf32> -> vector<7x5xf32>
    %cst_96 = arith.constant dense<0.000000e+00> : vector<5x5xf32>
    %144 = tpu.matmul %133, %143, %cst_96 {dimension_numbers = #tpu.dot_dimension_numbers<[1], [0], [0], [1], [0, 0, 1, 1], [], []>} : vector<5x7xf32>, vector<7x5xf32>, vector<5x5xf32> -> vector<5x5xf32>
    %145 = arith.mulf %130, %132 : vector<7x7xf32>
    %cst_97 = arith.constant dense<0.000000e+00> : vector<7x5xf32>
    %146 = tpu.matmul %145, %134, %cst_97 {dimension_numbers = #tpu.dot_dimension_numbers<[1], [0], [0], [1], [0, 0, 1, 1], [], []>} : vector<7x7xf32>, vector<7x5xf32>, vector<7x5xf32> -> vector<7x5xf32>
    %cst_98 = arith.constant dense<0.000000e+00> : vector<5x5xf32>
    %147 = tpu.matmul %133, %146, %cst_98 {dimension_numbers = #tpu.dot_dimension_numbers<[1], [0], [0], [1], [0, 0, 1, 1], [], []>} : vector<5x7xf32>, vector<7x5xf32>, vector<5x5xf32> -> vector<5x5xf32>
    %148 = arith.mulf %136, %136 : vector<5x5xf32>
    %149 = arith.mulf %138, %138 : vector<5x5xf32>
    %150 = arith.mulf %136, %138 : vector<5x5xf32>
    %151 = arith.subf %141, %148 : vector<5x5xf32>
    %152 = arith.subf %144, %149 : vector<5x5xf32>
    %153 = arith.subf %147, %150 : vector<5x5xf32>
    %cst_99 = arith.constant 2.000000e+00 : f32
    %154 = vector.broadcast %cst_99 : f32 to vector<5x5xf32>
    %155 = arith.mulf %154, %153 : vector<5x5xf32>
    %cst_100 = arith.constant 8.99999984E-4 : f32
    %156 = vector.broadcast %cst_100 : f32 to vector<5x5xf32>
    %157 = arith.addf %155, %156 : vector<5x5xf32>
    %158 = arith.addf %151, %152 : vector<5x5xf32>
    %cst_101 = arith.constant 8.99999984E-4 : f32
    %159 = vector.broadcast %cst_101 : f32 to vector<5x5xf32>
    %160 = arith.addf %158, %159 : vector<5x5xf32>
    %161 = tpu.reciprocal %160 : vector<5x5xf32> -> vector<5x5xf32>
    %162 = arith.mulf %157, %161 : vector<5x5xf32>
    %163 = vector.shape_cast %162 : vector<5x5xf32> to vector<1x5x5xf32>
    %cst_102 = arith.constant dense<0.000000e+00> : vector<1xf32>
    %164 = vector.multi_reduction <add>, %163, %cst_102 [1, 2] : vector<1x5x5xf32> to vector<1xf32>
    %165 = vector.shape_cast %164 : vector<1xf32> to vector<1x1x1xf32>
    %166 = vector.extract %165[0, 0, 0] : f32 from vector<1x1x1xf32>
    %167 = vector.broadcast %166 : f32 to vector<1x1xf32>
    %cst_103 = arith.constant 4.000000e-02 : f32
    %168 = vector.broadcast %cst_103 : f32 to vector<1x1xf32>
    %169 = arith.mulf %167, %168 : vector<1x1xf32>
    %c0_104 = arith.constant 0 : index
    %c0_105 = arith.constant 0 : index
    %170 = vector.load %arg19[%c0_104, %c0_105] : memref<4x7xf32, #tpu.memory_space<vmem>>, vector<4x7xf32>
    %c0_106 = arith.constant 0 : index
    %c0_107 = arith.constant 0 : index
    %171 = vector.load %arg20[%c0_106, %c0_107] : memref<7x4xf32, #tpu.memory_space<vmem>>, vector<7x4xf32>
    %cst_108 = arith.constant dense<0.000000e+00> : vector<7x4xf32>
    %172 = tpu.matmul %130, %171, %cst_108 {dimension_numbers = #tpu.dot_dimension_numbers<[1], [0], [0], [1], [0, 0, 1, 1], [], []>} : vector<7x7xf32>, vector<7x4xf32>, vector<7x4xf32> -> vector<7x4xf32>
    %cst_109 = arith.constant dense<0.000000e+00> : vector<4x4xf32>
    %173 = tpu.matmul %170, %172, %cst_109 {dimension_numbers = #tpu.dot_dimension_numbers<[1], [0], [0], [1], [0, 0, 1, 1], [], []>} : vector<4x7xf32>, vector<7x4xf32>, vector<4x4xf32> -> vector<4x4xf32>
    %cst_110 = arith.constant dense<0.000000e+00> : vector<7x4xf32>
    %174 = tpu.matmul %132, %171, %cst_110 {dimension_numbers = #tpu.dot_dimension_numbers<[1], [0], [0], [1], [0, 0, 1, 1], [], []>} : vector<7x7xf32>, vector<7x4xf32>, vector<7x4xf32> -> vector<7x4xf32>
    %cst_111 = arith.constant dense<0.000000e+00> : vector<4x4xf32>
    %175 = tpu.matmul %170, %174, %cst_111 {dimension_numbers = #tpu.dot_dimension_numbers<[1], [0], [0], [1], [0, 0, 1, 1], [], []>} : vector<4x7xf32>, vector<7x4xf32>, vector<4x4xf32> -> vector<4x4xf32>
    %c0_112 = arith.constant 0 : index
    %c0_113 = arith.constant 0 : index
    %176 = vector.load %arg11[%c0_112, %c0_113] : memref<2x4xf32, #tpu.memory_space<vmem>>, vector<2x4xf32>
    %c0_114 = arith.constant 0 : index
    %c0_115 = arith.constant 0 : index
    %177 = vector.load %arg12[%c0_114, %c0_115] : memref<4x2xf32, #tpu.memory_space<vmem>>, vector<4x2xf32>
    %cst_116 = arith.constant dense<0.000000e+00> : vector<4x2xf32>
    %178 = tpu.matmul %173, %177, %cst_116 {dimension_numbers = #tpu.dot_dimension_numbers<[1], [0], [0], [1], [0, 0, 1, 1], [], []>} : vector<4x4xf32>, vector<4x2xf32>, vector<4x2xf32> -> vector<4x2xf32>
    %cst_117 = arith.constant dense<0.000000e+00> : vector<2x2xf32>
    %179 = tpu.matmul %176, %178, %cst_117 {dimension_numbers = #tpu.dot_dimension_numbers<[1], [0], [0], [1], [0, 0, 1, 1], [], []>} : vector<2x4xf32>, vector<4x2xf32>, vector<2x2xf32> -> vector<2x2xf32>
    %cst_118 = arith.constant dense<0.000000e+00> : vector<4x2xf32>
    %180 = tpu.matmul %175, %177, %cst_118 {dimension_numbers = #tpu.dot_dimension_numbers<[1], [0], [0], [1], [0, 0, 1, 1], [], []>} : vector<4x4xf32>, vector<4x2xf32>, vector<4x2xf32> -> vector<4x2xf32>
    %cst_119 = arith.constant dense<0.000000e+00> : vector<2x2xf32>
    %181 = tpu.matmul %176, %180, %cst_119 {dimension_numbers = #tpu.dot_dimension_numbers<[1], [0], [0], [1], [0, 0, 1, 1], [], []>} : vector<2x4xf32>, vector<4x2xf32>, vector<2x2xf32> -> vector<2x2xf32>
    %182 = arith.mulf %173, %173 : vector<4x4xf32>
    %cst_120 = arith.constant dense<0.000000e+00> : vector<4x2xf32>
    %183 = tpu.matmul %182, %177, %cst_120 {dimension_numbers = #tpu.dot_dimension_numbers<[1], [0], [0], [1], [0, 0, 1, 1], [], []>} : vector<4x4xf32>, vector<4x2xf32>, vector<4x2xf32> -> vector<4x2xf32>
    %cst_121 = arith.constant dense<0.000000e+00> : vector<2x2xf32>
    %184 = tpu.matmul %176, %183, %cst_121 {dimension_numbers = #tpu.dot_dimension_numbers<[1], [0], [0], [1], [0, 0, 1, 1], [], []>} : vector<2x4xf32>, vector<4x2xf32>, vector<2x2xf32> -> vector<2x2xf32>
    %185 = arith.mulf %175, %175 : vector<4x4xf32>
    %cst_122 = arith.constant dense<0.000000e+00> : vector<4x2xf32>
    %186 = tpu.matmul %185, %177, %cst_122 {dimension_numbers = #tpu.dot_dimension_numbers<[1], [0], [0], [1], [0, 0, 1, 1], [], []>} : vector<4x4xf32>, vector<4x2xf32>, vector<4x2xf32> -> vector<4x2xf32>
    %cst_123 = arith.constant dense<0.000000e+00> : vector<2x2xf32>
    %187 = tpu.matmul %176, %186, %cst_123 {dimension_numbers = #tpu.dot_dimension_numbers<[1], [0], [0], [1], [0, 0, 1, 1], [], []>} : vector<2x4xf32>, vector<4x2xf32>, vector<2x2xf32> -> vector<2x2xf32>
    %188 = arith.mulf %173, %175 : vector<4x4xf32>
    %cst_124 = arith.constant dense<0.000000e+00> : vector<4x2xf32>
    %189 = tpu.matmul %188, %177, %cst_124 {dimension_numbers = #tpu.dot_dimension_numbers<[1], [0], [0], [1], [0, 0, 1, 1], [], []>} : vector<4x4xf32>, vector<4x2xf32>, vector<4x2xf32> -> vector<4x2xf32>
    %cst_125 = arith.constant dense<0.000000e+00> : vector<2x2xf32>
    %190 = tpu.matmul %176, %189, %cst_125 {dimension_numbers = #tpu.dot_dimension_numbers<[1], [0], [0], [1], [0, 0, 1, 1], [], []>} : vector<2x4xf32>, vector<4x2xf32>, vector<2x2xf32> -> vector<2x2xf32>
    %191 = arith.mulf %179, %179 : vector<2x2xf32>
    %192 = arith.mulf %181, %181 : vector<2x2xf32>
    %193 = arith.mulf %179, %181 : vector<2x2xf32>
    %194 = arith.subf %184, %191 : vector<2x2xf32>
    %195 = arith.subf %187, %192 : vector<2x2xf32>
    %196 = arith.subf %190, %193 : vector<2x2xf32>
    %cst_126 = arith.constant 2.000000e+00 : f32
    %197 = vector.broadcast %cst_126 : f32 to vector<2x2xf32>
    %198 = arith.mulf %197, %196 : vector<2x2xf32>
    %cst_127 = arith.constant 8.99999984E-4 : f32
    %199 = vector.broadcast %cst_127 : f32 to vector<2x2xf32>
    %200 = arith.addf %198, %199 : vector<2x2xf32>
    %201 = arith.addf %194, %195 : vector<2x2xf32>
    %cst_128 = arith.constant 8.99999984E-4 : f32
    %202 = vector.broadcast %cst_128 : f32 to vector<2x2xf32>
    %203 = arith.addf %201, %202 : vector<2x2xf32>
    %204 = tpu.reciprocal %203 : vector<2x2xf32> -> vector<2x2xf32>
    %205 = arith.mulf %200, %204 : vector<2x2xf32>
    %cst_129 = arith.constant 2.000000e+00 : f32
    %206 = vector.broadcast %cst_129 : f32 to vector<2x2xf32>
    %207 = arith.mulf %206, %193 : vector<2x2xf32>
    %cst_130 = arith.constant 9.99999974E-5 : f32
    %208 = vector.broadcast %cst_130 : f32 to vector<2x2xf32>
    %209 = arith.addf %207, %208 : vector<2x2xf32>
    %210 = arith.addf %191, %192 : vector<2x2xf32>
    %cst_131 = arith.constant 9.99999974E-5 : f32
    %211 = vector.broadcast %cst_131 : f32 to vector<2x2xf32>
    %212 = arith.addf %210, %211 : vector<2x2xf32>
    %213 = tpu.reciprocal %212 : vector<2x2xf32> -> vector<2x2xf32>
    %214 = arith.mulf %209, %213 : vector<2x2xf32>
    %215 = arith.mulf %214, %205 : vector<2x2xf32>
    %216 = vector.shape_cast %215 : vector<2x2xf32> to vector<1x2x2xf32>
    %cst_132 = arith.constant dense<0.000000e+00> : vector<1xf32>
    %217 = vector.multi_reduction <add>, %216, %cst_132 [1, 2] : vector<1x2x2xf32> to vector<1xf32>
    %218 = vector.shape_cast %217 : vector<1xf32> to vector<1x1x1xf32>
    %219 = vector.extract %218[0, 0, 0] : f32 from vector<1x1x1xf32>
    %220 = vector.broadcast %219 : f32 to vector<1x1xf32>
    %cst_133 = arith.constant 2.500000e-01 : f32
    %221 = vector.broadcast %cst_133 : f32 to vector<1x1xf32>
    %222 = arith.mulf %220, %221 : vector<1x1xf32>
    %223 = tpu.iota {dimensions = array<i32: 0>} : vector<8x128xi32>
    %cst_134 = arith.constant 0.000000e+00 : f32
    %224 = vector.broadcast %cst_134 : f32 to vector<8x128xf32>
    %c0_i32 = arith.constant 0 : i32
    %225 = vector.broadcast %c0_i32 : i32 to vector<8x128xi32>
    %226 = arith.cmpi eq, %223, %225 : vector<8x128xi32>
    %227 = vector.shape_cast %40 : vector<1x1xf32> to vector<1x1xf32>
    %228 = vector.broadcast %227 : vector<1x1xf32> to vector<8x128xf32>
    %229 = arith.select %226, %228, %224 : vector<8x128xi1>, vector<8x128xf32>
    %c1_i32 = arith.constant 1 : i32
    %230 = vector.broadcast %c1_i32 : i32 to vector<8x128xi32>
    %231 = arith.cmpi eq, %223, %230 : vector<8x128xi32>
    %232 = vector.shape_cast %83 : vector<1x1xf32> to vector<1x1xf32>
    %233 = vector.broadcast %232 : vector<1x1xf32> to vector<8x128xf32>
    %234 = arith.select %231, %233, %229 : vector<8x128xi1>, vector<8x128xf32>
    %c2_i32 = arith.constant 2 : i32
    %235 = vector.broadcast %c2_i32 : i32 to vector<8x128xi32>
    %236 = arith.cmpi eq, %223, %235 : vector<8x128xi32>
    %237 = vector.shape_cast %126 : vector<1x1xf32> to vector<1x1xf32>
    %238 = vector.broadcast %237 : vector<1x1xf32> to vector<8x128xf32>
    %239 = arith.select %236, %238, %234 : vector<8x128xi1>, vector<8x128xf32>
    %c3_i32 = arith.constant 3 : i32
    %240 = vector.broadcast %c3_i32 : i32 to vector<8x128xi32>
    %241 = arith.cmpi eq, %223, %240 : vector<8x128xi32>
    %242 = vector.shape_cast %169 : vector<1x1xf32> to vector<1x1xf32>
    %243 = vector.broadcast %242 : vector<1x1xf32> to vector<8x128xf32>
    %244 = arith.select %241, %243, %239 : vector<8x128xi1>, vector<8x128xf32>
    %c4_i32 = arith.constant 4 : i32
    %245 = vector.broadcast %c4_i32 : i32 to vector<8x128xi32>
    %246 = arith.cmpi eq, %223, %245 : vector<8x128xi32>
    %247 = vector.shape_cast %222 : vector<1x1xf32> to vector<1x1xf32>
    %248 = vector.broadcast %247 : vector<1x1xf32> to vector<8x128xf32>
    %249 = arith.select %246, %248, %244 : vector<8x128xi1>, vector<8x128xf32>
    %c0_135 = arith.constant 0 : index
    %c0_136 = arith.constant 0 : index
    %c0_137 = arith.constant 0 : index
    %250 = vector.load %arg21[%c0_135, %c0_136, %c0_137] : memref<1x8x128xf32, #tpu.memory_space<vmem>>, vector<1x8x128xf32>
    %251 = vector.shape_cast %250 : vector<1x8x128xf32> to vector<8x128xf32>
    %252 = vector.shape_cast %249 : vector<8x128xf32> to vector<1x8x128xf32>
    tpu.vector_store %arg21[%c0_135, %c0_136, %c0_137], %252 {strides = array<i32>} : memref<1x8x128xf32, #tpu.memory_space<vmem>>, vector<1x8x128xf32>,
    return
  }
  func.func @transform_0(%arg0: i32) -> (i32, i32, i32) {
    %c0_i32 = arith.constant 0 : i32
    %c0_i32_0 = arith.constant 0 : i32
    %c0_i32_1 = arith.constant 0 : i32
    return %arg0, %c0_i32, %c0_i32_0 : i32, i32, i32
  }
  func.func @transform_1(%arg0: i32) -> (i32, i32, i32) {
    %c0_i32 = arith.constant 0 : i32
    %c0_i32_0 = arith.constant 0 : i32
    %c0_i32_1 = arith.constant 0 : i32
    return %arg0, %c0_i32, %c0_i32_0 : i32, i32, i32
  }
  func.func @transform_2(%arg0: i32) -> (i32, i32) {
    %c0_i32 = arith.constant 0 : i32
    %c0_i32_0 = arith.constant 0 : i32
    %c0_i32_1 = arith.constant 0 : i32
    return %c0_i32, %c0_i32_0 : i32, i32
  }
  func.func @transform_3(%arg0: i32) -> (i32, i32) {
    %c0_i32 = arith.constant 0 : i32
    %c0_i32_0 = arith.constant 0 : i32
    %c0_i32_1 = arith.constant 0 : i32
    return %c0_i32, %c0_i32_0 : i32, i32
  }
  func.func @transform_4(%arg0: i32) -> (i32, i32) {
    %c0_i32 = arith.constant 0 : i32
    %c0_i32_0 = arith.constant 0 : i32
    %c0_i32_1 = arith.constant 0 : i32
    return %c0_i32, %c0_i32_0 : i32, i32
  }
  func.func @transform_5(%arg0: i32) -> (i32, i32) {
    %c0_i32 = arith.constant 0 : i32
    %c0_i32_0 = arith.constant 0 : i32
    %c0_i32_1 = arith.constant 0 : i32
    return %c0_i32, %c0_i32_0 : i32, i32
  }
  func.func @transform_6(%arg0: i32) -> (i32, i32) {
    %c0_i32 = arith.constant 0 : i32
    %c0_i32_0 = arith.constant 0 : i32
    %c0_i32_1 = arith.constant 0 : i32
    return %c0_i32, %c0_i32_0 : i32, i32
  }
  func.func @transform_7(%arg0: i32) -> (i32, i32) {
    %c0_i32 = arith.constant 0 : i32
    %c0_i32_0 = arith.constant 0 : i32
    %c0_i32_1 = arith.constant 0 : i32
    return %c0_i32, %c0_i32_0 : i32, i32
  }
  func.func @transform_8(%arg0: i32) -> (i32, i32) {
    %c0_i32 = arith.constant 0 : i32
    %c0_i32_0 = arith.constant 0 : i32
    %c0_i32_1 = arith.constant 0 : i32
    return %c0_i32, %c0_i32_0 : i32, i32
  }
  func.func @transform_9(%arg0: i32) -> (i32, i32) {
    %c0_i32 = arith.constant 0 : i32
    %c0_i32_0 = arith.constant 0 : i32
    %c0_i32_1 = arith.constant 0 : i32
    return %c0_i32, %c0_i32_0 : i32, i32
  }
  func.func @transform_10(%arg0: i32) -> (i32, i32) {
    %c0_i32 = arith.constant 0 : i32
    %c0_i32_0 = arith.constant 0 : i32
    %c0_i32_1 = arith.constant 0 : i32
    return %c0_i32, %c0_i32_0 : i32, i32
  }
  func.func @transform_11(%arg0: i32) -> (i32, i32) {
    %c0_i32 = arith.constant 0 : i32
    %c0_i32_0 = arith.constant 0 : i32
    %c0_i32_1 = arith.constant 0 : i32
    return %c0_i32, %c0_i32_0 : i32, i32
  }
  func.func @transform_12(%arg0: i32) -> (i32, i32) {
    %c0_i32 = arith.constant 0 : i32
    %c0_i32_0 = arith.constant 0 : i32
    %c0_i32_1 = arith.constant 0 : i32
    return %c0_i32, %c0_i32_0 : i32, i32
  }
  func.func @transform_13(%arg0: i32) -> (i32, i32) {
    %c0_i32 = arith.constant 0 : i32
    %c0_i32_0 = arith.constant 0 : i32
    %c0_i32_1 = arith.constant 0 : i32
    return %c0_i32, %c0_i32_0 : i32, i32
  }
  func.func @transform_14(%arg0: i32) -> (i32, i32) {
    %c0_i32 = arith.constant 0 : i32
    %c0_i32_0 = arith.constant 0 : i32
    %c0_i32_1 = arith.constant 0 : i32
    return %c0_i32, %c0_i32_0 : i32, i32
  }
  func.func @transform_15(%arg0: i32) -> (i32, i32) {
    %c0_i32 = arith.constant 0 : i32
    %c0_i32_0 = arith.constant 0 : i32
    %c0_i32_1 = arith.constant 0 : i32
    return %c0_i32, %c0_i32_0 : i32, i32
  }
  func.func @transform_16(%arg0: i32) -> (i32, i32) {
    %c0_i32 = arith.constant 0 : i32
    %c0_i32_0 = arith.constant 0 : i32
    %c0_i32_1 = arith.constant 0 : i32
    return %c0_i32, %c0_i32_0 : i32, i32
  }
  func.func @transform_17(%arg0: i32) -> (i32, i32) {
    %c0_i32 = arith.constant 0 : i32
    %c0_i32_0 = arith.constant 0 : i32
    %c0_i32_1 = arith.constant 0 : i32
    return %c0_i32, %c0_i32_0 : i32, i32
  }
  func.func @transform_18(%arg0: i32) -> (i32, i32) {
    %c0_i32 = arith.constant 0 : i32
    %c0_i32_0 = arith.constant 0 : i32
    %c0_i32_1 = arith.constant 0 : i32
    return %c0_i32, %c0_i32_0 : i32, i32
  }
  func.func @transform_19(%arg0: i32) -> (i32, i32) {
    %c0_i32 = arith.constant 0 : i32
    %c0_i32_0 = arith.constant 0 : i32
    %c0_i32_1 = arith.constant 0 : i32
    return %c0_i32, %c0_i32_0 : i32, i32
  }
  func.func @transform_20(%arg0: i32) -> (i32, i32, i32) {
    %c0_i32 = arith.constant 0 : i32
    %c0_i32_0 = arith.constant 0 : i32
    %c0_i32_1 = arith.constant 0 : i32
    return %arg0, %c0_i32, %c0_i32_0 : i32, i32, i32
  }
}

</mosaic_0001>

<llo_original>
// kernel: tpu_custom_call.1
$region0: #{tpu_custom_call.1}
  #allocation0 [shape = 'u32[]', space=smem, size = 0x4, offset = 0x4, fixed_abs, tag = 'smem constant byte address 0x4 - core index']
  #allocation1 [shape = 'u32[72,128]{1,0:T(1,128)}', space=vmem, size = 0x9000, scoped, tag = 'internal scratch']
  %s0 = inlined_call_operand.hbm [shape: f32[6,50,50], index: 0, kind: input, shape index: {}]
  %s1 = inlined_call_operand.hbm [shape: f32[6,50,50], index: 1, kind: input, shape index: {}]
  %s2 = inlined_call_operand.vmem [shape: f32[48,50], index: 2, kind: input, shape index: {}]
  %s3 = inlined_call_operand.vmem [shape: f32[50,48], index: 3, kind: input, shape index: {}]
  %s4 = inlined_call_operand.vmem [shape: f32[23,25], index: 4, kind: input, shape index: {}]
  %s5 = inlined_call_operand.vmem [shape: f32[25,23], index: 5, kind: input, shape index: {}]
  %s6 = inlined_call_operand.vmem [shape: f32[11,13], index: 6, kind: input, shape index: {}]
  %s7 = inlined_call_operand.vmem [shape: f32[13,11], index: 7, kind: input, shape index: {}]
  %s8 = inlined_call_operand.vmem [shape: f32[5,7], index: 8, kind: input, shape index: {}]
  %s9 = inlined_call_operand.vmem [shape: f32[7,5], index: 9, kind: input, shape index: {}]
  %s10 = inlined_call_operand.vmem [shape: f32[2,4], index: 10, kind: input, shape index: {}]
  %s11 = inlined_call_operand.vmem [shape: f32[4,2], index: 11, kind: input, shape index: {}]
  %s12 = inlined_call_operand.vmem [shape: f32[25,50], index: 12, kind: input, shape index: {}]
  %s13 = inlined_call_operand.vmem [shape: f32[50,25], index: 13, kind: input, shape index: {}]
  %s14 = inlined_call_operand.vmem [shape: f32[13,25], index: 14, kind: input, shape index: {}]
  %s15 = inlined_call_operand.vmem [shape: f32[25,13], index: 15, kind: input, shape index: {}]
  %s16 = inlined_call_operand.vmem [shape: f32[7,13], index: 16, kind: input, shape index: {}]
  %s17 = inlined_call_operand.vmem [shape: f32[13,7], index: 17, kind: input, shape index: {}]
  %s18 = inlined_call_operand.vmem [shape: f32[4,7], index: 18, kind: input, shape index: {}]
  %s19 = inlined_call_operand.vmem [shape: f32[7,4], index: 19, kind: input, shape index: {}]
  %s20 = inlined_call_operand.hbm [shape: f32[6,8,128], index: 20, kind: output, shape index: {}]
  %s21 = sld [smem:[#allocation0]]
  $region121: #{tpu_custom_call.1} parent=0
    _
  %s23 = ssub.s32 1, %s21
  %s24 = scalar_select 0, %s23, %s21
  $region1: #{tpu_custom_call.1} parent=0
    #allocation2 [shape = 'u8[57344]{0}', space=vmem, size = 0xe000, scoped, tag = 'input window, operand 0']
    #allocation3 [shape = 's32[2]{0}', space=sflag, size = 0x8, scoped, tag = 'scoped memory for tpu_custom_call.1']
    #allocation4 [shape = 's32[2]{0}', space=sflag, size = 0x8, scoped, tag = 'scoped memory for tpu_custom_call.1']
    #allocation5 [shape = 'u8[57344]{0}', space=vmem, size = 0xe000, scoped, tag = 'input window, operand 1']
    #allocation6 [shape = 's32[2]{0}', space=sflag, size = 0x8, scoped, tag = 'scoped memory for tpu_custom_call.1']
    #allocation7 [shape = 'u8[8192]{0}', space=vmem, size = 0x2000, scoped, tag = 'output window, operand 0']
    %25 = vsyncpa [#allocation3], 0
    %s26 = scalar_lea.sflag [#allocation3], 1
    %27 = vsyncpa %s26, 0
    %28 = vsyncpa [#allocation6], 0
    %s29 = scalar_lea.sflag [#allocation6], 1
    %30 = vsyncpa %s29, 0
    %31 = vsyncpa [#allocation4], 0
    %s32 = scalar_lea.sflag [#allocation4], 1
    %33 = vsyncpa %s32, 0
    loop: start=0, step=1, limit=8
    $region2: #{tpu_custom_call.1} parent=1 // loop_pre_header
      _
    $region3: #{tpu_custom_call.1} parent=1 // loop_header
      %s35 = sphi 0, %s39
      %p36 = scmp.ge.s32.totalorder %s35, 8
      %s45 = sphi 0, %s47
      %s48 = sphi 0, %s45
      %s49 = sphi 0, %s48
      %s65 = sphi 0, %s49
      %s71 = sphi 0, %s73
      %s74 = sphi 0, %s71
      %s75 = sphi 0, %s74
      %s91 = sphi 0, %s75
      %s95 = sphi 0, %s95
      %s97 = sphi 0, %s95
      %s98 = sphi 0, %s97
      %s112 = sphi 0, %s98
      %s116 = sphi 0, %s116
      %s118 = sphi 0, %s116
      %s119 = sphi 0, %s118
      %s133 = sphi 0, %s119
      %s137 = sphi 0, %s137
      %s139 = sphi 0, %s137
      %s140 = sphi 0, %s139
      %s154 = sphi 0, %s140
      %s158 = sphi 0, %s158
      %s160 = sphi 0, %s158
      %s161 = sphi 0, %s160
      %s175 = sphi 0, %s161
      %s179 = sphi 0, %s179
      %s181 = sphi 0, %s179
      %s182 = sphi 0, %s181
      %s196 = sphi 0, %s182
      %s200 = sphi 0, %s200
      %s202 = sphi 0, %s200
      %s203 = sphi 0, %s202
      %s217 = sphi 0, %s203
      %s221 = sphi 0, %s221
      %s223 = sphi 0, %s221
      %s224 = sphi 0, %s223
      %s238 = sphi 0, %s224
      %s242 = sphi 0, %s242
      %s244 = sphi 0, %s242
      %s245 = sphi 0, %s244
      %s259 = sphi 0, %s245
      %s263 = sphi 0, %s263
      %s265 = sphi 0, %s263
      %s266 = sphi 0, %s265
      %s280 = sphi 0, %s266
      %s284 = sphi 0, %s284
      %s286 = sphi 0, %s284
      %s287 = sphi 0, %s286
      %s301 = sphi 0, %s287
      %s305 = sphi 0, %s305
      %s307 = sphi 0, %s305
      %s308 = sphi 0, %s307
      %s322 = sphi 0, %s308
      %s326 = sphi 0, %s326
      %s328 = sphi 0, %s326
      %s329 = sphi 0, %s328
      %s343 = sphi 0, %s329
      %s347 = sphi 0, %s347
      %s349 = sphi 0, %s347
      %s350 = sphi 0, %s349
      %s364 = sphi 0, %s350
      %s368 = sphi 0, %s368
      %s370 = sphi 0, %s368
      %s371 = sphi 0, %s370
      %s385 = sphi 0, %s371
      %s389 = sphi 0, %s389
      %s391 = sphi 0, %s389
      %s392 = sphi 0, %s391
      %s406 = sphi 0, %s392
      %s410 = sphi 0, %s410
      %s412 = sphi 0, %s410
      %s413 = sphi 0, %s412
      %s427 = sphi 0, %s413
      %s431 = sphi 0, %s431
      %s433 = sphi 0, %s431
      %s434 = sphi 0, %s433
      %s448 = sphi 0, %s434
      %s452 = sphi 0, %s452
      %s454 = sphi 0, %s452
      %s455 = sphi 0, %s454
      %s469 = sphi 0, %s455
      %s475 = sphi 0, %s477
      %s478 = sphi 0, %s475
      %s479 = sphi 0, %s478
      %s495 = sphi 0, %s479
    $region4: #{tpu_custom_call.1} parent=1 // loop_header_branch
      %38 = sbr.rel (%p36) target = $region8
    $region5: #{tpu_custom_call.1} parent=1 // loop_body
      %s40 = ssub.s32 %s35, 1
      %s41 = ssub.s32 %s35, 2
      %s42 = sadd.s32 %s35, 1
      %s43 = ssub.s32 %s35, %s42
      %p44 = scmp.eq.s32.totalorder %s43, 0
      %s46 = sadd.s32 %s45, 1
      %s47 = scalar_select %p44, %s45, %s46
      %p50 = pneg %p44
      %p51 = scmp.eq.s32.totalorder %s35, 5
      %p52 = por %p50, %p51
      %p53 = scmp.ne.s32.totalorder %s45, %s48
      %p54 = scmp.eq.s32.totalorder %s35, 0
      %p55 = por %p53, %p54
      %p56 = scmp.ne.s32.totalorder %s45, %s48
      %p57 = scmp.eq.s32.totalorder %s40, 5
      %p58 = por %p56, %p57
      %p59 = scmp.ne.s32.totalorder %s48, %s49
      %p60 = scmp.eq.s32.totalorder %s40, 0
      %p61 = por %p59, %p60
      %p62 = scmp.ne.s32.totalorder %s48, %s49
      %p63 = scmp.eq.s32.totalorder %s41, 5
      %p64 = por %p62, %p63
      %p66 = scmp.ne.s32.totalorder %s49, %s65
      %p67 = scmp.eq.s32.totalorder %s41, 0
      %p68 = por %p66, %p67
      %s69 = ssub.s32 %s35, %s42
      %p70 = scmp.eq.s32.totalorder %s69, 0
      %s72 = sadd.s32 %s71, 1
      %s73 = scalar_select %p70, %s71, %s72
      %p76 = pneg %p70
      %p77 = scmp.eq.s32.totalorder %s35, 5
      %p78 = por %p76, %p77
      %p79 = scmp.ne.s32.totalorder %s71, %s74
      %p80 = scmp.eq.s32.totalorder %s35, 0
      %p81 = por %p79, %p80
      %p82 = scmp.ne.s32.totalorder %s71, %s74
      %p83 = scmp.eq.s32.totalorder %s40, 5
      %p84 = por %p82, %p83
      %p85 = scmp.ne.s32.totalorder %s74, %s75
      %p86 = scmp.eq.s32.totalorder %s40, 0
      %p87 = por %p85, %p86
      %p88 = scmp.ne.s32.totalorder %s74, %s75
      %p89 = scmp.eq.s32.totalorder %s41, 5
      %p90 = por %p88, %p89
      %p92 = scmp.ne.s32.totalorder %s75, %s91
      %p93 = scmp.eq.s32.totalorder %s41, 0
      %p94 = por %p92, %p93
      %s96 = sadd.s32 %s95, 1
      %p99 = scmp.eq.s32.totalorder %s35, 5
      %p100 = scmp.ne.s32.totalorder %s95, %s97
      %p101 = scmp.eq.s32.totalorder %s35, 0
      %p102 = por %p100, %p101
      %p103 = scmp.ne.s32.totalorder %s95, %s97
      %p104 = scmp.eq.s32.totalorder %s40, 5
      %p105 = por %p103, %p104
      %p106 = scmp.ne.s32.totalorder %s97, %s98
      %p107 = scmp.eq.s32.totalorder %s40, 0
      %p108 = por %p106, %p107
      %p109 = scmp.ne.s32.totalorder %s97, %s98
      %p110 = scmp.eq.s32.totalorder %s41, 5
      %p111 = por %p109, %p110
      %p113 = scmp.ne.s32.totalorder %s98, %s112
      %p114 = scmp.eq.s32.totalorder %s41, 0
      %p115 = por %p113, %p114
      %s117 = sadd.s32 %s116, 1
      %p120 = scmp.eq.s32.totalorder %s35, 5
      %p121 = scmp.ne.s32.totalorder %s116, %s118
      %p122 = scmp.eq.s32.totalorder %s35, 0
      %p123 = por %p121, %p122
      %p124 = scmp.ne.s32.totalorder %s116, %s118
      %p125 = scmp.eq.s32.totalorder %s40, 5
      %p126 = por %p124, %p125
      %p127 = scmp.ne.s32.totalorder %s118, %s119
      %p128 = scmp.eq.s32.totalorder %s40, 0
      %p129 = por %p127, %p128
      %p130 = scmp.ne.s32.totalorder %s118, %s119
      %p131 = scmp.eq.s32.totalorder %s41, 5
      %p132 = por %p130, %p131
      %p134 = scmp.ne.s32.totalorder %s119, %s133
      %p135 = scmp.eq.s32.totalorder %s41, 0
      %p136 = por %p134, %p135
      %s138 = sadd.s32 %s137, 1
      %p141 = scmp.eq.s32.totalorder %s35, 5
      %p142 = scmp.ne.s32.totalorder %s137, %s139
      %p143 = scmp.eq.s32.totalorder %s35, 0
      %p144 = por %p142, %p143
      %p145 = scmp.ne.s32.totalorder %s137, %s139
      %p146 = scmp.eq.s32.totalorder %s40, 5
      %p147 = por %p145, %p146
      %p148 = scmp.ne.s32.totalorder %s139, %s140
      %p149 = scmp.eq.s32.totalorder %s40, 0
      %p150 = por %p148, %p149
      %p151 = scmp.ne.s32.totalorder %s139, %s140
      %p152 = scmp.eq.s32.totalorder %s41, 5
      %p153 = por %p151, %p152
      %p155 = scmp.ne.s32.totalorder %s140, %s154
      %p156 = scmp.eq.s32.totalorder %s41, 0
      %p157 = por %p155, %p156
      %s159 = sadd.s32 %s158, 1
      %p162 = scmp.eq.s32.totalorder %s35, 5
      %p163 = scmp.ne.s32.totalorder %s158, %s160
      %p164 = scmp.eq.s32.totalorder %s35, 0
      %p165 = por %p163, %p164
      %p166 = scmp.ne.s32.totalorder %s158, %s160
      %p167 = scmp.eq.s32.totalorder %s40, 5
      %p168 = por %p166, %p167
      %p169 = scmp.ne.s32.totalorder %s160, %s161
      %p170 = scmp.eq.s32.totalorder %s40, 0
      %p171 = por %p169, %p170
      %p172 = scmp.ne.s32.totalorder %s160, %s161
      %p173 = scmp.eq.s32.totalorder %s41, 5
      %p174 = por %p172, %p173
      %p176 = scmp.ne.s32.totalorder %s161, %s175
      %p177 = scmp.eq.s32.totalorder %s41, 0
      %p178 = por %p176, %p177
      %s180 = sadd.s32 %s179, 1
      %p183 = scmp.eq.s32.totalorder %s35, 5
      %p184 = scmp.ne.s32.totalorder %s179, %s181
      %p185 = scmp.eq.s32.totalorder %s35, 0
      %p186 = por %p184, %p185
      %p187 = scmp.ne.s32.totalorder %s179, %s181
      %p188 = scmp.eq.s32.totalorder %s40, 5
      %p189 = por %p187, %p188
      %p190 = scmp.ne.s32.totalorder %s181, %s182
      %p191 = scmp.eq.s32.totalorder %s40, 0
      %p192 = por %p190, %p191
      %p193 = scmp.ne.s32.totalorder %s181, %s182
      %p194 = scmp.eq.s32.totalorder %s41, 5
      %p195 = por %p193, %p194
      %p197 = scmp.ne.s32.totalorder %s182, %s196
      %p198 = scmp.eq.s32.totalorder %s41, 0
      %p199 = por %p197, %p198
      %s201 = sadd.s32 %s200, 1
      %p204 = scmp.eq.s32.totalorder %s35, 5
      %p205 = scmp.ne.s32.totalorder %s200, %s202
      %p206 = scmp.eq.s32.totalorder %s35, 0
      %p207 = por %p205, %p206
      %p208 = scmp.ne.s32.totalorder %s200, %s202
      %p209 = scmp.eq.s32.totalorder %s40, 5
      %p210 = por %p208, %p209
      %p211 = scmp.ne.s32.totalorder %s202, %s203
      %p212 = scmp.eq.s32.totalorder %s40, 0
      %p213 = por %p211, %p212
      %p214 = scmp.ne.s32.totalorder %s202, %s203
      %p215 = scmp.eq.s32.totalorder %s41, 5
      %p216 = por %p214, %p215
      %p218 = scmp.ne.s32.totalorder %s203, %s217
      %p219 = scmp.eq.s32.totalorder %s41, 0
      %p220 = por %p218, %p219
      %s222 = sadd.s32 %s221, 1
      %p225 = scmp.eq.s32.totalorder %s35, 5
      %p226 = scmp.ne.s32.totalorder %s221, %s223
      %p227 = scmp.eq.s32.totalorder %s35, 0
      %p228 = por %p226, %p227
      %p229 = scmp.ne.s32.totalorder %s221, %s223
      %p230 = scmp.eq.s32.totalorder %s40, 5
      %p231 = por %p229, %p230
      %p232 = scmp.ne.s32.totalorder %s223, %s224
      %p233 = scmp.eq.s32.totalorder %s40, 0
      %p234 = por %p232, %p233
      %p235 = scmp.ne.s32.totalorder %s223, %s224
      %p236 = scmp.eq.s32.totalorder %s41, 5
      %p237 = por %p235, %p236
      %p239 = scmp.ne.s32.totalorder %s224, %s238
      %p240 = scmp.eq.s32.totalorder %s41, 0
      %p241 = por %p239, %p240
      %s243 = sadd.s32 %s242, 1
      %p246 = scmp.eq.s32.totalorder %s35, 5
      %p247 = scmp.ne.s32.totalorder %s242, %s244
      %p248 = scmp.eq.s32.totalorder %s35, 0
      %p249 = por %p247, %p248
      %p250 = scmp.ne.s32.totalorder %s242, %s244
      %p251 = scmp.eq.s32.totalorder %s40, 5
      %p252 = por %p250, %p251
      %p253 = scmp.ne.s32.totalorder %s244, %s245
      %p254 = scmp.eq.s32.totalorder %s40, 0
      %p255 = por %p253, %p254
      %p256 = scmp.ne.s32.totalorder %s244, %s245
      %p257 = scmp.eq.s32.totalorder %s41, 5
      %p258 = por %p256, %p257
      %p260 = scmp.ne.s32.totalorder %s245, %s259
      %p261 = scmp.eq.s32.totalorder %s41, 0
      %p262 = por %p260, %p261
      %s264 = sadd.s32 %s263, 1
      %p267 = scmp.eq.s32.totalorder %s35, 5
      %p268 = scmp.ne.s32.totalorder %s263, %s265
      %p269 = scmp.eq.s32.totalorder %s35, 0
      %p270 = por %p268, %p269
      %p271 = scmp.ne.s32.totalorder %s263, %s265
      %p272 = scmp.eq.s32.totalorder %s40, 5
      %p273 = por %p271, %p272
      %p274 = scmp.ne.s32.totalorder %s265, %s266
      %p275 = scmp.eq.s32.totalorder %s40, 0
      %p276 = por %p274, %p275
      %p277 = scmp.ne.s32.totalorder %s265, %s266
      %p278 = scmp.eq.s32.totalorder %s41, 5
      %p279 = por %p277, %p278
      %p281 = scmp.ne.s32.totalorder %s266, %s280
      %p282 = scmp.eq.s32.totalorder %s41, 0
      %p283 = por %p281, %p282
      %s285 = sadd.s32 %s284, 1
      %p288 = scmp.eq.s32.totalorder %s35, 5
      %p289 = scmp.ne.s32.totalorder %s284, %s286
      %p290 = scmp.eq.s32.totalorder %s35, 0
      %p291 = por %p289, %p290
      %p292 = scmp.ne.s32.totalorder %s284, %s286
      %p293 = scmp.eq.s32.totalorder %s40, 5
      %p294 = por %p292, %p293
      %p295 = scmp.ne.s32.totalorder %s286, %s287
      %p296 = scmp.eq.s32.totalorder %s40, 0
      %p297 = por %p295, %p296
      %p298 = scmp.ne.s32.totalorder %s286, %s287
      %p299 = scmp.eq.s32.totalorder %s41, 5
      %p300 = por %p298, %p299
      %p302 = scmp.ne.s32.totalorder %s287, %s301
      %p303 = scmp.eq.s32.totalorder %s41, 0
      %p304 = por %p302, %p303
      %s306 = sadd.s32 %s305, 1
      %p309 = scmp.eq.s32.totalorder %s35, 5
      %p310 = scmp.ne.s32.totalorder %s305, %s307
      %p311 = scmp.eq.s32.totalorder %s35, 0
      %p312 = por %p310, %p311
      %p313 = scmp.ne.s32.totalorder %s305, %s307
      %p314 = scmp.eq.s32.totalorder %s40, 5
      %p315 = por %p313, %p314
      %p316 = scmp.ne.s32.totalorder %s307, %s308
      %p317 = scmp.eq.s32.totalorder %s40, 0
      %p318 = por %p316, %p317
      %p319 = scmp.ne.s32.totalorder %s307, %s308
      %p320 = scmp.eq.s32.totalorder %s41, 5
      %p321 = por %p319, %p320
      %p323 = scmp.ne.s32.totalorder %s308, %s322
      %p324 = scmp.eq.s32.totalorder %s41, 0
      %p325 = por %p323, %p324
      %s327 = sadd.s32 %s326, 1
      %p330 = scmp.eq.s32.totalorder %s35, 5
      %p331 = scmp.ne.s32.totalorder %s326, %s328
      %p332 = scmp.eq.s32.totalorder %s35, 0
      %p333 = por %p331, %p332
      %p334 = scmp.ne.s32.totalorder %s326, %s328
      %p335 = scmp.eq.s32.totalorder %s40, 5
      %p336 = por %p334, %p335
      %p337 = scmp.ne.s32.totalorder %s328, %s329
      %p338 = scmp.eq.s32.totalorder %s40, 0
      %p339 = por %p337, %p338
      %p340 = scmp.ne.s32.totalorder %s328, %s329
      %p341 = scmp.eq.s32.totalorder %s41, 5
      %p342 = por %p340, %p341
      %p344 = scmp.ne.s32.totalorder %s329, %s343
      %p345 = scmp.eq.s32.totalorder %s41, 0
      %p346 = por %p344, %p345
      %s348 = sadd.s32 %s347, 1
      %p351 = scmp.eq.s32.totalorder %s35, 5
      %p352 = scmp.ne.s32.totalorder %s347, %s349
      %p353 = scmp.eq.s32.totalorder %s35, 0
      %p354 = por %p352, %p353
      %p355 = scmp.ne.s32.totalorder %s347, %s349
      %p356 = scmp.eq.s32.totalorder %s40, 5
      %p357 = por %p355, %p356
      %p358 = scmp.ne.s32.totalorder %s349, %s350
      %p359 = scmp.eq.s32.totalorder %s40, 0
      %p360 = por %p358, %p359
      %p361 = scmp.ne.s32.totalorder %s349, %s350
      %p362 = scmp.eq.s32.totalorder %s41, 5
      %p363 = por %p361, %p362
      %p365 = scmp.ne.s32.totalorder %s350, %s364
      %p366 = scmp.eq.s32.totalorder %s41, 0
      %p367 = por %p365, %p366
      %s369 = sadd.s32 %s368, 1
      %p372 = scmp.eq.s32.totalorder %s35, 5
      %p373 = scmp.ne.s32.totalorder %s368, %s370
      %p374 = scmp.eq.s32.totalorder %s35, 0
      %p375 = por %p373, %p374
      %p376 = scmp.ne.s32.totalorder %s368, %s370
      %p377 = scmp.eq.s32.totalorder %s40, 5
      %p378 = por %p376, %p377
      %p379 = scmp.ne.s32.totalorder %s370, %s371
      %p380 = scmp.eq.s32.totalorder %s40, 0
      %p381 = por %p379, %p380
      %p382 = scmp.ne.s32.totalorder %s370, %s371
      %p383 = scmp.eq.s32.totalorder %s41, 5
      %p384 = por %p382, %p383
      %p386 = scmp.ne.s32.totalorder %s371, %s385
      %p387 = scmp.eq.s32.totalorder %s41, 0
      %p388 = por %p386, %p387
      %s390 = sadd.s32 %s389, 1
      %p393 = scmp.eq.s32.totalorder %s35, 5
      %p394 = scmp.ne.s32.totalorder %s389, %s391
      %p395 = scmp.eq.s32.totalorder %s35, 0
      %p396 = por %p394, %p395
      %p397 = scmp.ne.s32.totalorder %s389, %s391
      %p398 = scmp.eq.s32.totalorder %s40, 5
      %p399 = por %p397, %p398
      %p400 = scmp.ne.s32.totalorder %s391, %s392
      %p401 = scmp.eq.s32.totalorder %s40, 0
      %p402 = por %p400, %p401
      %p403 = scmp.ne.s32.totalorder %s391, %s392
      %p404 = scmp.eq.s32.totalorder %s41, 5
      %p405 = por %p403, %p404
      %p407 = scmp.ne.s32.totalorder %s392, %s406
      %p408 = scmp.eq.s32.totalorder %s41, 0
      %p409 = por %p407, %p408
      %s411 = sadd.s32 %s410, 1
      %p414 = scmp.eq.s32.totalorder %s35, 5
      %p415 = scmp.ne.s32.totalorder %s410, %s412
      %p416 = scmp.eq.s32.totalorder %s35, 0
      %p417 = por %p415, %p416
      %p418 = scmp.ne.s32.totalorder %s410, %s412
      %p419 = scmp.eq.s32.totalorder %s40, 5
      %p420 = por %p418, %p419
      %p421 = scmp.ne.s32.totalorder %s412, %s413
      %p422 = scmp.eq.s32.totalorder %s40, 0
      %p423 = por %p421, %p422
      %p424 = scmp.ne.s32.totalorder %s412, %s413
      %p425 = scmp.eq.s32.totalorder %s41, 5
      %p426 = por %p424, %p425
      %p428 = scmp.ne.s32.totalorder %s413, %s427
      %p429 = scmp.eq.s32.totalorder %s41, 0
      %p430 = por %p428, %p429
      %s432 = sadd.s32 %s431, 1
      %p435 = scmp.eq.s32.totalorder %s35, 5
      %p436 = scmp.ne.s32.totalorder %s431, %s433
      %p437 = scmp.eq.s32.totalorder %s35, 0
      %p438 = por %p436, %p437
      %p439 = scmp.ne.s32.totalorder %s431, %s433
      %p440 = scmp.eq.s32.totalorder %s40, 5
      %p441 = por %p439, %p440
      %p442 = scmp.ne.s32.totalorder %s433, %s434
      %p443 = scmp.eq.s32.totalorder %s40, 0
      %p444 = por %p442, %p443
      %p445 = scmp.ne.s32.totalorder %s433, %s434
      %p446 = scmp.eq.s32.totalorder %s41, 5
      %p447 = por %p445, %p446
      %p449 = scmp.ne.s32.totalorder %s434, %s448
      %p450 = scmp.eq.s32.totalorder %s41, 0
      %p451 = por %p449, %p450
      %s453 = sadd.s32 %s452, 1
      %p456 = scmp.eq.s32.totalorder %s35, 5
      %p457 = scmp.ne.s32.totalorder %s452, %s454
      %p458 = scmp.eq.s32.totalorder %s35, 0
      %p459 = por %p457, %p458
      %p460 = scmp.ne.s32.totalorder %s452, %s454
      %p461 = scmp.eq.s32.totalorder %s40, 5
      %p462 = por %p460, %p461
      %p463 = scmp.ne.s32.totalorder %s454, %s455
      %p464 = scmp.eq.s32.totalorder %s40, 0
      %p465 = por %p463, %p464
      %p466 = scmp.ne.s32.totalorder %s454, %s455
      %p467 = scmp.eq.s32.totalorder %s41, 5
      %p468 = por %p466, %p467
      %p470 = scmp.ne.s32.totalorder %s455, %s469
      %p471 = scmp.eq.s32.totalorder %s41, 0
      %p472 = por %p470, %p471
      %s473 = ssub.s32 %s35, %s42
      %p474 = scmp.eq.s32.totalorder %s473, 0
      %s476 = sadd.s32 %s475, 1
      %s477 = scalar_select %p474, %s475, %s476
      %p480 = pneg %p474
      %p481 = scmp.eq.s32.totalorder %s35, 5
      %p482 = por %p480, %p481
      %p483 = scmp.ne.s32.totalorder %s475, %s478
      %p484 = scmp.eq.s32.totalorder %s35, 0
      %p485 = por %p483, %p484
      %p486 = scmp.ne.s32.totalorder %s475, %s478
      %p487 = scmp.eq.s32.totalorder %s40, 5
      %p488 = por %p486, %p487
      %p489 = scmp.ne.s32.totalorder %s478, %s479
      %p490 = scmp.eq.s32.totalorder %s40, 0
      %p491 = por %p489, %p490
      %p492 = scmp.ne.s32.totalorder %s478, %s479
      %p493 = scmp.eq.s32.totalorder %s41, 5
      %p494 = por %p492, %p493
      %p496 = scmp.ne.s32.totalorder %s479, %s495
      %p497 = scmp.eq.s32.totalorder %s41, 0
      %p498 = por %p496, %p497
      %p499 = scmp.le.s32.totalorder 1, %s35
      %p500 = scmp.lt.s32.totalorder %s35, 7
      %p501 = pnand %p499, %p500
      %p502 = pneg %p501
      // Predicated region
      $region9: #{tpu_custom_call.1} parent=5 // pred_check
        _
      $region10: #{tpu_custom_call.1} parent=5 // pred_check_branch
        %504 = sbr.rel (%p501) target = $region12
      $region11: #{tpu_custom_call.1} parent=5 // pred_region
        %s505 = ssub.s32 %s35, 1
        // Predicated region
        $region13: #{tpu_custom_call.1} parent=11 // pred_check
          %p506 = pneg %p108
        $region14: #{tpu_custom_call.1} parent=11 // pred_check_branch
          %508 = sbr.rel (%p506) target = $region16
        $region15: #{tpu_custom_call.1} parent=11 // pred_region
          _
        $region16: #{tpu_custom_call.1} parent=11 // pred_fallthru
          _
        // Predicated region
        $region17: #{tpu_custom_call.1} parent=11 // pred_check
          %p509 = pneg %p129
        $region18: #{tpu_custom_call.1} parent=11 // pred_check_branch
          %511 = sbr.rel (%p509) target = $region20
        $region19: #{tpu_custom_call.1} parent=11 // pred_region
          _
        $region20: #{tpu_custom_call.1} parent=11 // pred_fallthru
          _
        // Predicated region
        $region21: #{tpu_custom_call.1} parent=11 // pred_check
          %p512 = pneg %p150
        $region22: #{tpu_custom_call.1} parent=11 // pred_check_branch
          %514 = sbr.rel (%p512) target = $region24
        $region23: #{tpu_custom_call.1} parent=11 // pred_region
          _
        $region24: #{tpu_custom_call.1} parent=11 // pred_fallthru
          _
        // Predicated region
        $region25: #{tpu_custom_call.1} parent=11 // pred_check
          %p515 = pneg %p171
        $region26: #{tpu_custom_call.1} parent=11 // pred_check_branch
          %517 = sbr.rel (%p515) target = $region28
        $region27: #{tpu_custom_call.1} parent=11 // pred_region
          _
        $region28: #{tpu_custom_call.1} parent=11 // pred_fallthru
          _
        // Predicated region
        $region29: #{tpu_custom_call.1} parent=11 // pred_check
          %p518 = pneg %p192
        $region30: #{tpu_custom_call.1} parent=11 // pred_check_branch
          %520 = sbr.rel (%p518) target = $region32
        $region31: #{tpu_custom_call.1} parent=11 // pred_region
          _
        $region32: #{tpu_custom_call.1} parent=11 // pred_fallthru
          _
        // Predicated region
        $region33: #{tpu_custom_call.1} parent=11 // pred_check
          %p521 = pneg %p213
        $region34: #{tpu_custom_call.1} parent=11 // pred_check_branch
          %523 = sbr.rel (%p521) target = $region36
        $region35: #{tpu_custom_call.1} parent=11 // pred_region
          _
        $region36: #{tpu_custom_call.1} parent=11 // pred_fallthru
          _
        // Predicated region
        $region37: #{tpu_custom_call.1} parent=11 // pred_check
          %p524 = pneg %p234
        $region38: #{tpu_custom_call.1} parent=11 // pred_check_branch
          %526 = sbr.rel (%p524) target = $region40
        $region39: #{tpu_custom_call.1} parent=11 // pred_region
          _
        $region40: #{tpu_custom_call.1} parent=11 // pred_fallthru
          _
        // Predicated region
        $region41: #{tpu_custom_call.1} parent=11 // pred_check
          %p527 = pneg %p255
        $region42: #{tpu_custom_call.1} parent=11 // pred_check_branch
          %529 = sbr.rel (%p527) target = $region44
        $region43: #{tpu_custom_call.1} parent=11 // pred_region
          _
        $region44: #{tpu_custom_call.1} parent=11 // pred_fallthru
          _
        // Predicated region
        $region45: #{tpu_custom_call.1} parent=11 // pred_check
          %p530 = pneg %p276
        $region46: #{tpu_custom_call.1} parent=11 // pred_check_branch
          %532 = sbr.rel (%p530) target = $region48
        $region47: #{tpu_custom_call.1} parent=11 // pred_region
          _
        $region48: #{tpu_custom_call.1} parent=11 // pred_fallthru
          _
        // Predicated region
        $region49: #{tpu_custom_call.1} parent=11 // pred_check
          %p533 = pneg %p297
        $region50: #{tpu_custom_call.1} parent=11 // pred_check_branch
          %535 = sbr.rel (%p533) target = $region52
        $region51: #{tpu_custom_call.1} parent=11 // pred_region
          _
        $region52: #{tpu_custom_call.1} parent=11 // pred_fallthru
          _
        // Predicated region
        $region53: #{tpu_custom_call.1} parent=11 // pred_check
          %p536 = pneg %p318
        $region54: #{tpu_custom_call.1} parent=11 // pred_check_branch
          %538 = sbr.rel (%p536) target = $region56
        $region55: #{tpu_custom_call.1} parent=11 // pred_region
          _
        $region56: #{tpu_custom_call.1} parent=11 // pred_fallthru
          _
        // Predicated region
        $region57: #{tpu_custom_call.1} parent=11 // pred_check
          %p539 = pneg %p339
        $region58: #{tpu_custom_call.1} parent=11 // pred_check_branch
          %541 = sbr.rel (%p539) target = $region60
        $region59: #{tpu_custom_call.1} parent=11 // pred_region
          _
        $region60: #{tpu_custom_call.1} parent=11 // pred_fallthru
          _
        // Predicated region
        $region61: #{tpu_custom_call.1} parent=11 // pred_check
          %p542 = pneg %p360
        $region62: #{tpu_custom_call.1} parent=11 // pred_check_branch
          %544 = sbr.rel (%p542) target = $region64
        $region63: #{tpu_custom_call.1} parent=11 // pred_region
          _
        $region64: #{tpu_custom_call.1} parent=11 // pred_fallthru
          _
        // Predicated region
        $region65: #{tpu_custom_call.1} parent=11 // pred_check
          %p545 = pneg %p381
        $region66: #{tpu_custom_call.1} parent=11 // pred_check_branch
          %547 = sbr.rel (%p545) target = $region68
        $region67: #{tpu_custom_call.1} parent=11 // pred_region
          _
        $region68: #{tpu_custom_call.1} parent=11 // pred_fallthru
          _
        // Predicated region
        $region69: #{tpu_custom_call.1} parent=11 // pred_check
          %p548 = pneg %p402
        $region70: #{tpu_custom_call.1} parent=11 // pred_check_branch
          %550 = sbr.rel (%p548) target = $region72
        $region71: #{tpu_custom_call.1} parent=11 // pred_region
          _
        $region72: #{tpu_custom_call.1} parent=11 // pred_fallthru
          _
        // Predicated region
        $region73: #{tpu_custom_call.1} parent=11 // pred_check
          %p551 = pneg %p423
        $region74: #{tpu_custom_call.1} parent=11 // pred_check_branch
          %553 = sbr.rel (%p551) target = $region76
        $region75: #{tpu_custom_call.1} parent=11 // pred_region
          _
        $region76: #{tpu_custom_call.1} parent=11 // pred_fallthru
          _
        // Predicated region
        $region77: #{tpu_custom_call.1} parent=11 // pred_check
          %p554 = pneg %p444
        $region78: #{tpu_custom_call.1} parent=11 // pred_check_branch
          %556 = sbr.rel (%p554) target = $region80
        $region79: #{tpu_custom_call.1} parent=11 // pred_region
          _
        $region80: #{tpu_custom_call.1} parent=11 // pred_fallthru
          _
        // Predicated region
        $region81: #{tpu_custom_call.1} parent=11 // pred_check
          %p557 = pneg %p465
        $region82: #{tpu_custom_call.1} parent=11 // pred_check_branch
          %559 = sbr.rel (%p557) target = $region84
        $region83: #{tpu_custom_call.1} parent=11 // pred_region
          _
        $region84: #{tpu_custom_call.1} parent=11 // pred_fallthru
          _
      $region12: #{tpu_custom_call.1} parent=5 // pred_fallthru
        _
      %p560 = scmp.lt.s32.totalorder %s35, 6
      // Predicated region
      $region85: #{tpu_custom_call.1} parent=5 // pred_check
        %p561 = pneg %p560
      $region86: #{tpu_custom_call.1} parent=5 // pred_check_branch
        %563 = sbr.rel (%p561) target = $region88
      $region87: #{tpu_custom_call.1} parent=5 // pred_region
        // Predicated region
        $region89: #{tpu_custom_call.1} parent=87 // pred_check
          %p564 = pneg %p55
        $region90: #{tpu_custom_call.1} parent=87 // pred_check_branch
          %566 = sbr.rel (%p564) target = $region92
        $region91: #{tpu_custom_call.1} parent=87 // pred_region
          %s567 = sand.u32 %s45, 1
          %s568 = scalar_lea.sflag [#allocation3], %s567
          %s569 = sand.u32 %s45, 1
          %s570 = smul.addr %s569, 56
          %s571 = scalar_lea.vmem [#allocation2], %s570
          %573 = vsyncadd %s568, 0
          %s574 = smul.addr %s35, 7
          %s575 = smul.addr %s574, 8
          %s576 = scalar_lea.hbm %s0, %s575
          %s577 = sshll.u32 %s576, 4
          %s578 = int_to_ptr.hbm [resolvable:$true] %s577
          %s579 = sshll.u32 %s571, 4
          %s580 = int_to_ptr.vmem [resolvable:$true] %s579
          %585 = dma.hbm_to_vmem [thread:$0]  %s578, 896, %s580, %s568, 128, 128, 8
        $region92: #{tpu_custom_call.1} parent=87 // pred_fallthru
          _
        // Predicated region
        $region93: #{tpu_custom_call.1} parent=87 // pred_check
          %p586 = pneg %p81
        $region94: #{tpu_custom_call.1} parent=87 // pred_check_branch
          %588 = sbr.rel (%p586) target = $region96
        $region95: #{tpu_custom_call.1} parent=87 // pred_region
          %s589 = sand.u32 %s71, 1
          %s590 = scalar_lea.sflag [#allocation6], %s589
          %s591 = sand.u32 %s71, 1
          %s592 = smul.addr %s591, 56
          %s593 = scalar_lea.vmem [#allocation5], %s592
          %595 = vsyncadd %s590, 0
          %s596 = smul.addr %s35, 7
          %s597 = smul.addr %s596, 8
          %s598 = scalar_lea.hbm %s1, %s597
          %s599 = sshll.u32 %s598, 4
          %s600 = int_to_ptr.hbm [resolvable:$true] %s599
          %s601 = sshll.u32 %s593, 4
          %s602 = int_to_ptr.vmem [resolvable:$true] %s601
          %607 = dma.hbm_to_vmem [thread:$0]  %s600, 896, %s602, %s590, 128, 128, 8
        $region96: #{tpu_custom_call.1} parent=87 // pred_fallthru
          _
      $region88: #{tpu_custom_call.1} parent=5 // pred_fallthru
        _
      %p608 = scmp.le.s32.totalorder 1, %s35
      %p609 = scmp.lt.s32.totalorder %s35, 7
      %p610 = pnand %p608, %p609
      %p611 = pneg %p610
      // Predicated region
      $region97: #{tpu_custom_call.1} parent=5 // pred_check
        _
      $region98: #{tpu_custom_call.1} parent=5 // pred_check_branch
        %613 = sbr.rel (%p610) target = $region100
      $region99: #{tpu_custom_call.1} parent=5 // pred_region
        %s614 = ssub.s32 %s35, 1
        %s615 = sand.u32 %s48, 1
        %s616 = scalar_lea.sflag [#allocation3], %s615
        %s617 = sand.u32 %s48, 1
        %s618 = smul.addr %s617, 56
        %s619 = scalar_lea.vmem [#allocation2], %s618
        // Predicated region
        $region101: #{tpu_custom_call.1} parent=99 // pred_check
          %p620 = pneg %p61
        $region102: #{tpu_custom_call.1} parent=99 // pred_check_branch
          %622 = sbr.rel (%p620) target = $region104
        $region103: #{tpu_custom_call.1} parent=99 // pred_region
          %624 = dma.done %s616, 896
        $region104: #{tpu_custom_call.1} parent=99 // pred_fallthru
          _
        %s625 = sand.u32 %s74, 1
        %s626 = scalar_lea.sflag [#allocation6], %s625
        %s627 = sand.u32 %s74, 1
        %s628 = smul.addr %s627, 56
        %s629 = scalar_lea.vmem [#allocation5], %s628
        // Predicated region
        $region105: #{tpu_custom_call.1} parent=99 // pred_check
          %p630 = pneg %p87
        $region106: #{tpu_custom_call.1} parent=99 // pred_check_branch
          %632 = sbr.rel (%p630) target = $region108
        $region107: #{tpu_custom_call.1} parent=99 // pred_region
          %634 = dma.done %s626, 896
        $region108: #{tpu_custom_call.1} parent=99 // pred_fallthru
          _
        %s635 = sand.u32 %s48, 1
        %s636 = scalar_lea.sflag [#allocation3], %s635
        %s637 = sand.u32 %s48, 1
        %s638 = smul.addr %s637, 56
        %s639 = scalar_lea.vmem [#allocation2], %s638
        %p640 = pneg %p61
        %p641 = pneg %p58
        %s642 = sand.u32 %s74, 1
        %s643 = scalar_lea.sflag [#allocation6], %s642
        %s644 = sand.u32 %s74, 1
        %s645 = smul.addr %s644, 56
        %s646 = scalar_lea.vmem [#allocation5], %s645
        %p647 = pneg %p87
        %p648 = pneg %p84
        %p649 = pneg %p108
        %p650 = pneg %p105
        %p651 = pneg %p129
        %p652 = pneg %p126
        %p653 = pneg %p150
        %p654 = pneg %p147
        %p655 = pneg %p171
        %p656 = pneg %p168
        %p657 = pneg %p192
        %p658 = pneg %p189
        %p659 = pneg %p213
        %p660 = pneg %p210
        %p661 = pneg %p234
        %p662 = pneg %p231
        %p663 = pneg %p255
        %p664 = pneg %p252
        %p665 = pneg %p276
        %p666 = pneg %p273
        %p667 = pneg %p297
        %p668 = pneg %p294
        %p669 = pneg %p318
        %p670 = pneg %p315
        %p671 = pneg %p339
        %p672 = pneg %p336
        %p673 = pneg %p360
        %p674 = pneg %p357
        %p675 = pneg %p381
        %p676 = pneg %p378
        %p677 = pneg %p402
        %p678 = pneg %p399
        %p679 = pneg %p423
        %p680 = pneg %p420
        %p681 = pneg %p444
        %p682 = pneg %p441
        %p683 = pneg %p465
        %p684 = pneg %p462
        %p685 = pneg %p491
        %p686 = pneg %p488
        %s687 = sand.u32 %s478, 1
        %s688 = scalar_lea.sflag [#allocation4], %s687
        %s689 = sand.u32 %s478, 1
        %s690 = smul.addr %s689, 8
        %s691 = scalar_lea.vmem [#allocation7], %s690
        %v692 = vld [vmem:[%s619] sm:$0xff]
        %v693 = vld [vmem:[%s619 + $0x8] sm:$0xff]
        %v694 = vld [vmem:[%s619 + $0x10] sm:$0xff]
        %v695 = vld [vmem:[%s619 + $0x18] sm:$0xff]
        %v696 = vld [vmem:[%s619 + $0x20] sm:$0xff]
        %v697 = vld [vmem:[%s619 + $0x28] sm:$0xff]
        %v698 = vld [vmem:[%s619 + $0x30] sm:$0x3]
        %v699 = vld [vmem:[%s629] sm:$0xff]
        %v700 = vld [vmem:[%s629 + $0x8] sm:$0xff]
        %v701 = vld [vmem:[%s629 + $0x10] sm:$0xff]
        %v702 = vld [vmem:[%s629 + $0x18] sm:$0xff]
        %v703 = vld [vmem:[%s629 + $0x20] sm:$0xff]
        %v704 = vld [vmem:[%s629 + $0x28] sm:$0xff]
        %v705 = vld [vmem:[%s629 + $0x30] sm:$0x3]
        %v706 = vld [vmem:[%s2] sm:$0xff]
        %v707 = vld [vmem:[%s2 + $0x8] sm:$0xff]
        %v708 = vld [vmem:[%s2 + $0x10] sm:$0xff]
        %v709 = vld [vmem:[%s2 + $0x18] sm:$0xff]
        %v710 = vld [vmem:[%s2 + $0x20] sm:$0xff]
        %v711 = vld [vmem:[%s2 + $0x28] sm:$0xff]
        %v712 = vld [vmem:[%s3] sm:$0xff]
        %v713 = vld [vmem:[%s3 + $0x8] sm:$0xff]
        %v714 = vld [vmem:[%s3 + $0x10] sm:$0xff]
        %v715 = vld [vmem:[%s3 + $0x18] sm:$0xff]
        %v716 = vld [vmem:[%s3 + $0x20] sm:$0xff]
        %v717 = vld [vmem:[%s3 + $0x28] sm:$0xff]
        %v718 = vld [vmem:[%s3 + $0x30] sm:$0x3]
        %vm719 = vcmask 408576
        %v721 = vsel %vm719, %v692, 0
        %v724 = vsel %vm719, %v693, 0
        %v727 = vsel %vm719, %v694, 0
        %v730 = vsel %vm719, %v695, 0
        %v733 = vsel %vm719, %v696, 0
        %v736 = vsel %vm719, %v697, 0
        %v739 = vsel %vm719, %v698, 0
        %vm741 = vcmask 1041408
        %v743 = vsel %vm741, %v718, 0
        %745 = vmatpush.msra.mxu0 0.0
        %746 = vmatpush.msra.mxu0 0.0
        %747 = vmatpush.msra.mxu0 0.0
        %748 = vmatpush.msra.mxu0 0.0
        %749 = vmatpush.msra.mxu0 0.0
        %750 = vmatpush.msra.mxu0 0.0
        %751 = vmatpush.msra.mxu0 0.0
        %752 = vmatpush.msra.mxu0 0.0
        %753 = vmatpush.msra.mxu0 0.0
        %754 = vmatpush.msra.mxu0 %v743
        %755 = vmatpush.msra.mxu0 %v717
        %756 = vmatpush.msra.mxu0 %v716
        %757 = vmatpush.msra.mxu0 %v715
        %758 = vmatpush.msra.mxu0 %v714
        %759 = vmatpush.msra.mxu0 %v713
        %760 = vmatpush.msra.mxu0 %v712
        %761 = vmatmul.f32.gmra.mxu0 %v721
        %v762 = vpop.f32.mrf.mxu0
        %v763 = vadd.f32 0.0, %v762
        %764 = vmatmul.f32.gmra.mxu0 %v724
        %v765 = vpop.f32.mrf.mxu0
        %v766 = vadd.f32 0.0, %v765
        %767 = vmatmul.f32.gmra.mxu0 %v727
        %v768 = vpop.f32.mrf.mxu0
        %v769 = vadd.f32 0.0, %v768
        %770 = vmatmul.f32.gmra.mxu0 %v730
        %v771 = vpop.f32.mrf.mxu0
        %v772 = vadd.f32 0.0, %v771
        %773 = vmatmul.f32.gmra.mxu0 %v733
        %v774 = vpop.f32.mrf.mxu0
        %v775 = vadd.f32 0.0, %v774
        %776 = vmatmul.f32.gmra.mxu0 %v736
        %v777 = vpop.f32.mrf.mxu0
        %v778 = vadd.f32 0.0, %v777
        %779 = vmatmul.f32.gmra.mxu0 %v739
        %v780 = vpop.f32.mrf.mxu0
        %v781 = vadd.f32 0.0, %v780
        %782 = vdwg.mxu0
        %v784 = vsel %vm719, %v706, 0
        %v787 = vsel %vm719, %v707, 0
        %v790 = vsel %vm719, %v708, 0
        %v793 = vsel %vm719, %v709, 0
        %v796 = vsel %vm719, %v710, 0
        %v799 = vsel %vm719, %v711, 0
        %v802 = vsel %vm741, %v781, 0
        %804 = vmatpush.msra.mxu0 0.0
        %805 = vmatpush.msra.mxu0 0.0
        %806 = vmatpush.msra.mxu0 0.0
        %807 = vmatpush.msra.mxu0 0.0
        %808 = vmatpush.msra.mxu0 0.0
        %809 = vmatpush.msra.mxu0 0.0
        %810 = vmatpush.msra.mxu0 0.0
        %811 = vmatpush.msra.mxu0 0.0
        %812 = vmatpush.msra.mxu0 0.0
        %813 = vmatpush.msra.mxu0 %v802
        %814 = vmatpush.msra.mxu0 %v778
        %815 = vmatpush.msra.mxu0 %v775
        %816 = vmatpush.msra.mxu0 %v772
        %817 = vmatpush.msra.mxu0 %v769
        %818 = vmatpush.msra.mxu0 %v766
        %819 = vmatpush.msra.mxu0 %v763
        %820 = vmatmul.f32.gmra.mxu0 %v784
        %v821 = vpop.f32.mrf.mxu0
        %v822 = vadd.f32 0.0, %v821
        %823 = vmatmul.f32.gmra.mxu0 %v787
        %v824 = vpop.f32.mrf.mxu0
        %v825 = vadd.f32 0.0, %v824
        %826 = vmatmul.f32.gmra.mxu0 %v790
        %v827 = vpop.f32.mrf.mxu0
        %v828 = vadd.f32 0.0, %v827
        %829 = vmatmul.f32.gmra.mxu0 %v793
        %v830 = vpop.f32.mrf.mxu0
        %v831 = vadd.f32 0.0, %v830
        %832 = vmatmul.f32.gmra.mxu0 %v796
        %v833 = vpop.f32.mrf.mxu0
        %v834 = vadd.f32 0.0, %v833
        %835 = vmatmul.f32.gmra.mxu0 %v799
        %v836 = vpop.f32.mrf.mxu0
        %v837 = vadd.f32 0.0, %v836
        %838 = vdwg.mxu0
        %v840 = vsel %vm719, %v699, 0
        %v843 = vsel %vm719, %v700, 0
        %v846 = vsel %vm719, %v701, 0
        %v849 = vsel %vm719, %v702, 0
        %v852 = vsel %vm719, %v703, 0
        %v855 = vsel %vm719, %v704, 0
        %v858 = vsel %vm719, %v705, 0
        %860 = vmatpush.msra.mxu0 0.0
        %861 = vmatpush.msra.mxu0 0.0
        %862 = vmatpush.msra.mxu0 0.0
        %863 = vmatpush.msra.mxu0 0.0
        %864 = vmatpush.msra.mxu0 0.0
        %865 = vmatpush.msra.mxu0 0.0
        %866 = vmatpush.msra.mxu0 0.0
        %867 = vmatpush.msra.mxu0 0.0
        %868 = vmatpush.msra.mxu0 0.0
        %869 = vmatpush.msra.mxu0 %v743
        %870 = vmatpush.msra.mxu0 %v717
        %871 = vmatpush.msra.mxu0 %v716
        %872 = vmatpush.msra.mxu0 %v715
        %873 = vmatpush.msra.mxu0 %v714
        %874 = vmatpush.msra.mxu0 %v713
        %875 = vmatpush.msra.mxu0 %v712
        %876 = vmatmul.f32.gmra.mxu0 %v840
        %v877 = vpop.f32.mrf.mxu0
        %v878 = vadd.f32 0.0, %v877
        %879 = vmatmul.f32.gmra.mxu0 %v843
        %v880 = vpop.f32.mrf.mxu0
        %v881 = vadd.f32 0.0, %v880
        %882 = vmatmul.f32.gmra.mxu0 %v846
        %v883 = vpop.f32.mrf.mxu0
        %v884 = vadd.f32 0.0, %v883
        %885 = vmatmul.f32.gmra.mxu0 %v849
        %v886 = vpop.f32.mrf.mxu0
        %v887 = vadd.f32 0.0, %v886
        %888 = vmatmul.f32.gmra.mxu0 %v852
        %v889 = vpop.f32.mrf.mxu0
        %v890 = vadd.f32 0.0, %v889
        %891 = vmatmul.f32.gmra.mxu0 %v855
        %v892 = vpop.f32.mrf.mxu0
        %v893 = vadd.f32 0.0, %v892
        %894 = vmatmul.f32.gmra.mxu0 %v858
        %v895 = vpop.f32.mrf.mxu0
        %v896 = vadd.f32 0.0, %v895
        %897 = vdwg.mxu0
        %v899 = vsel %vm741, %v896, 0
        %901 = vmatpush.msra.mxu0 0.0
        %902 = vmatpush.msra.mxu0 0.0
        %903 = vmatpush.msra.mxu0 0.0
        %904 = vmatpush.msra.mxu0 0.0
        %905 = vmatpush.msra.mxu0 0.0
        %906 = vmatpush.msra.mxu0 0.0
        %907 = vmatpush.msra.mxu0 0.0
        %908 = vmatpush.msra.mxu0 0.0
        %909 = vmatpush.msra.mxu0 0.0
        %910 = vmatpush.msra.mxu0 %v899
        %911 = vmatpush.msra.mxu0 %v893
        %912 = vmatpush.msra.mxu0 %v890
        %913 = vmatpush.msra.mxu0 %v887
        %914 = vmatpush.msra.mxu0 %v884
        %915 = vmatpush.msra.mxu0 %v881
        %916 = vmatpush.msra.mxu0 %v878
        %917 = vmatmul.f32.gmra.mxu0 %v784
        %v918 = vpop.f32.mrf.mxu0
        %v919 = vadd.f32 0.0, %v918
        %920 = vmatmul.f32.gmra.mxu0 %v787
        %v921 = vpop.f32.mrf.mxu0
        %v922 = vadd.f32 0.0, %v921
        %923 = vmatmul.f32.gmra.mxu0 %v790
        %v924 = vpop.f32.mrf.mxu0
        %v925 = vadd.f32 0.0, %v924
        %926 = vmatmul.f32.gmra.mxu0 %v793
        %v927 = vpop.f32.mrf.mxu0
        %v928 = vadd.f32 0.0, %v927
        %929 = vmatmul.f32.gmra.mxu0 %v796
        %v930 = vpop.f32.mrf.mxu0
        %v931 = vadd.f32 0.0, %v930
        %932 = vmatmul.f32.gmra.mxu0 %v799
        %v933 = vpop.f32.mrf.mxu0
        %v934 = vadd.f32 0.0, %v933
        %935 = vdwg.mxu0
        %v936 = vmul.f32 %v692, %v692
        %v937 = vmul.f32 %v693, %v693
        %v938 = vmul.f32 %v694, %v694
        %v939 = vmul.f32 %v695, %v695
        %v940 = vmul.f32 %v696, %v696
        %v941 = vmul.f32 %v697, %v697
        %v942 = vmul.f32 %v698, %v698
        %v944 = vsel %vm719, %v936, 0
        %v947 = vsel %vm719, %v937, 0
        %v950 = vsel %vm719, %v938, 0
        %v953 = vsel %vm719, %v939, 0
        %v956 = vsel %vm719, %v940, 0
        %v959 = vsel %vm719, %v941, 0
        %v962 = vsel %vm719, %v942, 0
        %964 = vmatpush.msra.mxu0 0.0
        %965 = vmatpush.msra.mxu0 0.0
        %966 = vmatpush.msra.mxu0 0.0
        %967 = vmatpush.msra.mxu0 0.0
        %968 = vmatpush.msra.mxu0 0.0
        %969 = vmatpush.msra.mxu0 0.0
        %970 = vmatpush.msra.mxu0 0.0
        %971 = vmatpush.msra.mxu0 0.0
        %972 = vmatpush.msra.mxu0 0.0
        %973 = vmatpush.msra.mxu0 %v743
        %974 = vmatpush.msra.mxu0 %v717
        %975 = vmatpush.msra.mxu0 %v716
        %976 = vmatpush.msra.mxu0 %v715
        %977 = vmatpush.msra.mxu0 %v714
        %978 = vmatpush.msra.mxu0 %v713
        %979 = vmatpush.msra.mxu0 %v712
        %980 = vmatmul.f32.gmra.mxu0 %v944
        %v981 = vpop.f32.mrf.mxu0
        %v982 = vadd.f32 0.0, %v981
        %983 = vmatmul.f32.gmra.mxu0 %v947
        %v984 = vpop.f32.mrf.mxu0
        %v985 = vadd.f32 0.0, %v984
        %986 = vmatmul.f32.gmra.mxu0 %v950
        %v987 = vpop.f32.mrf.mxu0
        %v988 = vadd.f32 0.0, %v987
        %989 = vmatmul.f32.gmra.mxu0 %v953
        %v990 = vpop.f32.mrf.mxu0
        %v991 = vadd.f32 0.0, %v990
        %992 = vmatmul.f32.gmra.mxu0 %v956
        %v993 = vpop.f32.mrf.mxu0
        %v994 = vadd.f32 0.0, %v993
        %995 = vmatmul.f32.gmra.mxu0 %v959
        %v996 = vpop.f32.mrf.mxu0
        %v997 = vadd.f32 0.0, %v996
        %998 = vmatmul.f32.gmra.mxu0 %v962
        %v999 = vpop.f32.mrf.mxu0
        %v1000 = vadd.f32 0.0, %v999
        %1001 = vdwg.mxu0
        %v1003 = vsel %vm741, %v1000, 0
        %1005 = vmatpush.msra.mxu0 0.0
        %1006 = vmatpush.msra.mxu0 0.0
        %1007 = vmatpush.msra.mxu0 0.0
        %1008 = vmatpush.msra.mxu0 0.0
        %1009 = vmatpush.msra.mxu0 0.0
        %1010 = vmatpush.msra.mxu0 0.0
        %1011 = vmatpush.msra.mxu0 0.0
        %1012 = vmatpush.msra.mxu0 0.0
        %1013 = vmatpush.msra.mxu0 0.0
        %1014 = vmatpush.msra.mxu0 %v1003
        %1015 = vmatpush.msra.mxu0 %v997
        %1016 = vmatpush.msra.mxu0 %v994
        %1017 = vmatpush.msra.mxu0 %v991
        %1018 = vmatpush.msra.mxu0 %v988
        %1019 = vmatpush.msra.mxu0 %v985
        %1020 = vmatpush.msra.mxu0 %v982
        %1021 = vmatmul.f32.gmra.mxu0 %v784
        %v1022 = vpop.f32.mrf.mxu0
        %v1023 = vadd.f32 0.0, %v1022
        %1024 = vmatmul.f32.gmra.mxu0 %v787
        %v1025 = vpop.f32.mrf.mxu0
        %v1026 = vadd.f32 0.0, %v1025
        %1027 = vmatmul.f32.gmra.mxu0 %v790
        %v1028 = vpop.f32.mrf.mxu0
        %v1029 = vadd.f32 0.0, %v1028
        %1030 = vmatmul.f32.gmra.mxu0 %v793
        %v1031 = vpop.f32.mrf.mxu0
        %v1032 = vadd.f32 0.0, %v1031
        %1033 = vmatmul.f32.gmra.mxu0 %v796
        %v1034 = vpop.f32.mrf.mxu0
        %v1035 = vadd.f32 0.0, %v1034
        %1036 = vmatmul.f32.gmra.mxu0 %v799
        %v1037 = vpop.f32.mrf.mxu0
        %v1038 = vadd.f32 0.0, %v1037
        %1039 = vdwg.mxu0
        %v1040 = vmul.f32 %v699, %v699
        %v1041 = vmul.f32 %v700, %v700
        %v1042 = vmul.f32 %v701, %v701
        %v1043 = vmul.f32 %v702, %v702
        %v1044 = vmul.f32 %v703, %v703
        %v1045 = vmul.f32 %v704, %v704
        %v1046 = vmul.f32 %v705, %v705
        %v1048 = vsel %vm719, %v1040, 0
        %v1051 = vsel %vm719, %v1041, 0
        %v1054 = vsel %vm719, %v1042, 0
        %v1057 = vsel %vm719, %v1043, 0
        %v1060 = vsel %vm719, %v1044, 0
        %v1063 = vsel %vm719, %v1045, 0
        %v1066 = vsel %vm719, %v1046, 0
        %1068 = vmatpush.msra.mxu0 0.0
        %1069 = vmatpush.msra.mxu0 0.0
        %1070 = vmatpush.msra.mxu0 0.0
        %1071 = vmatpush.msra.mxu0 0.0
        %1072 = vmatpush.msra.mxu0 0.0
        %1073 = vmatpush.msra.mxu0 0.0
        %1074 = vmatpush.msra.mxu0 0.0
        %1075 = vmatpush.msra.mxu0 0.0
        %1076 = vmatpush.msra.mxu0 0.0
        %1077 = vmatpush.msra.mxu0 %v743
        %1078 = vmatpush.msra.mxu0 %v717
        %1079 = vmatpush.msra.mxu0 %v716
        %1080 = vmatpush.msra.mxu0 %v715
        %1081 = vmatpush.msra.mxu0 %v714
        %1082 = vmatpush.msra.mxu0 %v713
        %1083 = vmatpush.msra.mxu0 %v712
        %1084 = vmatmul.f32.gmra.mxu0 %v1048
        %v1085 = vpop.f32.mrf.mxu0
        %v1086 = vadd.f32 0.0, %v1085
        %1087 = vmatmul.f32.gmra.mxu0 %v1051
        %v1088 = vpop.f32.mrf.mxu0
        %v1089 = vadd.f32 0.0, %v1088
        %1090 = vmatmul.f32.gmra.mxu0 %v1054
        %v1091 = vpop.f32.mrf.mxu0
        %v1092 = vadd.f32 0.0, %v1091
        %1093 = vmatmul.f32.gmra.mxu0 %v1057
        %v1094 = vpop.f32.mrf.mxu0
        %v1095 = vadd.f32 0.0, %v1094
        %1096 = vmatmul.f32.gmra.mxu0 %v1060
        %v1097 = vpop.f32.mrf.mxu0
        %v1098 = vadd.f32 0.0, %v1097
        %1099 = vmatmul.f32.gmra.mxu0 %v1063
        %v1100 = vpop.f32.mrf.mxu0
        %v1101 = vadd.f32 0.0, %v1100
        %1102 = vmatmul.f32.gmra.mxu0 %v1066
        %v1103 = vpop.f32.mrf.mxu0
        %v1104 = vadd.f32 0.0, %v1103
        %1105 = vdwg.mxu0
        %v1107 = vsel %vm741, %v1104, 0
        %1109 = vmatpush.msra.mxu0 0.0
        %1110 = vmatpush.msra.mxu0 0.0
        %1111 = vmatpush.msra.mxu0 0.0
        %1112 = vmatpush.msra.mxu0 0.0
        %1113 = vmatpush.msra.mxu0 0.0
        %1114 = vmatpush.msra.mxu0 0.0
        %1115 = vmatpush.msra.mxu0 0.0
        %1116 = vmatpush.msra.mxu0 0.0
        %1117 = vmatpush.msra.mxu0 0.0
        %1118 = vmatpush.msra.mxu0 %v1107
        %1119 = vmatpush.msra.mxu0 %v1101
        %1120 = vmatpush.msra.mxu0 %v1098
        %1121 = vmatpush.msra.mxu0 %v1095
        %1122 = vmatpush.msra.mxu0 %v1092
        %1123 = vmatpush.msra.mxu0 %v1089
        %1124 = vmatpush.msra.mxu0 %v1086
        %1125 = vmatmul.f32.gmra.mxu0 %v784
        %v1126 = vpop.f32.mrf.mxu0
        %v1127 = vadd.f32 0.0, %v1126
        %1128 = vmatmul.f32.gmra.mxu0 %v787
        %v1129 = vpop.f32.mrf.mxu0
        %v1130 = vadd.f32 0.0, %v1129
        %1131 = vmatmul.f32.gmra.mxu0 %v790
        %v1132 = vpop.f32.mrf.mxu0
        %v1133 = vadd.f32 0.0, %v1132
        %1134 = vmatmul.f32.gmra.mxu0 %v793
        %v1135 = vpop.f32.mrf.mxu0
        %v1136 = vadd.f32 0.0, %v1135
        %1137 = vmatmul.f32.gmra.mxu0 %v796
        %v1138 = vpop.f32.mrf.mxu0
        %v1139 = vadd.f32 0.0, %v1138
        %1140 = vmatmul.f32.gmra.mxu0 %v799
        %v1141 = vpop.f32.mrf.mxu0
        %v1142 = vadd.f32 0.0, %v1141
        %1143 = vdwg.mxu0
        %v1144 = vmul.f32 %v692, %v699
        %v1145 = vmul.f32 %v693, %v700
        %v1146 = vmul.f32 %v694, %v701
        %v1147 = vmul.f32 %v695, %v702
        %v1148 = vmul.f32 %v696, %v703
        %v1149 = vmul.f32 %v697, %v704
        %v1150 = vmul.f32 %v698, %v705
        %v1152 = vsel %vm719, %v1144, 0
        %v1155 = vsel %vm719, %v1145, 0
        %v1158 = vsel %vm719, %v1146, 0
        %v1161 = vsel %vm719, %v1147, 0
        %v1164 = vsel %vm719, %v1148, 0
        %v1167 = vsel %vm719, %v1149, 0
        %v1170 = vsel %vm719, %v1150, 0
        %1172 = vmatpush.msra.mxu0 0.0
        %1173 = vmatpush.msra.mxu0 0.0
        %1174 = vmatpush.msra.mxu0 0.0
        %1175 = vmatpush.msra.mxu0 0.0
        %1176 = vmatpush.msra.mxu0 0.0
        %1177 = vmatpush.msra.mxu0 0.0
        %1178 = vmatpush.msra.mxu0 0.0
        %1179 = vmatpush.msra.mxu0 0.0
        %1180 = vmatpush.msra.mxu0 0.0
        %1181 = vmatpush.msra.mxu0 %v743
        %1182 = vmatpush.msra.mxu0 %v717
        %1183 = vmatpush.msra.mxu0 %v716
        %1184 = vmatpush.msra.mxu0 %v715
        %1185 = vmatpush.msra.mxu0 %v714
        %1186 = vmatpush.msra.mxu0 %v713
        %1187 = vmatpush.msra.mxu0 %v712
        %1188 = vmatmul.f32.gmra.mxu0 %v1152
        %v1189 = vpop.f32.mrf.mxu0
        %v1190 = vadd.f32 0.0, %v1189
        %1191 = vmatmul.f32.gmra.mxu0 %v1155
        %v1192 = vpop.f32.mrf.mxu0
        %v1193 = vadd.f32 0.0, %v1192
        %1194 = vmatmul.f32.gmra.mxu0 %v1158
        %v1195 = vpop.f32.mrf.mxu0
        %v1196 = vadd.f32 0.0, %v1195
        %1197 = vmatmul.f32.gmra.mxu0 %v1161
        %v1198 = vpop.f32.mrf.mxu0
        %v1199 = vadd.f32 0.0, %v1198
        %1200 = vmatmul.f32.gmra.mxu0 %v1164
        %v1201 = vpop.f32.mrf.mxu0
        %v1202 = vadd.f32 0.0, %v1201
        %1203 = vmatmul.f32.gmra.mxu0 %v1167
        %v1204 = vpop.f32.mrf.mxu0
        %v1205 = vadd.f32 0.0, %v1204
        %1206 = vmatmul.f32.gmra.mxu0 %v1170
        %v1207 = vpop.f32.mrf.mxu0
        %v1208 = vadd.f32 0.0, %v1207
        %1209 = vdwg.mxu0
        %v1211 = vsel %vm741, %v1208, 0
        %1213 = vmatpush.msra.mxu0 0.0
        %1214 = vmatpush.msra.mxu0 0.0
        %1215 = vmatpush.msra.mxu0 0.0
        %1216 = vmatpush.msra.mxu0 0.0
        %1217 = vmatpush.msra.mxu0 0.0
        %1218 = vmatpush.msra.mxu0 0.0
        %1219 = vmatpush.msra.mxu0 0.0
        %1220 = vmatpush.msra.mxu0 0.0
        %1221 = vmatpush.msra.mxu0 0.0
        %1222 = vmatpush.msra.mxu0 %v1211
        %1223 = vmatpush.msra.mxu0 %v1205
        %1224 = vmatpush.msra.mxu0 %v1202
        %1225 = vmatpush.msra.mxu0 %v1199
        %1226 = vmatpush.msra.mxu0 %v1196
        %1227 = vmatpush.msra.mxu0 %v1193
        %1228 = vmatpush.msra.mxu0 %v1190
        %1229 = vmatmul.f32.gmra.mxu0 %v784
        %v1230 = vpop.f32.mrf.mxu0
        %v1231 = vadd.f32 0.0, %v1230
        %1232 = vmatmul.f32.gmra.mxu0 %v787
        %v1233 = vpop.f32.mrf.mxu0
        %v1234 = vadd.f32 0.0, %v1233
        %1235 = vmatmul.f32.gmra.mxu0 %v790
        %v1236 = vpop.f32.mrf.mxu0
        %v1237 = vadd.f32 0.0, %v1236
        %1238 = vmatmul.f32.gmra.mxu0 %v793
        %v1239 = vpop.f32.mrf.mxu0
        %v1240 = vadd.f32 0.0, %v1239
        %1241 = vmatmul.f32.gmra.mxu0 %v796
        %v1242 = vpop.f32.mrf.mxu0
        %v1243 = vadd.f32 0.0, %v1242
        %1244 = vmatmul.f32.gmra.mxu0 %v799
        %v1245 = vpop.f32.mrf.mxu0
        %v1246 = vadd.f32 0.0, %v1245
        %1247 = vdwg.mxu0
        %v1248 = vmul.f32 %v822, %v822
        %v1249 = vmul.f32 %v825, %v825
        %v1250 = vmul.f32 %v828, %v828
        %v1251 = vmul.f32 %v831, %v831
        %v1252 = vmul.f32 %v834, %v834
        %v1253 = vmul.f32 %v837, %v837
        %v1254 = vmul.f32 %v919, %v919
        %v1255 = vmul.f32 %v922, %v922
        %v1256 = vmul.f32 %v925, %v925
        %v1257 = vmul.f32 %v928, %v928
        %v1258 = vmul.f32 %v931, %v931
        %v1259 = vmul.f32 %v934, %v934
        %v1260 = vmul.f32 %v822, %v919
        %v1261 = vmul.f32 %v825, %v922
        %v1262 = vmul.f32 %v828, %v925
        %v1263 = vmul.f32 %v831, %v928
        %v1264 = vmul.f32 %v834, %v931
        %v1265 = vmul.f32 %v837, %v934
        %v1266 = vsub.f32 %v1023, %v1248
        %v1267 = vsub.f32 %v1026, %v1249
        %v1268 = vsub.f32 %v1029, %v1250
        %v1269 = vsub.f32 %v1032, %v1251
        %v1270 = vsub.f32 %v1035, %v1252
        %v1271 = vsub.f32 %v1038, %v1253
        %v1272 = vsub.f32 %v1127, %v1254
        %v1273 = vsub.f32 %v1130, %v1255
        %v1274 = vsub.f32 %v1133, %v1256
        %v1275 = vsub.f32 %v1136, %v1257
        %v1276 = vsub.f32 %v1139, %v1258
        %v1277 = vsub.f32 %v1142, %v1259
        %v1278 = vsub.f32 %v1231, %v1260
        %v1279 = vsub.f32 %v1234, %v1261
        %v1280 = vsub.f32 %v1237, %v1262
        %v1281 = vsub.f32 %v1240, %v1263
        %v1282 = vsub.f32 %v1243, %v1264
        %v1283 = vsub.f32 %v1246, %v1265
        %v1284 = vmul.f32 %v1278, 2.0
        %v1285 = vmul.f32 %v1279, 2.0
        %v1286 = vmul.f32 %v1280, 2.0
        %v1287 = vmul.f32 %v1281, 2.0
        %v1288 = vmul.f32 %v1282, 2.0
        %v1289 = vmul.f32 %v1283, 2.0
        %v1290 = vadd.f32 %v1284, 0.0009
        %v1291 = vadd.f32 %v1285, 0.0009
        %v1292 = vadd.f32 %v1286, 0.0009
        %v1293 = vadd.f32 %v1287, 0.0009
        %v1294 = vadd.f32 %v1288, 0.0009
        %v1295 = vadd.f32 %v1289, 0.0009
        %v1296 = vadd.f32 %v1266, %v1272
        %v1297 = vadd.f32 %v1267, %v1273
        %v1298 = vadd.f32 %v1268, %v1274
        %v1299 = vadd.f32 %v1269, %v1275
        %v1300 = vadd.f32 %v1270, %v1276
        %v1301 = vadd.f32 %v1271, %v1277
        %v1302 = vadd.f32 %v1296, 0.0009
        %v1303 = vadd.f32 %v1297, 0.0009
        %v1304 = vadd.f32 %v1298, 0.0009
        %v1305 = vadd.f32 %v1299, 0.0009
        %v1306 = vadd.f32 %v1300, 0.0009
        %v1307 = vadd.f32 %v1301, 0.0009
        %v1308 = vrcp.pop %v1302
        %v1309 = vmul.f32 %v1302, %v1308
        %v1310 = vsub.f32 1.0, %v1309
        %v1311 = vmul.f32 %v1308, %v1310
        %v1312 = vadd.f32 %v1308, %v1311
        %vm1313 = vweird.f32 %v1302
        %vm1314 = vweird.f32 %v1308
        %vm1315 = vmor %vm1313, %vm1314
        %v1316 = vsel %vm1315, %v1308, %v1312
        %v1317 = vand.u32 2147483647, %v1302
        %vm1318 = vcmp.eq.f32.partialorder %v1317, 8.507059e+37
        %v1319 = vand.u32 %v1302, 2147483648
        %v1320 = vor.u32 1.1754944e-38, %v1319
        %v1321 = vsel %vm1318, %v1320, %v1316
        %v1322 = vrcp.pop %v1303
        %v1323 = vmul.f32 %v1303, %v1322
        %v1324 = vsub.f32 1.0, %v1323
        %v1325 = vmul.f32 %v1322, %v1324
        %v1326 = vadd.f32 %v1322, %v1325
        %vm1327 = vweird.f32 %v1303
        %vm1328 = vweird.f32 %v1322
        %vm1329 = vmor %vm1327, %vm1328
        %v1330 = vsel %vm1329, %v1322, %v1326
        %v1331 = vand.u32 2147483647, %v1303
        %vm1332 = vcmp.eq.f32.partialorder %v1331, 8.507059e+37
        %v1333 = vand.u32 %v1303, 2147483648
        %v1334 = vor.u32 1.1754944e-38, %v1333
        %v1335 = vsel %vm1332, %v1334, %v1330
        %v1336 = vrcp.pop %v1304
        %v1337 = vmul.f32 %v1304, %v1336
        %v1338 = vsub.f32 1.0, %v1337
        %v1339 = vmul.f32 %v1336, %v1338
        %v1340 = vadd.f32 %v1336, %v1339
        %vm1341 = vweird.f32 %v1304
        %vm1342 = vweird.f32 %v1336
        %vm1343 = vmor %vm1341, %vm1342
        %v1344 = vsel %vm1343, %v1336, %v1340
        %v1345 = vand.u32 2147483647, %v1304
        %vm1346 = vcmp.eq.f32.partialorder %v1345, 8.507059e+37
        %v1347 = vand.u32 %v1304, 2147483648
        %v1348 = vor.u32 1.1754944e-38, %v1347
        %v1349 = vsel %vm1346, %v1348, %v1344
        %v1350 = vrcp.pop %v1305
        %v1351 = vmul.f32 %v1305, %v1350
        %v1352 = vsub.f32 1.0, %v1351
        %v1353 = vmul.f32 %v1350, %v1352
        %v1354 = vadd.f32 %v1350, %v1353
        %vm1355 = vweird.f32 %v1305
        %vm1356 = vweird.f32 %v1350
        %vm1357 = vmor %vm1355, %vm1356
        %v1358 = vsel %vm1357, %v1350, %v1354
        %v1359 = vand.u32 2147483647, %v1305
        %vm1360 = vcmp.eq.f32.partialorder %v1359, 8.507059e+37
        %v1361 = vand.u32 %v1305, 2147483648
        %v1362 = vor.u32 1.1754944e-38, %v1361
        %v1363 = vsel %vm1360, %v1362, %v1358
        %v1364 = vrcp.pop %v1306
        %v1365 = vmul.f32 %v1306, %v1364
        %v1366 = vsub.f32 1.0, %v1365
        %v1367 = vmul.f32 %v1364, %v1366
        %v1368 = vadd.f32 %v1364, %v1367
        %vm1369 = vweird.f32 %v1306
        %vm1370 = vweird.f32 %v1364
        %vm1371 = vmor %vm1369, %vm1370
        %v1372 = vsel %vm1371, %v1364, %v1368
        %v1373 = vand.u32 2147483647, %v1306
        %vm1374 = vcmp.eq.f32.partialorder %v1373, 8.507059e+37
        %v1375 = vand.u32 %v1306, 2147483648
        %v1376 = vor.u32 1.1754944e-38, %v1375
        %v1377 = vsel %vm1374, %v1376, %v1372
        %v1378 = vrcp.pop %v1307
        %v1379 = vmul.f32 %v1307, %v1378
        %v1380 = vsub.f32 1.0, %v1379
        %v1381 = vmul.f32 %v1378, %v1380
        %v1382 = vadd.f32 %v1378, %v1381
        %vm1383 = vweird.f32 %v1307
        %vm1384 = vweird.f32 %v1378
        %vm1385 = vmor %vm1383, %vm1384
        %v1386 = vsel %vm1385, %v1378, %v1382
        %v1387 = vand.u32 2147483647, %v1307
        %vm1388 = vcmp.eq.f32.partialorder %v1387, 8.507059e+37
        %v1389 = vand.u32 %v1307, 2147483648
        %v1390 = vor.u32 1.1754944e-38, %v1389
        %v1391 = vsel %vm1388, %v1390, %v1386
        %v1392 = vmul.f32 %v1290, %v1321
        %v1393 = vmul.f32 %v1291, %v1335
        %v1394 = vmul.f32 %v1292, %v1349
        %v1395 = vmul.f32 %v1293, %v1363
        %v1396 = vmul.f32 %v1294, %v1377
        %v1397 = vmul.f32 %v1295, %v1391
        %vm1398 = vcmask 392192
        %v1399 = vsel %vm1398, %v1392, 0.0
        %v1400 = vsel %vm1398, %v1393, 0.0
        %v1401 = vadd.f32 %v1399, %v1400
        %v1402 = vsel %vm1398, %v1394, 0.0
        %v1403 = vadd.f32 %v1401, %v1402
        %v1404 = vsel %vm1398, %v1395, 0.0
        %v1405 = vadd.f32 %v1403, %v1404
        %v1406 = vsel %vm1398, %v1396, 0.0
        %v1407 = vadd.f32 %v1405, %v1406
        %v1408 = vsel %vm1398, %v1397, 0.0
        %v1409 = vadd.f32 %v1407, %v1408
        %1410 = vadd.xlane.f32.xlu0 %v1409
        %v1411 = vpop.xlane.xlu0 %1410
        %v1412 = vrot.slane %v1411, 4
        %v1413 = vadd.f32 %v1411, %v1412
        %v1414 = vrot.slane %v1413, 2
        %v1415 = vadd.f32 %v1413, %v1414
        %v1416 = vrot.slane %v1415, 1
        %v1417 = vadd.f32 %v1415, %v1416
        %s1418 = vtos %v1417
        %v1419 = vstv %s1418
        %v1420 = vmul.f32 %v1419, 0.00043402778
        %v1421 = vld [vmem:[%s12] sm:$0xff]
        %v1422 = vld [vmem:[%s12 + $0x8] sm:$0xff]
        %v1423 = vld [vmem:[%s12 + $0x10] sm:$0xff]
        %v1424 = vld [vmem:[%s12 + $0x18] sm:$0x1]
        %v1425 = vld [vmem:[%s13] sm:$0xff]
        %v1426 = vld [vmem:[%s13 + $0x8] sm:$0xff]
        %v1427 = vld [vmem:[%s13 + $0x10] sm:$0xff]
        %v1428 = vld [vmem:[%s13 + $0x18] sm:$0xff]
        %v1429 = vld [vmem:[%s13 + $0x20] sm:$0xff]
        %v1430 = vld [vmem:[%s13 + $0x28] sm:$0xff]
        %v1431 = vld [vmem:[%s13 + $0x30] sm:$0x3]
        %v1433 = vsel %vm741, %v1431, 0
        %1435 = vmatpush.msra.mxu0 0.0
        %1436 = vmatpush.msra.mxu0 0.0
        %1437 = vmatpush.msra.mxu0 0.0
        %1438 = vmatpush.msra.mxu0 0.0
        %1439 = vmatpush.msra.mxu0 0.0
        %1440 = vmatpush.msra.mxu0 0.0
        %1441 = vmatpush.msra.mxu0 0.0
        %1442 = vmatpush.msra.mxu0 0.0
        %1443 = vmatpush.msra.mxu0 0.0
        %1444 = vmatpush.msra.mxu0 %v1433
        %1445 = vmatpush.msra.mxu0 %v1430
        %1446 = vmatpush.msra.mxu0 %v1429
        %1447 = vmatpush.msra.mxu0 %v1428
        %1448 = vmatpush.msra.mxu0 %v1427
        %1449 = vmatpush.msra.mxu0 %v1426
        %1450 = vmatpush.msra.mxu0 %v1425
        %1451 = vmatmul.f32.gmra.mxu0 %v721
        %v1452 = vpop.f32.mrf.mxu0
        %v1453 = vadd.f32 0.0, %v1452
        %1454 = vmatmul.f32.gmra.mxu0 %v724
        %v1455 = vpop.f32.mrf.mxu0
        %v1456 = vadd.f32 0.0, %v1455
        %1457 = vmatmul.f32.gmra.mxu0 %v727
        %v1458 = vpop.f32.mrf.mxu0
        %v1459 = vadd.f32 0.0, %v1458
        %1460 = vmatmul.f32.gmra.mxu0 %v730
        %v1461 = vpop.f32.mrf.mxu0
        %v1462 = vadd.f32 0.0, %v1461
        %1463 = vmatmul.f32.gmra.mxu0 %v733
        %v1464 = vpop.f32.mrf.mxu0
        %v1465 = vadd.f32 0.0, %v1464
        %1466 = vmatmul.f32.gmra.mxu0 %v736
        %v1467 = vpop.f32.mrf.mxu0
        %v1468 = vadd.f32 0.0, %v1467
        %1469 = vmatmul.f32.gmra.mxu0 %v739
        %v1470 = vpop.f32.mrf.mxu0
        %v1471 = vadd.f32 0.0, %v1470
        %1472 = vdwg.mxu0
        %v1474 = vsel %vm719, %v1421, 0
        %v1477 = vsel %vm719, %v1422, 0
        %v1480 = vsel %vm719, %v1423, 0
        %v1483 = vsel %vm719, %v1424, 0
        %v1486 = vsel %vm741, %v1471, 0
        %1488 = vmatpush.msra.mxu0 0.0
        %1489 = vmatpush.msra.mxu0 0.0
        %1490 = vmatpush.msra.mxu0 0.0
        %1491 = vmatpush.msra.mxu0 0.0
        %1492 = vmatpush.msra.mxu0 0.0
        %1493 = vmatpush.msra.mxu0 0.0
        %1494 = vmatpush.msra.mxu0 0.0
        %1495 = vmatpush.msra.mxu0 0.0
        %1496 = vmatpush.msra.mxu0 0.0
        %1497 = vmatpush.msra.mxu0 %v1486
        %1498 = vmatpush.msra.mxu0 %v1468
        %1499 = vmatpush.msra.mxu0 %v1465
        %1500 = vmatpush.msra.mxu0 %v1462
        %1501 = vmatpush.msra.mxu0 %v1459
        %1502 = vmatpush.msra.mxu0 %v1456
        %1503 = vmatpush.msra.mxu0 %v1453
        %1504 = vmatmul.f32.gmra.mxu0 %v1474
        %v1505 = vpop.f32.mrf.mxu0
        %v1506 = vadd.f32 0.0, %v1505
        %1507 = vmatmul.f32.gmra.mxu0 %v1477
        %v1508 = vpop.f32.mrf.mxu0
        %v1509 = vadd.f32 0.0, %v1508
        %1510 = vmatmul.f32.gmra.mxu0 %v1480
        %v1511 = vpop.f32.mrf.mxu0
        %v1512 = vadd.f32 0.0, %v1511
        %1513 = vmatmul.f32.gmra.mxu0 %v1483
        %v1514 = vpop.f32.mrf.mxu0
        %v1515 = vadd.f32 0.0, %v1514
        %1516 = vdwg.mxu0
        %1517 = vmatpush.msra.mxu0 0.0
        %1518 = vmatpush.msra.mxu0 0.0
        %1519 = vmatpush.msra.mxu0 0.0
        %1520 = vmatpush.msra.mxu0 0.0
        %1521 = vmatpush.msra.mxu0 0.0
        %1522 = vmatpush.msra.mxu0 0.0
        %1523 = vmatpush.msra.mxu0 0.0
        %1524 = vmatpush.msra.mxu0 0.0
        %1525 = vmatpush.msra.mxu0 0.0
        %1526 = vmatpush.msra.mxu0 %v1433
        %1527 = vmatpush.msra.mxu0 %v1430
        %1528 = vmatpush.msra.mxu0 %v1429
        %1529 = vmatpush.msra.mxu0 %v1428
        %1530 = vmatpush.msra.mxu0 %v1427
        %1531 = vmatpush.msra.mxu0 %v1426
        %1532 = vmatpush.msra.mxu0 %v1425
        %1533 = vmatmul.f32.gmra.mxu0 %v840
        %v1534 = vpop.f32.mrf.mxu0
        %v1535 = vadd.f32 0.0, %v1534
        %1536 = vmatmul.f32.gmra.mxu0 %v843
        %v1537 = vpop.f32.mrf.mxu0
        %v1538 = vadd.f32 0.0, %v1537
        %1539 = vmatmul.f32.gmra.mxu0 %v846
        %v1540 = vpop.f32.mrf.mxu0
        %v1541 = vadd.f32 0.0, %v1540
        %1542 = vmatmul.f32.gmra.mxu0 %v849
        %v1543 = vpop.f32.mrf.mxu0
        %v1544 = vadd.f32 0.0, %v1543
        %1545 = vmatmul.f32.gmra.mxu0 %v852
        %v1546 = vpop.f32.mrf.mxu0
        %v1547 = vadd.f32 0.0, %v1546
        %1548 = vmatmul.f32.gmra.mxu0 %v855
        %v1549 = vpop.f32.mrf.mxu0
        %v1550 = vadd.f32 0.0, %v1549
        %1551 = vmatmul.f32.gmra.mxu0 %v858
        %v1552 = vpop.f32.mrf.mxu0
        %v1553 = vadd.f32 0.0, %v1552
        %1554 = vdwg.mxu0
        %v1556 = vsel %vm741, %v1553, 0
        %1558 = vmatpush.msra.mxu0 0.0
        %1559 = vmatpush.msra.mxu0 0.0
        %1560 = vmatpush.msra.mxu0 0.0
        %1561 = vmatpush.msra.mxu0 0.0
        %1562 = vmatpush.msra.mxu0 0.0
        %1563 = vmatpush.msra.mxu0 0.0
        %1564 = vmatpush.msra.mxu0 0.0
        %1565 = vmatpush.msra.mxu0 0.0
        %1566 = vmatpush.msra.mxu0 0.0
        %1567 = vmatpush.msra.mxu0 %v1556
        %1568 = vmatpush.msra.mxu0 %v1550
        %1569 = vmatpush.msra.mxu0 %v1547
        %1570 = vmatpush.msra.mxu0 %v1544
        %1571 = vmatpush.msra.mxu0 %v1541
        %1572 = vmatpush.msra.mxu0 %v1538
        %1573 = vmatpush.msra.mxu0 %v1535
        %1574 = vmatmul.f32.gmra.mxu0 %v1474
        %v1575 = vpop.f32.mrf.mxu0
        %v1576 = vadd.f32 0.0, %v1575
        %1577 = vmatmul.f32.gmra.mxu0 %v1477
        %v1578 = vpop.f32.mrf.mxu0
        %v1579 = vadd.f32 0.0, %v1578
        %1580 = vmatmul.f32.gmra.mxu0 %v1480
        %v1581 = vpop.f32.mrf.mxu0
        %v1582 = vadd.f32 0.0, %v1581
        %1583 = vmatmul.f32.gmra.mxu0 %v1483
        %v1584 = vpop.f32.mrf.mxu0
        %v1585 = vadd.f32 0.0, %v1584
        %1586 = vdwg.mxu0
        %v1587 = vld [vmem:[%s4] sm:$0xff]
        %v1588 = vld [vmem:[%s4 + $0x8] sm:$0xff]
        %v1589 = vld [vmem:[%s4 + $0x10] sm:$0x7f]
        %v1590 = vld [vmem:[%s5] sm:$0xff]
        %v1591 = vld [vmem:[%s5 + $0x8] sm:$0xff]
        %v1592 = vld [vmem:[%s5 + $0x10] sm:$0xff]
        %v1593 = vld [vmem:[%s5 + $0x18] sm:$0x1]
        %vm1594 = vcmask 203776
        %v1596 = vsel %vm1594, %v1506, 0
        %v1599 = vsel %vm1594, %v1509, 0
        %v1602 = vsel %vm1594, %v1512, 0
        %v1605 = vsel %vm1594, %v1515, 0
        %vm1607 = vcmask 1040384
        %v1609 = vsel %vm1607, %v1593, 0
        %1611 = vmatpush.msra.mxu0 0.0
        %1612 = vmatpush.msra.mxu0 0.0
        %1613 = vmatpush.msra.mxu0 0.0
        %1614 = vmatpush.msra.mxu0 0.0
        %1615 = vmatpush.msra.mxu0 0.0
        %1616 = vmatpush.msra.mxu0 0.0
        %1617 = vmatpush.msra.mxu0 0.0
        %1618 = vmatpush.msra.mxu0 0.0
        %1619 = vmatpush.msra.mxu0 0.0
        %1620 = vmatpush.msra.mxu0 0.0
        %1621 = vmatpush.msra.mxu0 0.0
        %1622 = vmatpush.msra.mxu0 0.0
        %1623 = vmatpush.msra.mxu0 %v1609
        %1624 = vmatpush.msra.mxu0 %v1592
        %1625 = vmatpush.msra.mxu0 %v1591
        %1626 = vmatpush.msra.mxu0 %v1590
        %1627 = vmatmul.f32.gmra.mxu0 %v1596
        %v1628 = vpop.f32.mrf.mxu0
        %v1629 = vadd.f32 0.0, %v1628
        %1630 = vmatmul.f32.gmra.mxu0 %v1599
        %v1631 = vpop.f32.mrf.mxu0
        %v1632 = vadd.f32 0.0, %v1631
        %1633 = vmatmul.f32.gmra.mxu0 %v1602
        %v1634 = vpop.f32.mrf.mxu0
        %v1635 = vadd.f32 0.0, %v1634
        %1636 = vmatmul.f32.gmra.mxu0 %v1605
        %v1637 = vpop.f32.mrf.mxu0
        %v1638 = vadd.f32 0.0, %v1637
        %1639 = vdwg.mxu0
        %v1641 = vsel %vm1594, %v1587, 0
        %v1644 = vsel %vm1594, %v1588, 0
        %v1647 = vsel %vm1594, %v1589, 0
        %v1650 = vsel %vm1607, %v1638, 0
        %1652 = vmatpush.msra.mxu0 0.0
        %1653 = vmatpush.msra.mxu0 0.0
        %1654 = vmatpush.msra.mxu0 0.0
        %1655 = vmatpush.msra.mxu0 0.0
        %1656 = vmatpush.msra.mxu0 0.0
        %1657 = vmatpush.msra.mxu0 0.0
        %1658 = vmatpush.msra.mxu0 0.0
        %1659 = vmatpush.msra.mxu0 0.0
        %1660 = vmatpush.msra.mxu0 0.0
        %1661 = vmatpush.msra.mxu0 0.0
        %1662 = vmatpush.msra.mxu0 0.0
        %1663 = vmatpush.msra.mxu0 0.0
        %1664 = vmatpush.msra.mxu0 %v1650
        %1665 = vmatpush.msra.mxu0 %v1635
        %1666 = vmatpush.msra.mxu0 %v1632
        %1667 = vmatpush.msra.mxu0 %v1629
        %1668 = vmatmul.f32.gmra.mxu0 %v1641
        %v1669 = vpop.f32.mrf.mxu0
        %v1670 = vadd.f32 0.0, %v1669
        %1671 = vmatmul.f32.gmra.mxu0 %v1644
        %v1672 = vpop.f32.mrf.mxu0
        %v1673 = vadd.f32 0.0, %v1672
        %1674 = vmatmul.f32.gmra.mxu0 %v1647
        %v1675 = vpop.f32.mrf.mxu0
        %v1676 = vadd.f32 0.0, %v1675
        %1677 = vdwg.mxu0
        %v1679 = vsel %vm1594, %v1576, 0
        %v1682 = vsel %vm1594, %v1579, 0
        %v1685 = vsel %vm1594, %v1582, 0
        %v1688 = vsel %vm1594, %v1585, 0
        %1690 = vmatpush.msra.mxu0 0.0
        %1691 = vmatpush.msra.mxu0 0.0
        %1692 = vmatpush.msra.mxu0 0.0
        %1693 = vmatpush.msra.mxu0 0.0
        %1694 = vmatpush.msra.mxu0 0.0
        %1695 = vmatpush.msra.mxu0 0.0
        %1696 = vmatpush.msra.mxu0 0.0
        %1697 = vmatpush.msra.mxu0 0.0
        %1698 = vmatpush.msra.mxu0 0.0
        %1699 = vmatpush.msra.mxu0 0.0
        %1700 = vmatpush.msra.mxu0 0.0
        %1701 = vmatpush.msra.mxu0 0.0
        %1702 = vmatpush.msra.mxu0 %v1609
        %1703 = vmatpush.msra.mxu0 %v1592
        %1704 = vmatpush.msra.mxu0 %v1591
        %1705 = vmatpush.msra.mxu0 %v1590
        %1706 = vmatmul.f32.gmra.mxu0 %v1679
        %v1707 = vpop.f32.mrf.mxu0
        %v1708 = vadd.f32 0.0, %v1707
        %1709 = vmatmul.f32.gmra.mxu0 %v1682
        %v1710 = vpop.f32.mrf.mxu0
        %v1711 = vadd.f32 0.0, %v1710
        %1712 = vmatmul.f32.gmra.mxu0 %v1685
        %v1713 = vpop.f32.mrf.mxu0
        %v1714 = vadd.f32 0.0, %v1713
        %1715 = vmatmul.f32.gmra.mxu0 %v1688
        %v1716 = vpop.f32.mrf.mxu0
        %v1717 = vadd.f32 0.0, %v1716
        %1718 = vdwg.mxu0
        %v1720 = vsel %vm1607, %v1717, 0
        %1722 = vmatpush.msra.mxu0 0.0
        %1723 = vmatpush.msra.mxu0 0.0
        %1724 = vmatpush.msra.mxu0 0.0
        %1725 = vmatpush.msra.mxu0 0.0
        %1726 = vmatpush.msra.mxu0 0.0
        %1727 = vmatpush.msra.mxu0 0.0
        %1728 = vmatpush.msra.mxu0 0.0
        %1729 = vmatpush.msra.mxu0 0.0
        %1730 = vmatpush.msra.mxu0 0.0
        %1731 = vmatpush.msra.mxu0 0.0
        %1732 = vmatpush.msra.mxu0 0.0
        %1733 = vmatpush.msra.mxu0 0.0
        %1734 = vmatpush.msra.mxu0 %v1720
        %1735 = vmatpush.msra.mxu0 %v1714
        %1736 = vmatpush.msra.mxu0 %v1711
        %1737 = vmatpush.msra.mxu0 %v1708
        %1738 = vmatmul.f32.gmra.mxu0 %v1641
        %v1739 = vpop.f32.mrf.mxu0
        %v1740 = vadd.f32 0.0, %v1739
        %1741 = vmatmul.f32.gmra.mxu0 %v1644
        %v1742 = vpop.f32.mrf.mxu0
        %v1743 = vadd.f32 0.0, %v1742
        %1744 = vmatmul.f32.gmra.mxu0 %v1647
        %v1745 = vpop.f32.mrf.mxu0
        %v1746 = vadd.f32 0.0, %v1745
        %1747 = vdwg.mxu0
        %v1748 = vmul.f32 %v1506, %v1506
        %v1749 = vmul.f32 %v1509, %v1509
        %v1750 = vmul.f32 %v1512, %v1512
        %v1751 = vmul.f32 %v1515, %v1515
        %v1753 = vsel %vm1594, %v1748, 0
        %v1756 = vsel %vm1594, %v1749, 0
        %v1759 = vsel %vm1594, %v1750, 0
        %v1762 = vsel %vm1594, %v1751, 0
        %1764 = vmatpush.msra.mxu0 0.0
        %1765 = vmatpush.msra.mxu0 0.0
        %1766 = vmatpush.msra.mxu0 0.0
        %1767 = vmatpush.msra.mxu0 0.0
        %1768 = vmatpush.msra.mxu0 0.0
        %1769 = vmatpush.msra.mxu0 0.0
        %1770 = vmatpush.msra.mxu0 0.0
        %1771 = vmatpush.msra.mxu0 0.0
        %1772 = vmatpush.msra.mxu0 0.0
        %1773 = vmatpush.msra.mxu0 0.0
        %1774 = vmatpush.msra.mxu0 0.0
        %1775 = vmatpush.msra.mxu0 0.0
        %1776 = vmatpush.msra.mxu0 %v1609
        %1777 = vmatpush.msra.mxu0 %v1592
        %1778 = vmatpush.msra.mxu0 %v1591
        %1779 = vmatpush.msra.mxu0 %v1590
        %1780 = vmatmul.f32.gmra.mxu0 %v1753
        %v1781 = vpop.f32.mrf.mxu0
        %v1782 = vadd.f32 0.0, %v1781
        %1783 = vmatmul.f32.gmra.mxu0 %v1756
        %v1784 = vpop.f32.mrf.mxu0
        %v1785 = vadd.f32 0.0, %v1784
        %1786 = vmatmul.f32.gmra.mxu0 %v1759
        %v1787 = vpop.f32.mrf.mxu0
        %v1788 = vadd.f32 0.0, %v1787
        %1789 = vmatmul.f32.gmra.mxu0 %v1762
        %v1790 = vpop.f32.mrf.mxu0
        %v1791 = vadd.f32 0.0, %v1790
        %1792 = vdwg.mxu0
        %v1794 = vsel %vm1607, %v1791, 0
        %1796 = vmatpush.msra.mxu0 0.0
        %1797 = vmatpush.msra.mxu0 0.0
        %1798 = vmatpush.msra.mxu0 0.0
        %1799 = vmatpush.msra.mxu0 0.0
        %1800 = vmatpush.msra.mxu0 0.0
        %1801 = vmatpush.msra.mxu0 0.0
        %1802 = vmatpush.msra.mxu0 0.0
        %1803 = vmatpush.msra.mxu0 0.0
        %1804 = vmatpush.msra.mxu0 0.0
        %1805 = vmatpush.msra.mxu0 0.0
        %1806 = vmatpush.msra.mxu0 0.0
        %1807 = vmatpush.msra.mxu0 0.0
        %1808 = vmatpush.msra.mxu0 %v1794
        %1809 = vmatpush.msra.mxu0 %v1788
        %1810 = vmatpush.msra.mxu0 %v1785
        %1811 = vmatpush.msra.mxu0 %v1782
        %1812 = vmatmul.f32.gmra.mxu0 %v1641
        %v1813 = vpop.f32.mrf.mxu0
        %v1814 = vadd.f32 0.0, %v1813
        %1815 = vmatmul.f32.gmra.mxu0 %v1644
        %v1816 = vpop.f32.mrf.mxu0
        %v1817 = vadd.f32 0.0, %v1816
        %1818 = vmatmul.f32.gmra.mxu0 %v1647
        %v1819 = vpop.f32.mrf.mxu0
        %v1820 = vadd.f32 0.0, %v1819
        %1821 = vdwg.mxu0
        %v1822 = vmul.f32 %v1576, %v1576
        %v1823 = vmul.f32 %v1579, %v1579
        %v1824 = vmul.f32 %v1582, %v1582
        %v1825 = vmul.f32 %v1585, %v1585
        %v1827 = vsel %vm1594, %v1822, 0
        %v1830 = vsel %vm1594, %v1823, 0
        %v1833 = vsel %vm1594, %v1824, 0
        %v1836 = vsel %vm1594, %v1825, 0
        %1838 = vmatpush.msra.mxu0 0.0
        %1839 = vmatpush.msra.mxu0 0.0
        %1840 = vmatpush.msra.mxu0 0.0
        %1841 = vmatpush.msra.mxu0 0.0
        %1842 = vmatpush.msra.mxu0 0.0
        %1843 = vmatpush.msra.mxu0 0.0
        %1844 = vmatpush.msra.mxu0 0.0
        %1845 = vmatpush.msra.mxu0 0.0
        %1846 = vmatpush.msra.mxu0 0.0
        %1847 = vmatpush.msra.mxu0 0.0
        %1848 = vmatpush.msra.mxu0 0.0
        %1849 = vmatpush.msra.mxu0 0.0
        %1850 = vmatpush.msra.mxu0 %v1609
        %1851 = vmatpush.msra.mxu0 %v1592
        %1852 = vmatpush.msra.mxu0 %v1591
        %1853 = vmatpush.msra.mxu0 %v1590
        %1854 = vmatmul.f32.gmra.mxu0 %v1827
        %v1855 = vpop.f32.mrf.mxu0
        %v1856 = vadd.f32 0.0, %v1855
        %1857 = vmatmul.f32.gmra.mxu0 %v1830
        %v1858 = vpop.f32.mrf.mxu0
        %v1859 = vadd.f32 0.0, %v1858
        %1860 = vmatmul.f32.gmra.mxu0 %v1833
        %v1861 = vpop.f32.mrf.mxu0
        %v1862 = vadd.f32 0.0, %v1861
        %1863 = vmatmul.f32.gmra.mxu0 %v1836
        %v1864 = vpop.f32.mrf.mxu0
        %v1865 = vadd.f32 0.0, %v1864
        %1866 = vdwg.mxu0
        %v1868 = vsel %vm1607, %v1865, 0
        %1870 = vmatpush.msra.mxu0 0.0
        %1871 = vmatpush.msra.mxu0 0.0
        %1872 = vmatpush.msra.mxu0 0.0
        %1873 = vmatpush.msra.mxu0 0.0
        %1874 = vmatpush.msra.mxu0 0.0
        %1875 = vmatpush.msra.mxu0 0.0
        %1876 = vmatpush.msra.mxu0 0.0
        %1877 = vmatpush.msra.mxu0 0.0
        %1878 = vmatpush.msra.mxu0 0.0
        %1879 = vmatpush.msra.mxu0 0.0
        %1880 = vmatpush.msra.mxu0 0.0
        %1881 = vmatpush.msra.mxu0 0.0
        %1882 = vmatpush.msra.mxu0 %v1868
        %1883 = vmatpush.msra.mxu0 %v1862
        %1884 = vmatpush.msra.mxu0 %v1859
        %1885 = vmatpush.msra.mxu0 %v1856
        %1886 = vmatmul.f32.gmra.mxu0 %v1641
        %v1887 = vpop.f32.mrf.mxu0
        %v1888 = vadd.f32 0.0, %v1887
        %1889 = vmatmul.f32.gmra.mxu0 %v1644
        %v1890 = vpop.f32.mrf.mxu0
        %v1891 = vadd.f32 0.0, %v1890
        %1892 = vmatmul.f32.gmra.mxu0 %v1647
        %v1893 = vpop.f32.mrf.mxu0
        %v1894 = vadd.f32 0.0, %v1893
        %1895 = vdwg.mxu0
        %v1896 = vmul.f32 %v1506, %v1576
        %v1897 = vmul.f32 %v1509, %v1579
        %v1898 = vmul.f32 %v1512, %v1582
        %v1899 = vmul.f32 %v1515, %v1585
        %v1901 = vsel %vm1594, %v1896, 0
        %v1904 = vsel %vm1594, %v1897, 0
        %v1907 = vsel %vm1594, %v1898, 0
        %v1910 = vsel %vm1594, %v1899, 0
        %1912 = vmatpush.msra.mxu0 0.0
        %1913 = vmatpush.msra.mxu0 0.0
        %1914 = vmatpush.msra.mxu0 0.0
        %1915 = vmatpush.msra.mxu0 0.0
        %1916 = vmatpush.msra.mxu0 0.0
        %1917 = vmatpush.msra.mxu0 0.0
        %1918 = vmatpush.msra.mxu0 0.0
        %1919 = vmatpush.msra.mxu0 0.0
        %1920 = vmatpush.msra.mxu0 0.0
        %1921 = vmatpush.msra.mxu0 0.0
        %1922 = vmatpush.msra.mxu0 0.0
        %1923 = vmatpush.msra.mxu0 0.0
        %1924 = vmatpush.msra.mxu0 %v1609
        %1925 = vmatpush.msra.mxu0 %v1592
        %1926 = vmatpush.msra.mxu0 %v1591
        %1927 = vmatpush.msra.mxu0 %v1590
        %1928 = vmatmul.f32.gmra.mxu0 %v1901
        %v1929 = vpop.f32.mrf.mxu0
        %v1930 = vadd.f32 0.0, %v1929
        %1931 = vmatmul.f32.gmra.mxu0 %v1904
        %v1932 = vpop.f32.mrf.mxu0
        %v1933 = vadd.f32 0.0, %v1932
        %1934 = vmatmul.f32.gmra.mxu0 %v1907
        %v1935 = vpop.f32.mrf.mxu0
        %v1936 = vadd.f32 0.0, %v1935
        %1937 = vmatmul.f32.gmra.mxu0 %v1910
        %v1938 = vpop.f32.mrf.mxu0
        %v1939 = vadd.f32 0.0, %v1938
        %1940 = vdwg.mxu0
        %v1942 = vsel %vm1607, %v1939, 0
        %1944 = vmatpush.msra.mxu0 0.0
        %1945 = vmatpush.msra.mxu0 0.0
        %1946 = vmatpush.msra.mxu0 0.0
        %1947 = vmatpush.msra.mxu0 0.0
        %1948 = vmatpush.msra.mxu0 0.0
        %1949 = vmatpush.msra.mxu0 0.0
        %1950 = vmatpush.msra.mxu0 0.0
        %1951 = vmatpush.msra.mxu0 0.0
        %1952 = vmatpush.msra.mxu0 0.0
        %1953 = vmatpush.msra.mxu0 0.0
        %1954 = vmatpush.msra.mxu0 0.0
        %1955 = vmatpush.msra.mxu0 0.0
        %1956 = vmatpush.msra.mxu0 %v1942
        %1957 = vmatpush.msra.mxu0 %v1936
        %1958 = vmatpush.msra.mxu0 %v1933
        %1959 = vmatpush.msra.mxu0 %v1930
        %1960 = vmatmul.f32.gmra.mxu0 %v1641
        %v1961 = vpop.f32.mrf.mxu0
        %v1962 = vadd.f32 0.0, %v1961
        %1963 = vmatmul.f32.gmra.mxu0 %v1644
        %v1964 = vpop.f32.mrf.mxu0
        %v1965 = vadd.f32 0.0, %v1964
        %1966 = vmatmul.f32.gmra.mxu0 %v1647
        %v1967 = vpop.f32.mrf.mxu0
        %v1968 = vadd.f32 0.0, %v1967
        %1969 = vdwg.mxu0
        %v1970 = vmul.f32 %v1670, %v1670
        %v1971 = vmul.f32 %v1673, %v1673
        %v1972 = vmul.f32 %v1676, %v1676
        %v1973 = vmul.f32 %v1740, %v1740
        %v1974 = vmul.f32 %v1743, %v1743
        %v1975 = vmul.f32 %v1746, %v1746
        %v1976 = vmul.f32 %v1670, %v1740
        %v1977 = vmul.f32 %v1673, %v1743
        %v1978 = vmul.f32 %v1676, %v1746
        %v1979 = vsub.f32 %v1814, %v1970
        %v1980 = vsub.f32 %v1817, %v1971
        %v1981 = vsub.f32 %v1820, %v1972
        %v1982 = vsub.f32 %v1888, %v1973
        %v1983 = vsub.f32 %v1891, %v1974
        %v1984 = vsub.f32 %v1894, %v1975
        %v1985 = vsub.f32 %v1962, %v1976
        %v1986 = vsub.f32 %v1965, %v1977
        %v1987 = vsub.f32 %v1968, %v1978
        %v1988 = vmul.f32 %v1985, 2.0
        %v1989 = vmul.f32 %v1986, 2.0
        %v1990 = vmul.f32 %v1987, 2.0
        %v1991 = vadd.f32 %v1988, 0.0009
        %v1992 = vadd.f32 %v1989, 0.0009
        %v1993 = vadd.f32 %v1990, 0.0009
        %v1994 = vadd.f32 %v1979, %v1982
        %v1995 = vadd.f32 %v1980, %v1983
        %v1996 = vadd.f32 %v1981, %v1984
        %v1997 = vadd.f32 %v1994, 0.0009
        %v1998 = vadd.f32 %v1995, 0.0009
        %v1999 = vadd.f32 %v1996, 0.0009
        %v2000 = vrcp.pop %v1997
        %v2001 = vmul.f32 %v1997, %v2000
        %v2002 = vsub.f32 1.0, %v2001
        %v2003 = vmul.f32 %v2000, %v2002
        %v2004 = vadd.f32 %v2000, %v2003
        %vm2005 = vweird.f32 %v1997
        %vm2006 = vweird.f32 %v2000
        %vm2007 = vmor %vm2005, %vm2006
        %v2008 = vsel %vm2007, %v2000, %v2004
        %v2009 = vand.u32 2147483647, %v1997
        %vm2010 = vcmp.eq.f32.partialorder %v2009, 8.507059e+37
        %v2011 = vand.u32 %v1997, 2147483648
        %v2012 = vor.u32 1.1754944e-38, %v2011
        %v2013 = vsel %vm2010, %v2012, %v2008
        %v2014 = vrcp.pop %v1998
        %v2015 = vmul.f32 %v1998, %v2014
        %v2016 = vsub.f32 1.0, %v2015
        %v2017 = vmul.f32 %v2014, %v2016
        %v2018 = vadd.f32 %v2014, %v2017
        %vm2019 = vweird.f32 %v1998
        %vm2020 = vweird.f32 %v2014
        %vm2021 = vmor %vm2019, %vm2020
        %v2022 = vsel %vm2021, %v2014, %v2018
        %v2023 = vand.u32 2147483647, %v1998
        %vm2024 = vcmp.eq.f32.partialorder %v2023, 8.507059e+37
        %v2025 = vand.u32 %v1998, 2147483648
        %v2026 = vor.u32 1.1754944e-38, %v2025
        %v2027 = vsel %vm2024, %v2026, %v2022
        %v2028 = vrcp.pop %v1999
        %v2029 = vmul.f32 %v1999, %v2028
        %v2030 = vsub.f32 1.0, %v2029
        %v2031 = vmul.f32 %v2028, %v2030
        %v2032 = vadd.f32 %v2028, %v2031
        %vm2033 = vweird.f32 %v1999
        %vm2034 = vweird.f32 %v2028
        %vm2035 = vmor %vm2033, %vm2034
        %v2036 = vsel %vm2035, %v2028, %v2032
        %v2037 = vand.u32 2147483647, %v1999
        %vm2038 = vcmp.eq.f32.partialorder %v2037, 8.507059e+37
        %v2039 = vand.u32 %v1999, 2147483648
        %v2040 = vor.u32 1.1754944e-38, %v2039
        %v2041 = vsel %vm2038, %v2040, %v2036
        %v2042 = vmul.f32 %v1991, %v2013
        %v2043 = vmul.f32 %v1992, %v2027
        %v2044 = vmul.f32 %v1993, %v2041
        %vm2045 = vcmask 187392
        %v2046 = vsel %vm2045, %v2042, 0.0
        %v2047 = vsel %vm2045, %v2043, 0.0
        %v2048 = vadd.f32 %v2046, %v2047
        %vm2049 = vcmask 186368
        %v2050 = vsel %vm2049, %v2044, 0.0
        %v2051 = vadd.f32 %v2048, %v2050
        %2052 = vadd.xlane.f32.xlu0 %v2051
        %v2053 = vpop.xlane.xlu0 %2052
        %v2054 = vrot.slane %v2053, 4
        %v2055 = vadd.f32 %v2053, %v2054
        %v2056 = vrot.slane %v2055, 2
        %v2057 = vadd.f32 %v2055, %v2056
        %v2058 = vrot.slane %v2057, 1
        %v2059 = vadd.f32 %v2057, %v2058
        %s2060 = vtos %v2059
        %v2061 = vstv %s2060
        %v2062 = vmul.f32 %v2061, 0.0018903592
        %v2063 = vld [vmem:[%s14] sm:$0xff]
        %v2064 = vld [vmem:[%s14 + $0x8] sm:$0x1f]
        %v2065 = vld [vmem:[%s15] sm:$0xff]
        %v2066 = vld [vmem:[%s15 + $0x8] sm:$0xff]
        %v2067 = vld [vmem:[%s15 + $0x10] sm:$0xff]
        %v2068 = vld [vmem:[%s15 + $0x18] sm:$0x1]
        %v2070 = vsel %vm1607, %v2068, 0
        %2072 = vmatpush.msra.mxu0 0.0
        %2073 = vmatpush.msra.mxu0 0.0
        %2074 = vmatpush.msra.mxu0 0.0
        %2075 = vmatpush.msra.mxu0 0.0
        %2076 = vmatpush.msra.mxu0 0.0
        %2077 = vmatpush.msra.mxu0 0.0
        %2078 = vmatpush.msra.mxu0 0.0
        %2079 = vmatpush.msra.mxu0 0.0
        %2080 = vmatpush.msra.mxu0 0.0
        %2081 = vmatpush.msra.mxu0 0.0
        %2082 = vmatpush.msra.mxu0 0.0
        %2083 = vmatpush.msra.mxu0 0.0
        %2084 = vmatpush.msra.mxu0 %v2070
        %2085 = vmatpush.msra.mxu0 %v2067
        %2086 = vmatpush.msra.mxu0 %v2066
        %2087 = vmatpush.msra.mxu0 %v2065
        %2088 = vmatmul.f32.gmra.mxu0 %v1596
        %v2089 = vpop.f32.mrf.mxu0
        %v2090 = vadd.f32 0.0, %v2089
        %2091 = vmatmul.f32.gmra.mxu0 %v1599
        %v2092 = vpop.f32.mrf.mxu0
        %v2093 = vadd.f32 0.0, %v2092
        %2094 = vmatmul.f32.gmra.mxu0 %v1602
        %v2095 = vpop.f32.mrf.mxu0
        %v2096 = vadd.f32 0.0, %v2095
        %2097 = vmatmul.f32.gmra.mxu0 %v1605
        %v2098 = vpop.f32.mrf.mxu0
        %v2099 = vadd.f32 0.0, %v2098
        %2100 = vdwg.mxu0
        %v2102 = vsel %vm1594, %v2063, 0
        %v2105 = vsel %vm1594, %v2064, 0
        %v2108 = vsel %vm1607, %v2099, 0
        %2110 = vmatpush.msra.mxu0 0.0
        %2111 = vmatpush.msra.mxu0 0.0
        %2112 = vmatpush.msra.mxu0 0.0
        %2113 = vmatpush.msra.mxu0 0.0
        %2114 = vmatpush.msra.mxu0 0.0
        %2115 = vmatpush.msra.mxu0 0.0
        %2116 = vmatpush.msra.mxu0 0.0
        %2117 = vmatpush.msra.mxu0 0.0
        %2118 = vmatpush.msra.mxu0 0.0
        %2119 = vmatpush.msra.mxu0 0.0
        %2120 = vmatpush.msra.mxu0 0.0
        %2121 = vmatpush.msra.mxu0 0.0
        %2122 = vmatpush.msra.mxu0 %v2108
        %2123 = vmatpush.msra.mxu0 %v2096
        %2124 = vmatpush.msra.mxu0 %v2093
        %2125 = vmatpush.msra.mxu0 %v2090
        %2126 = vmatmul.f32.gmra.mxu0 %v2102
        %v2127 = vpop.f32.mrf.mxu0
        %v2128 = vadd.f32 0.0, %v2127
        %2129 = vmatmul.f32.gmra.mxu0 %v2105
        %v2130 = vpop.f32.mrf.mxu0
        %v2131 = vadd.f32 0.0, %v2130
        %2132 = vdwg.mxu0
        %2133 = vmatpush.msra.mxu0 0.0
        %2134 = vmatpush.msra.mxu0 0.0
        %2135 = vmatpush.msra.mxu0 0.0
        %2136 = vmatpush.msra.mxu0 0.0
        %2137 = vmatpush.msra.mxu0 0.0
        %2138 = vmatpush.msra.mxu0 0.0
        %2139 = vmatpush.msra.mxu0 0.0
        %2140 = vmatpush.msra.mxu0 0.0
        %2141 = vmatpush.msra.mxu0 0.0
        %2142 = vmatpush.msra.mxu0 0.0
        %2143 = vmatpush.msra.mxu0 0.0
        %2144 = vmatpush.msra.mxu0 0.0
        %2145 = vmatpush.msra.mxu0 %v2070
        %2146 = vmatpush.msra.mxu0 %v2067
        %2147 = vmatpush.msra.mxu0 %v2066
        %2148 = vmatpush.msra.mxu0 %v2065
        %2149 = vmatmul.f32.gmra.mxu0 %v1679
        %v2150 = vpop.f32.mrf.mxu0
        %v2151 = vadd.f32 0.0, %v2150
        %2152 = vmatmul.f32.gmra.mxu0 %v1682
        %v2153 = vpop.f32.mrf.mxu0
        %v2154 = vadd.f32 0.0, %v2153
        %2155 = vmatmul.f32.gmra.mxu0 %v1685
        %v2156 = vpop.f32.mrf.mxu0
        %v2157 = vadd.f32 0.0, %v2156
        %2158 = vmatmul.f32.gmra.mxu0 %v1688
        %v2159 = vpop.f32.mrf.mxu0
        %v2160 = vadd.f32 0.0, %v2159
        %2161 = vdwg.mxu0
        %v2163 = vsel %vm1607, %v2160, 0
        %2165 = vmatpush.msra.mxu0 0.0
        %2166 = vmatpush.msra.mxu0 0.0
        %2167 = vmatpush.msra.mxu0 0.0
        %2168 = vmatpush.msra.mxu0 0.0
        %2169 = vmatpush.msra.mxu0 0.0
        %2170 = vmatpush.msra.mxu0 0.0
        %2171 = vmatpush.msra.mxu0 0.0
        %2172 = vmatpush.msra.mxu0 0.0
        %2173 = vmatpush.msra.mxu0 0.0
        %2174 = vmatpush.msra.mxu0 0.0
        %2175 = vmatpush.msra.mxu0 0.0
        %2176 = vmatpush.msra.mxu0 0.0
        %2177 = vmatpush.msra.mxu0 %v2163
        %2178 = vmatpush.msra.mxu0 %v2157
        %2179 = vmatpush.msra.mxu0 %v2154
        %2180 = vmatpush.msra.mxu0 %v2151
        %2181 = vmatmul.f32.gmra.mxu0 %v2102
        %v2182 = vpop.f32.mrf.mxu0
        %v2183 = vadd.f32 0.0, %v2182
        %2184 = vmatmul.f32.gmra.mxu0 %v2105
        %v2185 = vpop.f32.mrf.mxu0
        %v2186 = vadd.f32 0.0, %v2185
        %2187 = vdwg.mxu0
        %v2188 = vld [vmem:[%s6] sm:$0xff]
        %v2189 = vld [vmem:[%s6 + $0x8] sm:$0x7]
        %v2190 = vld [vmem:[%s7] sm:$0xff]
        %v2191 = vld [vmem:[%s7 + $0x8] sm:$0x1f]
        %vm2192 = vcmask 105472
        %v2194 = vsel %vm2192, %v2128, 0
        %v2197 = vsel %vm2192, %v2131, 0
        %vm2199 = vcmask 1044480
        %v2201 = vsel %vm2199, %v2191, 0
        %2203 = vmatpush.msra.mxu0 0.0
        %2204 = vmatpush.msra.mxu0 0.0
        %2205 = vmatpush.msra.mxu0 0.0
        %2206 = vmatpush.msra.mxu0 0.0
        %2207 = vmatpush.msra.mxu0 0.0
        %2208 = vmatpush.msra.mxu0 0.0
        %2209 = vmatpush.msra.mxu0 0.0
        %2210 = vmatpush.msra.mxu0 0.0
        %2211 = vmatpush.msra.mxu0 0.0
        %2212 = vmatpush.msra.mxu0 0.0
        %2213 = vmatpush.msra.mxu0 0.0
        %2214 = vmatpush.msra.mxu0 0.0
        %2215 = vmatpush.msra.mxu0 0.0
        %2216 = vmatpush.msra.mxu0 0.0
        %2217 = vmatpush.msra.mxu0 %v2201
        %2218 = vmatpush.msra.mxu0 %v2190
        %2219 = vmatmul.f32.gmra.mxu0 %v2194
        %v2220 = vpop.f32.mrf.mxu0
        %v2221 = vadd.f32 0.0, %v2220
        %2222 = vmatmul.f32.gmra.mxu0 %v2197
        %v2223 = vpop.f32.mrf.mxu0
        %v2224 = vadd.f32 0.0, %v2223
        %2225 = vdwg.mxu0
        %v2227 = vsel %vm2192, %v2188, 0
        %v2230 = vsel %vm2192, %v2189, 0
        %v2233 = vsel %vm2199, %v2224, 0
        %2235 = vmatpush.msra.mxu0 0.0
        %2236 = vmatpush.msra.mxu0 0.0
        %2237 = vmatpush.msra.mxu0 0.0
        %2238 = vmatpush.msra.mxu0 0.0
        %2239 = vmatpush.msra.mxu0 0.0
        %2240 = vmatpush.msra.mxu0 0.0
        %2241 = vmatpush.msra.mxu0 0.0
        %2242 = vmatpush.msra.mxu0 0.0
        %2243 = vmatpush.msra.mxu0 0.0
        %2244 = vmatpush.msra.mxu0 0.0
        %2245 = vmatpush.msra.mxu0 0.0
        %2246 = vmatpush.msra.mxu0 0.0
        %2247 = vmatpush.msra.mxu0 0.0
        %2248 = vmatpush.msra.mxu0 0.0
        %2249 = vmatpush.msra.mxu0 %v2233
        %2250 = vmatpush.msra.mxu0 %v2221
        %2251 = vmatmul.f32.gmra.mxu0 %v2227
        %v2252 = vpop.f32.mrf.mxu0
        %v2253 = vadd.f32 0.0, %v2252
        %2254 = vmatmul.f32.gmra.mxu0 %v2230
        %v2255 = vpop.f32.mrf.mxu0
        %v2256 = vadd.f32 0.0, %v2255
        %2257 = vdwg.mxu0
        %v2259 = vsel %vm2192, %v2183, 0
        %v2262 = vsel %vm2192, %v2186, 0
        %2264 = vmatpush.msra.mxu0 0.0
        %2265 = vmatpush.msra.mxu0 0.0
        %2266 = vmatpush.msra.mxu0 0.0
        %2267 = vmatpush.msra.mxu0 0.0
        %2268 = vmatpush.msra.mxu0 0.0
        %2269 = vmatpush.msra.mxu0 0.0
        %2270 = vmatpush.msra.mxu0 0.0
        %2271 = vmatpush.msra.mxu0 0.0
        %2272 = vmatpush.msra.mxu0 0.0
        %2273 = vmatpush.msra.mxu0 0.0
        %2274 = vmatpush.msra.mxu0 0.0
        %2275 = vmatpush.msra.mxu0 0.0
        %2276 = vmatpush.msra.mxu0 0.0
        %2277 = vmatpush.msra.mxu0 0.0
        %2278 = vmatpush.msra.mxu0 %v2201
        %2279 = vmatpush.msra.mxu0 %v2190
        %2280 = vmatmul.f32.gmra.mxu0 %v2259
        %v2281 = vpop.f32.mrf.mxu0
        %v2282 = vadd.f32 0.0, %v2281
        %2283 = vmatmul.f32.gmra.mxu0 %v2262
        %v2284 = vpop.f32.mrf.mxu0
        %v2285 = vadd.f32 0.0, %v2284
        %2286 = vdwg.mxu0
        %v2288 = vsel %vm2199, %v2285, 0
        %2290 = vmatpush.msra.mxu0 0.0
        %2291 = vmatpush.msra.mxu0 0.0
        %2292 = vmatpush.msra.mxu0 0.0
        %2293 = vmatpush.msra.mxu0 0.0
        %2294 = vmatpush.msra.mxu0 0.0
        %2295 = vmatpush.msra.mxu0 0.0
        %2296 = vmatpush.msra.mxu0 0.0
        %2297 = vmatpush.msra.mxu0 0.0
        %2298 = vmatpush.msra.mxu0 0.0
        %2299 = vmatpush.msra.mxu0 0.0
        %2300 = vmatpush.msra.mxu0 0.0
        %2301 = vmatpush.msra.mxu0 0.0
        %2302 = vmatpush.msra.mxu0 0.0
        %2303 = vmatpush.msra.mxu0 0.0
        %2304 = vmatpush.msra.mxu0 %v2288
        %2305 = vmatpush.msra.mxu0 %v2282
        %2306 = vmatmul.f32.gmra.mxu0 %v2227
        %v2307 = vpop.f32.mrf.mxu0
        %v2308 = vadd.f32 0.0, %v2307
        %2309 = vmatmul.f32.gmra.mxu0 %v2230
        %v2310 = vpop.f32.mrf.mxu0
        %v2311 = vadd.f32 0.0, %v2310
        %2312 = vdwg.mxu0
        %v2313 = vmul.f32 %v2128, %v2128
        %v2314 = vmul.f32 %v2131, %v2131
        %v2316 = vsel %vm2192, %v2313, 0
        %v2319 = vsel %vm2192, %v2314, 0
        %2321 = vmatpush.msra.mxu0 0.0
        %2322 = vmatpush.msra.mxu0 0.0
        %2323 = vmatpush.msra.mxu0 0.0
        %2324 = vmatpush.msra.mxu0 0.0
        %2325 = vmatpush.msra.mxu0 0.0
        %2326 = vmatpush.msra.mxu0 0.0
        %2327 = vmatpush.msra.mxu0 0.0
        %2328 = vmatpush.msra.mxu0 0.0
        %2329 = vmatpush.msra.mxu0 0.0
        %2330 = vmatpush.msra.mxu0 0.0
        %2331 = vmatpush.msra.mxu0 0.0
        %2332 = vmatpush.msra.mxu0 0.0
        %2333 = vmatpush.msra.mxu0 0.0
        %2334 = vmatpush.msra.mxu0 0.0
        %2335 = vmatpush.msra.mxu0 %v2201
        %2336 = vmatpush.msra.mxu0 %v2190
        %2337 = vmatmul.f32.gmra.mxu0 %v2316
        %v2338 = vpop.f32.mrf.mxu0
        %v2339 = vadd.f32 0.0, %v2338
        %2340 = vmatmul.f32.gmra.mxu0 %v2319
        %v2341 = vpop.f32.mrf.mxu0
        %v2342 = vadd.f32 0.0, %v2341
        %2343 = vdwg.mxu0
        %v2345 = vsel %vm2199, %v2342, 0
        %2347 = vmatpush.msra.mxu0 0.0
        %2348 = vmatpush.msra.mxu0 0.0
        %2349 = vmatpush.msra.mxu0 0.0
        %2350 = vmatpush.msra.mxu0 0.0
        %2351 = vmatpush.msra.mxu0 0.0
        %2352 = vmatpush.msra.mxu0 0.0
        %2353 = vmatpush.msra.mxu0 0.0
        %2354 = vmatpush.msra.mxu0 0.0
        %2355 = vmatpush.msra.mxu0 0.0
        %2356 = vmatpush.msra.mxu0 0.0
        %2357 = vmatpush.msra.mxu0 0.0
        %2358 = vmatpush.msra.mxu0 0.0
        %2359 = vmatpush.msra.mxu0 0.0
        %2360 = vmatpush.msra.mxu0 0.0
        %2361 = vmatpush.msra.mxu0 %v2345
        %2362 = vmatpush.msra.mxu0 %v2339
        %2363 = vmatmul.f32.gmra.mxu0 %v2227
        %v2364 = vpop.f32.mrf.mxu0
        %v2365 = vadd.f32 0.0, %v2364
        %2366 = vmatmul.f32.gmra.mxu0 %v2230
        %v2367 = vpop.f32.mrf.mxu0
        %v2368 = vadd.f32 0.0, %v2367
        %2369 = vdwg.mxu0
        %v2370 = vmul.f32 %v2183, %v2183
        %v2371 = vmul.f32 %v2186, %v2186
        %v2373 = vsel %vm2192, %v2370, 0
        %v2376 = vsel %vm2192, %v2371, 0
        %2378 = vmatpush.msra.mxu0 0.0
        %2379 = vmatpush.msra.mxu0 0.0
        %2380 = vmatpush.msra.mxu0 0.0
        %2381 = vmatpush.msra.mxu0 0.0
        %2382 = vmatpush.msra.mxu0 0.0
        %2383 = vmatpush.msra.mxu0 0.0
        %2384 = vmatpush.msra.mxu0 0.0
        %2385 = vmatpush.msra.mxu0 0.0
        %2386 = vmatpush.msra.mxu0 0.0
        %2387 = vmatpush.msra.mxu0 0.0
        %2388 = vmatpush.msra.mxu0 0.0
        %2389 = vmatpush.msra.mxu0 0.0
        %2390 = vmatpush.msra.mxu0 0.0
        %2391 = vmatpush.msra.mxu0 0.0
        %2392 = vmatpush.msra.mxu0 %v2201
        %2393 = vmatpush.msra.mxu0 %v2190
        %2394 = vmatmul.f32.gmra.mxu0 %v2373
        %v2395 = vpop.f32.mrf.mxu0
        %v2396 = vadd.f32 0.0, %v2395
        %2397 = vmatmul.f32.gmra.mxu0 %v2376
        %v2398 = vpop.f32.mrf.mxu0
        %v2399 = vadd.f32 0.0, %v2398
        %2400 = vdwg.mxu0
        %v2402 = vsel %vm2199, %v2399, 0
        %2404 = vmatpush.msra.mxu0 0.0
        %2405 = vmatpush.msra.mxu0 0.0
        %2406 = vmatpush.msra.mxu0 0.0
        %2407 = vmatpush.msra.mxu0 0.0
        %2408 = vmatpush.msra.mxu0 0.0
        %2409 = vmatpush.msra.mxu0 0.0
        %2410 = vmatpush.msra.mxu0 0.0
        %2411 = vmatpush.msra.mxu0 0.0
        %2412 = vmatpush.msra.mxu0 0.0
        %2413 = vmatpush.msra.mxu0 0.0
        %2414 = vmatpush.msra.mxu0 0.0
        %2415 = vmatpush.msra.mxu0 0.0
        %2416 = vmatpush.msra.mxu0 0.0
        %2417 = vmatpush.msra.mxu0 0.0
        %2418 = vmatpush.msra.mxu0 %v2402
        %2419 = vmatpush.msra.mxu0 %v2396
        %2420 = vmatmul.f32.gmra.mxu0 %v2227
        %v2421 = vpop.f32.mrf.mxu0
        %v2422 = vadd.f32 0.0, %v2421
        %2423 = vmatmul.f32.gmra.mxu0 %v2230
        %v2424 = vpop.f32.mrf.mxu0
        %v2425 = vadd.f32 0.0, %v2424
        %2426 = vdwg.mxu0
        %v2427 = vmul.f32 %v2128, %v2183
        %v2428 = vmul.f32 %v2131, %v2186
        %v2430 = vsel %vm2192, %v2427, 0
        %v2433 = vsel %vm2192, %v2428, 0
        %2435 = vmatpush.msra.mxu0 0.0
        %2436 = vmatpush.msra.mxu0 0.0
        %2437 = vmatpush.msra.mxu0 0.0
        %2438 = vmatpush.msra.mxu0 0.0
        %2439 = vmatpush.msra.mxu0 0.0
        %2440 = vmatpush.msra.mxu0 0.0
        %2441 = vmatpush.msra.mxu0 0.0
        %2442 = vmatpush.msra.mxu0 0.0
        %2443 = vmatpush.msra.mxu0 0.0
        %2444 = vmatpush.msra.mxu0 0.0
        %2445 = vmatpush.msra.mxu0 0.0
        %2446 = vmatpush.msra.mxu0 0.0
        %2447 = vmatpush.msra.mxu0 0.0
        %2448 = vmatpush.msra.mxu0 0.0
        %2449 = vmatpush.msra.mxu0 %v2201
        %2450 = vmatpush.msra.mxu0 %v2190
        %2451 = vmatmul.f32.gmra.mxu0 %v2430
        %v2452 = vpop.f32.mrf.mxu0
        %v2453 = vadd.f32 0.0, %v2452
        %2454 = vmatmul.f32.gmra.mxu0 %v2433
        %v2455 = vpop.f32.mrf.mxu0
        %v2456 = vadd.f32 0.0, %v2455
        %2457 = vdwg.mxu0
        %v2459 = vsel %vm2199, %v2456, 0
        %2461 = vmatpush.msra.mxu0 0.0
        %2462 = vmatpush.msra.mxu0 0.0
        %2463 = vmatpush.msra.mxu0 0.0
        %2464 = vmatpush.msra.mxu0 0.0
        %2465 = vmatpush.msra.mxu0 0.0
        %2466 = vmatpush.msra.mxu0 0.0
        %2467 = vmatpush.msra.mxu0 0.0
        %2468 = vmatpush.msra.mxu0 0.0
        %2469 = vmatpush.msra.mxu0 0.0
        %2470 = vmatpush.msra.mxu0 0.0
        %2471 = vmatpush.msra.mxu0 0.0
        %2472 = vmatpush.msra.mxu0 0.0
        %2473 = vmatpush.msra.mxu0 0.0
        %2474 = vmatpush.msra.mxu0 0.0
        %2475 = vmatpush.msra.mxu0 %v2459
        %2476 = vmatpush.msra.mxu0 %v2453
        %2477 = vmatmul.f32.gmra.mxu0 %v2227
        %v2478 = vpop.f32.mrf.mxu0
        %v2479 = vadd.f32 0.0, %v2478
        %2480 = vmatmul.f32.gmra.mxu0 %v2230
        %v2481 = vpop.f32.mrf.mxu0
        %v2482 = vadd.f32 0.0, %v2481
        %2483 = vdwg.mxu0
        %v2484 = vmul.f32 %v2253, %v2253
        %v2485 = vmul.f32 %v2256, %v2256
        %v2486 = vmul.f32 %v2308, %v2308
        %v2487 = vmul.f32 %v2311, %v2311
        %v2488 = vmul.f32 %v2253, %v2308
        %v2489 = vmul.f32 %v2256, %v2311
        %v2490 = vsub.f32 %v2365, %v2484
        %v2491 = vsub.f32 %v2368, %v2485
        %v2492 = vsub.f32 %v2422, %v2486
        %v2493 = vsub.f32 %v2425, %v2487
        %v2494 = vsub.f32 %v2479, %v2488
        %v2495 = vsub.f32 %v2482, %v2489
        %v2496 = vmul.f32 %v2494, 2.0
        %v2497 = vmul.f32 %v2495, 2.0
        %v2498 = vadd.f32 %v2496, 0.0009
        %v2499 = vadd.f32 %v2497, 0.0009
        %v2500 = vadd.f32 %v2490, %v2492
        %v2501 = vadd.f32 %v2491, %v2493
        %v2502 = vadd.f32 %v2500, 0.0009
        %v2503 = vadd.f32 %v2501, 0.0009
        %v2504 = vrcp.pop %v2502
        %v2505 = vmul.f32 %v2502, %v2504
        %v2506 = vsub.f32 1.0, %v2505
        %v2507 = vmul.f32 %v2504, %v2506
        %v2508 = vadd.f32 %v2504, %v2507
        %vm2509 = vweird.f32 %v2502
        %vm2510 = vweird.f32 %v2504
        %vm2511 = vmor %vm2509, %vm2510
        %v2512 = vsel %vm2511, %v2504, %v2508
        %v2513 = vand.u32 2147483647, %v2502
        %vm2514 = vcmp.eq.f32.partialorder %v2513, 8.507059e+37
        %v2515 = vand.u32 %v2502, 2147483648
        %v2516 = vor.u32 1.1754944e-38, %v2515
        %v2517 = vsel %vm2514, %v2516, %v2512
        %v2518 = vrcp.pop %v2503
        %v2519 = vmul.f32 %v2503, %v2518
        %v2520 = vsub.f32 1.0, %v2519
        %v2521 = vmul.f32 %v2518, %v2520
        %v2522 = vadd.f32 %v2518, %v2521
        %vm2523 = vweird.f32 %v2503
        %vm2524 = vweird.f32 %v2518
        %vm2525 = vmor %vm2523, %vm2524
        %v2526 = vsel %vm2525, %v2518, %v2522
        %v2527 = vand.u32 2147483647, %v2503
        %vm2528 = vcmp.eq.f32.partialorder %v2527, 8.507059e+37
        %v2529 = vand.u32 %v2503, 2147483648
        %v2530 = vor.u32 1.1754944e-38, %v2529
        %v2531 = vsel %vm2528, %v2530, %v2526
        %v2532 = vmul.f32 %v2498, %v2517
        %v2533 = vmul.f32 %v2499, %v2531
        %vm2534 = vcmask 89088
        %v2535 = vsel %vm2534, %v2532, 0.0
        %vm2536 = vcmask 83968
        %v2537 = vsel %vm2536, %v2533, 0.0
        %v2538 = vadd.f32 %v2535, %v2537
        %2539 = vadd.xlane.f32.xlu0 %v2538
        %v2540 = vpop.xlane.xlu0 %2539
        %v2541 = vrot.slane %v2540, 4
        %v2542 = vadd.f32 %v2540, %v2541
        %v2543 = vrot.slane %v2542, 2
        %v2544 = vadd.f32 %v2542, %v2543
        %v2545 = vrot.slane %v2544, 1
        %v2546 = vadd.f32 %v2544, %v2545
        %s2547 = vtos %v2546
        %v2548 = vstv %s2547
        %v2549 = vmul.f32 %v2548, 0.008264462
        %v2550 = vld [vmem:[%s16] sm:$0x7f]
        %v2551 = vld [vmem:[%s17] sm:$0xff]
        %v2552 = vld [vmem:[%s17 + $0x8] sm:$0x1f]
        %v2554 = vsel %vm2199, %v2552, 0
        %2556 = vmatpush.msra.mxu0 0.0
        %2557 = vmatpush.msra.mxu0 0.0
        %2558 = vmatpush.msra.mxu0 0.0
        %2559 = vmatpush.msra.mxu0 0.0
        %2560 = vmatpush.msra.mxu0 0.0
        %2561 = vmatpush.msra.mxu0 0.0
        %2562 = vmatpush.msra.mxu0 0.0
        %2563 = vmatpush.msra.mxu0 0.0
        %2564 = vmatpush.msra.mxu0 0.0
        %2565 = vmatpush.msra.mxu0 0.0
        %2566 = vmatpush.msra.mxu0 0.0
        %2567 = vmatpush.msra.mxu0 0.0
        %2568 = vmatpush.msra.mxu0 0.0
        %2569 = vmatpush.msra.mxu0 0.0
        %2570 = vmatpush.msra.mxu0 %v2554
        %2571 = vmatpush.msra.mxu0 %v2551
        %2572 = vmatmul.f32.gmra.mxu0 %v2194
        %v2573 = vpop.f32.mrf.mxu0
        %v2574 = vadd.f32 0.0, %v2573
        %2575 = vmatmul.f32.gmra.mxu0 %v2197
        %v2576 = vpop.f32.mrf.mxu0
        %v2577 = vadd.f32 0.0, %v2576
        %2578 = vdwg.mxu0
        %v2580 = vsel %vm2192, %v2550, 0
        %v2583 = vsel %vm2199, %v2577, 0
        %2585 = vmatpush.msra.mxu0 0.0
        %2586 = vmatpush.msra.mxu0 0.0
        %2587 = vmatpush.msra.mxu0 0.0
        %2588 = vmatpush.msra.mxu0 0.0
        %2589 = vmatpush.msra.mxu0 0.0
        %2590 = vmatpush.msra.mxu0 0.0
        %2591 = vmatpush.msra.mxu0 0.0
        %2592 = vmatpush.msra.mxu0 0.0
        %2593 = vmatpush.msra.mxu0 0.0
        %2594 = vmatpush.msra.mxu0 0.0
        %2595 = vmatpush.msra.mxu0 0.0
        %2596 = vmatpush.msra.mxu0 0.0
        %2597 = vmatpush.msra.mxu0 0.0
        %2598 = vmatpush.msra.mxu0 0.0
        %2599 = vmatpush.msra.mxu0 %v2583
        %2600 = vmatpush.msra.mxu0 %v2574
        %2601 = vmatmul.f32.gmra.mxu0 %v2580
        %v2602 = vpop.f32.mrf.mxu0
        %v2603 = vadd.f32 0.0, %v2602
        %2604 = vdwg.mxu0
        %2605 = vmatpush.msra.mxu0 0.0
        %2606 = vmatpush.msra.mxu0 0.0
        %2607 = vmatpush.msra.mxu0 0.0
        %2608 = vmatpush.msra.mxu0 0.0
        %2609 = vmatpush.msra.mxu0 0.0
        %2610 = vmatpush.msra.mxu0 0.0
        %2611 = vmatpush.msra.mxu0 0.0
        %2612 = vmatpush.msra.mxu0 0.0
        %2613 = vmatpush.msra.mxu0 0.0
        %2614 = vmatpush.msra.mxu0 0.0
        %2615 = vmatpush.msra.mxu0 0.0
        %2616 = vmatpush.msra.mxu0 0.0
        %2617 = vmatpush.msra.mxu0 0.0
        %2618 = vmatpush.msra.mxu0 0.0
        %2619 = vmatpush.msra.mxu0 %v2554
        %2620 = vmatpush.msra.mxu0 %v2551
        %2621 = vmatmul.f32.gmra.mxu0 %v2259
        %v2622 = vpop.f32.mrf.mxu0
        %v2623 = vadd.f32 0.0, %v2622
        %2624 = vmatmul.f32.gmra.mxu0 %v2262
        %v2625 = vpop.f32.mrf.mxu0
        %v2626 = vadd.f32 0.0, %v2625
        %2627 = vdwg.mxu0
        %v2629 = vsel %vm2199, %v2626, 0
        %2631 = vmatpush.msra.mxu0 0.0
        %2632 = vmatpush.msra.mxu0 0.0
        %2633 = vmatpush.msra.mxu0 0.0
        %2634 = vmatpush.msra.mxu0 0.0
        %2635 = vmatpush.msra.mxu0 0.0
        %2636 = vmatpush.msra.mxu0 0.0
        %2637 = vmatpush.msra.mxu0 0.0
        %2638 = vmatpush.msra.mxu0 0.0
        %2639 = vmatpush.msra.mxu0 0.0
        %2640 = vmatpush.msra.mxu0 0.0
        %2641 = vmatpush.msra.mxu0 0.0
        %2642 = vmatpush.msra.mxu0 0.0
        %2643 = vmatpush.msra.mxu0 0.0
        %2644 = vmatpush.msra.mxu0 0.0
        %2645 = vmatpush.msra.mxu0 %v2629
        %2646 = vmatpush.msra.mxu0 %v2623
        %2647 = vmatmul.f32.gmra.mxu0 %v2580
        %v2648 = vpop.f32.mrf.mxu0
        %v2649 = vadd.f32 0.0, %v2648
        %2650 = vdwg.mxu0
        %v2651 = vld [vmem:[%s8] sm:$0x1f]
        %v2652 = vld [vmem:[%s9] sm:$0x7f]
        %vm2653 = vcmask 56320
        %v2655 = vsel %vm2653, %v2603, 0
        %vm2657 = vcmask 1046528
        %v2659 = vsel %vm2657, %v2652, 0
        %2661 = vmatpush.msra.mxu0 0.0
        %2662 = vmatpush.msra.mxu0 0.0
        %2663 = vmatpush.msra.mxu0 0.0
        %2664 = vmatpush.msra.mxu0 0.0
        %2665 = vmatpush.msra.mxu0 0.0
        %2666 = vmatpush.msra.mxu0 0.0
        %2667 = vmatpush.msra.mxu0 0.0
        %2668 = vmatpush.msra.mxu0 0.0
        %2669 = vmatpush.msra.mxu0 0.0
        %2670 = vmatpush.msra.mxu0 0.0
        %2671 = vmatpush.msra.mxu0 0.0
        %2672 = vmatpush.msra.mxu0 0.0
        %2673 = vmatpush.msra.mxu0 0.0
        %2674 = vmatpush.msra.mxu0 0.0
        %2675 = vmatpush.msra.mxu0 0.0
        %2676 = vmatpush.msra.mxu0 %v2659
        %2677 = vmatmul.f32.gmra.mxu0 %v2655
        %v2678 = vpop.f32.mrf.mxu0
        %v2679 = vadd.f32 0.0, %v2678
        %2680 = vdwg.mxu0
        %v2682 = vsel %vm2653, %v2651, 0
        %v2685 = vsel %vm2657, %v2679, 0
        %2687 = vmatpush.msra.mxu0 0.0
        %2688 = vmatpush.msra.mxu0 0.0
        %2689 = vmatpush.msra.mxu0 0.0
        %2690 = vmatpush.msra.mxu0 0.0
        %2691 = vmatpush.msra.mxu0 0.0
        %2692 = vmatpush.msra.mxu0 0.0
        %2693 = vmatpush.msra.mxu0 0.0
        %2694 = vmatpush.msra.mxu0 0.0
        %2695 = vmatpush.msra.mxu0 0.0
        %2696 = vmatpush.msra.mxu0 0.0
        %2697 = vmatpush.msra.mxu0 0.0
        %2698 = vmatpush.msra.mxu0 0.0
        %2699 = vmatpush.msra.mxu0 0.0
        %2700 = vmatpush.msra.mxu0 0.0
        %2701 = vmatpush.msra.mxu0 0.0
        %2702 = vmatpush.msra.mxu0 %v2685
        %2703 = vmatmul.f32.gmra.mxu0 %v2682
        %v2704 = vpop.f32.mrf.mxu0
        %v2705 = vadd.f32 0.0, %v2704
        %2706 = vdwg.mxu0
        %v2708 = vsel %vm2653, %v2649, 0
        %2710 = vmatpush.msra.mxu0 0.0
        %2711 = vmatpush.msra.mxu0 0.0
        %2712 = vmatpush.msra.mxu0 0.0
        %2713 = vmatpush.msra.mxu0 0.0
        %2714 = vmatpush.msra.mxu0 0.0
        %2715 = vmatpush.msra.mxu0 0.0
        %2716 = vmatpush.msra.mxu0 0.0
        %2717 = vmatpush.msra.mxu0 0.0
        %2718 = vmatpush.msra.mxu0 0.0
        %2719 = vmatpush.msra.mxu0 0.0
        %2720 = vmatpush.msra.mxu0 0.0
        %2721 = vmatpush.msra.mxu0 0.0
        %2722 = vmatpush.msra.mxu0 0.0
        %2723 = vmatpush.msra.mxu0 0.0
        %2724 = vmatpush.msra.mxu0 0.0
        %2725 = vmatpush.msra.mxu0 %v2659
        %2726 = vmatmul.f32.gmra.mxu0 %v2708
        %v2727 = vpop.f32.mrf.mxu0
        %v2728 = vadd.f32 0.0, %v2727
        %2729 = vdwg.mxu0
        %v2731 = vsel %vm2657, %v2728, 0
        %2733 = vmatpush.msra.mxu0 0.0
        %2734 = vmatpush.msra.mxu0 0.0
        %2735 = vmatpush.msra.mxu0 0.0
        %2736 = vmatpush.msra.mxu0 0.0
        %2737 = vmatpush.msra.mxu0 0.0
        %2738 = vmatpush.msra.mxu0 0.0
        %2739 = vmatpush.msra.mxu0 0.0
        %2740 = vmatpush.msra.mxu0 0.0
        %2741 = vmatpush.msra.mxu0 0.0
        %2742 = vmatpush.msra.mxu0 0.0
        %2743 = vmatpush.msra.mxu0 0.0
        %2744 = vmatpush.msra.mxu0 0.0
        %2745 = vmatpush.msra.mxu0 0.0
        %2746 = vmatpush.msra.mxu0 0.0
        %2747 = vmatpush.msra.mxu0 0.0
        %2748 = vmatpush.msra.mxu0 %v2731
        %2749 = vmatmul.f32.gmra.mxu0 %v2682
        %v2750 = vpop.f32.mrf.mxu0
        %v2751 = vadd.f32 0.0, %v2750
        %2752 = vdwg.mxu0
        %v2753 = vmul.f32 %v2603, %v2603
        %v2755 = vsel %vm2653, %v2753, 0
        %2757 = vmatpush.msra.mxu0 0.0
        %2758 = vmatpush.msra.mxu0 0.0
        %2759 = vmatpush.msra.mxu0 0.0
        %2760 = vmatpush.msra.mxu0 0.0
        %2761 = vmatpush.msra.mxu0 0.0
        %2762 = vmatpush.msra.mxu0 0.0
        %2763 = vmatpush.msra.mxu0 0.0
        %2764 = vmatpush.msra.mxu0 0.0
        %2765 = vmatpush.msra.mxu0 0.0
        %2766 = vmatpush.msra.mxu0 0.0
        %2767 = vmatpush.msra.mxu0 0.0
        %2768 = vmatpush.msra.mxu0 0.0
        %2769 = vmatpush.msra.mxu0 0.0
        %2770 = vmatpush.msra.mxu0 0.0
        %2771 = vmatpush.msra.mxu0 0.0
        %2772 = vmatpush.msra.mxu0 %v2659
        %2773 = vmatmul.f32.gmra.mxu0 %v2755
        %v2774 = vpop.f32.mrf.mxu0
        %v2775 = vadd.f32 0.0, %v2774
        %2776 = vdwg.mxu0
        %v2778 = vsel %vm2657, %v2775, 0
        %2780 = vmatpush.msra.mxu0 0.0
        %2781 = vmatpush.msra.mxu0 0.0
        %2782 = vmatpush.msra.mxu0 0.0
        %2783 = vmatpush.msra.mxu0 0.0
        %2784 = vmatpush.msra.mxu0 0.0
        %2785 = vmatpush.msra.mxu0 0.0
        %2786 = vmatpush.msra.mxu0 0.0
        %2787 = vmatpush.msra.mxu0 0.0
        %2788 = vmatpush.msra.mxu0 0.0
        %2789 = vmatpush.msra.mxu0 0.0
        %2790 = vmatpush.msra.mxu0 0.0
        %2791 = vmatpush.msra.mxu0 0.0
        %2792 = vmatpush.msra.mxu0 0.0
        %2793 = vmatpush.msra.mxu0 0.0
        %2794 = vmatpush.msra.mxu0 0.0
        %2795 = vmatpush.msra.mxu0 %v2778
        %2796 = vmatmul.f32.gmra.mxu0 %v2682
        %v2797 = vpop.f32.mrf.mxu0
        %v2798 = vadd.f32 0.0, %v2797
        %2799 = vdwg.mxu0
        %v2800 = vmul.f32 %v2649, %v2649
        %v2802 = vsel %vm2653, %v2800, 0
        %2804 = vmatpush.msra.mxu0 0.0
        %2805 = vmatpush.msra.mxu0 0.0
        %2806 = vmatpush.msra.mxu0 0.0
        %2807 = vmatpush.msra.mxu0 0.0
        %2808 = vmatpush.msra.mxu0 0.0
        %2809 = vmatpush.msra.mxu0 0.0
        %2810 = vmatpush.msra.mxu0 0.0
        %2811 = vmatpush.msra.mxu0 0.0
        %2812 = vmatpush.msra.mxu0 0.0
        %2813 = vmatpush.msra.mxu0 0.0
        %2814 = vmatpush.msra.mxu0 0.0
        %2815 = vmatpush.msra.mxu0 0.0
        %2816 = vmatpush.msra.mxu0 0.0
        %2817 = vmatpush.msra.mxu0 0.0
        %2818 = vmatpush.msra.mxu0 0.0
        %2819 = vmatpush.msra.mxu0 %v2659
        %2820 = vmatmul.f32.gmra.mxu0 %v2802
        %v2821 = vpop.f32.mrf.mxu0
        %v2822 = vadd.f32 0.0, %v2821
        %2823 = vdwg.mxu0
        %v2825 = vsel %vm2657, %v2822, 0
        %2827 = vmatpush.msra.mxu0 0.0
        %2828 = vmatpush.msra.mxu0 0.0
        %2829 = vmatpush.msra.mxu0 0.0
        %2830 = vmatpush.msra.mxu0 0.0
        %2831 = vmatpush.msra.mxu0 0.0
        %2832 = vmatpush.msra.mxu0 0.0
        %2833 = vmatpush.msra.mxu0 0.0
        %2834 = vmatpush.msra.mxu0 0.0
        %2835 = vmatpush.msra.mxu0 0.0
        %2836 = vmatpush.msra.mxu0 0.0
        %2837 = vmatpush.msra.mxu0 0.0
        %2838 = vmatpush.msra.mxu0 0.0
        %2839 = vmatpush.msra.mxu0 0.0
        %2840 = vmatpush.msra.mxu0 0.0
        %2841 = vmatpush.msra.mxu0 0.0
        %2842 = vmatpush.msra.mxu0 %v2825
        %2843 = vmatmul.f32.gmra.mxu0 %v2682
        %v2844 = vpop.f32.mrf.mxu0
        %v2845 = vadd.f32 0.0, %v2844
        %2846 = vdwg.mxu0
        %v2847 = vmul.f32 %v2603, %v2649
        %v2849 = vsel %vm2653, %v2847, 0
        %2851 = vmatpush.msra.mxu0 0.0
        %2852 = vmatpush.msra.mxu0 0.0
        %2853 = vmatpush.msra.mxu0 0.0
        %2854 = vmatpush.msra.mxu0 0.0
        %2855 = vmatpush.msra.mxu0 0.0
        %2856 = vmatpush.msra.mxu0 0.0
        %2857 = vmatpush.msra.mxu0 0.0
        %2858 = vmatpush.msra.mxu0 0.0
        %2859 = vmatpush.msra.mxu0 0.0
        %2860 = vmatpush.msra.mxu0 0.0
        %2861 = vmatpush.msra.mxu0 0.0
        %2862 = vmatpush.msra.mxu0 0.0
        %2863 = vmatpush.msra.mxu0 0.0
        %2864 = vmatpush.msra.mxu0 0.0
        %2865 = vmatpush.msra.mxu0 0.0
        %2866 = vmatpush.msra.mxu0 %v2659
        %2867 = vmatmul.f32.gmra.mxu0 %v2849
        %v2868 = vpop.f32.mrf.mxu0
        %v2869 = vadd.f32 0.0, %v2868
        %2870 = vdwg.mxu0
        %v2872 = vsel %vm2657, %v2869, 0
        %2874 = vmatpush.msra.mxu0 0.0
        %2875 = vmatpush.msra.mxu0 0.0
        %2876 = vmatpush.msra.mxu0 0.0
        %2877 = vmatpush.msra.mxu0 0.0
        %2878 = vmatpush.msra.mxu0 0.0
        %2879 = vmatpush.msra.mxu0 0.0
        %2880 = vmatpush.msra.mxu0 0.0
        %2881 = vmatpush.msra.mxu0 0.0
        %2882 = vmatpush.msra.mxu0 0.0
        %2883 = vmatpush.msra.mxu0 0.0
        %2884 = vmatpush.msra.mxu0 0.0
        %2885 = vmatpush.msra.mxu0 0.0
        %2886 = vmatpush.msra.mxu0 0.0
        %2887 = vmatpush.msra.mxu0 0.0
        %2888 = vmatpush.msra.mxu0 0.0
        %2889 = vmatpush.msra.mxu0 %v2872
        %2890 = vmatmul.f32.gmra.mxu0 %v2682
        %v2891 = vpop.f32.mrf.mxu0
        %v2892 = vadd.f32 0.0, %v2891
        %2893 = vdwg.mxu0
        %v2894 = vmul.f32 %v2705, %v2705
        %v2895 = vmul.f32 %v2751, %v2751
        %v2896 = vmul.f32 %v2705, %v2751
        %v2897 = vsub.f32 %v2798, %v2894
        %v2898 = vsub.f32 %v2845, %v2895
        %v2899 = vsub.f32 %v2892, %v2896
        %v2900 = vmul.f32 %v2899, 2.0
        %v2901 = vadd.f32 %v2900, 0.0009
        %v2902 = vadd.f32 %v2897, %v2898
        %v2903 = vadd.f32 %v2902, 0.0009
        %v2904 = vrcp.pop %v2903
        %v2905 = vmul.f32 %v2903, %v2904
        %v2906 = vsub.f32 1.0, %v2905
        %v2907 = vmul.f32 %v2904, %v2906
        %v2908 = vadd.f32 %v2904, %v2907
        %vm2909 = vweird.f32 %v2903
        %vm2910 = vweird.f32 %v2904
        %vm2911 = vmor %vm2909, %vm2910
        %v2912 = vsel %vm2911, %v2904, %v2908
        %v2913 = vand.u32 2147483647, %v2903
        %vm2914 = vcmp.eq.f32.partialorder %v2913, 8.507059e+37
        %v2915 = vand.u32 %v2903, 2147483648
        %v2916 = vor.u32 1.1754944e-38, %v2915
        %v2917 = vsel %vm2914, %v2916, %v2912
        %v2918 = vmul.f32 %v2901, %v2917
        %vm2919 = vcmask 36864
        %v2920 = vsel %vm2919, %v2918, 0.0
        %2921 = vadd.xlane.f32.xlu0 %v2920
        %v2922 = vpop.xlane.xlu0 %2921
        %v2923 = vrot.slane %v2922, 4
        %v2924 = vadd.f32 %v2922, %v2923
        %v2925 = vrot.slane %v2924, 2
        %v2926 = vadd.f32 %v2924, %v2925
        %v2927 = vrot.slane %v2926, 1
        %v2928 = vadd.f32 %v2926, %v2927
        %s2929 = vtos %v2928
        %v2930 = vstv %s2929
        %v2931 = vmul.f32 %v2930, 0.04
        %v2932 = vld [vmem:[%s18] sm:$0xf]
        %v2933 = vld [vmem:[%s19] sm:$0x7f]
        %v2935 = vsel %vm2657, %v2933, 0
        %2937 = vmatpush.msra.mxu0 0.0
        %2938 = vmatpush.msra.mxu0 0.0
        %2939 = vmatpush.msra.mxu0 0.0
        %2940 = vmatpush.msra.mxu0 0.0
        %2941 = vmatpush.msra.mxu0 0.0
        %2942 = vmatpush.msra.mxu0 0.0
        %2943 = vmatpush.msra.mxu0 0.0
        %2944 = vmatpush.msra.mxu0 0.0
        %2945 = vmatpush.msra.mxu0 0.0
        %2946 = vmatpush.msra.mxu0 0.0
        %2947 = vmatpush.msra.mxu0 0.0
        %2948 = vmatpush.msra.mxu0 0.0
        %2949 = vmatpush.msra.mxu0 0.0
        %2950 = vmatpush.msra.mxu0 0.0
        %2951 = vmatpush.msra.mxu0 0.0
        %2952 = vmatpush.msra.mxu0 %v2935
        %2953 = vmatmul.f32.gmra.mxu0 %v2655
        %v2954 = vpop.f32.mrf.mxu0
        %v2955 = vadd.f32 0.0, %v2954
        %2956 = vdwg.mxu0
        %v2958 = vsel %vm2653, %v2932, 0
        %v2961 = vsel %vm2657, %v2955, 0
        %2963 = vmatpush.msra.mxu0 0.0
        %2964 = vmatpush.msra.mxu0 0.0
        %2965 = vmatpush.msra.mxu0 0.0
        %2966 = vmatpush.msra.mxu0 0.0
        %2967 = vmatpush.msra.mxu0 0.0
        %2968 = vmatpush.msra.mxu0 0.0
        %2969 = vmatpush.msra.mxu0 0.0
        %2970 = vmatpush.msra.mxu0 0.0
        %2971 = vmatpush.msra.mxu0 0.0
        %2972 = vmatpush.msra.mxu0 0.0
        %2973 = vmatpush.msra.mxu0 0.0
        %2974 = vmatpush.msra.mxu0 0.0
        %2975 = vmatpush.msra.mxu0 0.0
        %2976 = vmatpush.msra.mxu0 0.0
        %2977 = vmatpush.msra.mxu0 0.0
        %2978 = vmatpush.msra.mxu0 %v2961
        %2979 = vmatmul.f32.gmra.mxu0 %v2958
        %v2980 = vpop.f32.mrf.mxu0
        %v2981 = vadd.f32 0.0, %v2980
        %2982 = vdwg.mxu0
        %2983 = vmatpush.msra.mxu0 0.0
        %2984 = vmatpush.msra.mxu0 0.0
        %2985 = vmatpush.msra.mxu0 0.0
        %2986 = vmatpush.msra.mxu0 0.0
        %2987 = vmatpush.msra.mxu0 0.0
        %2988 = vmatpush.msra.mxu0 0.0
        %2989 = vmatpush.msra.mxu0 0.0
        %2990 = vmatpush.msra.mxu0 0.0
        %2991 = vmatpush.msra.mxu0 0.0
        %2992 = vmatpush.msra.mxu0 0.0
        %2993 = vmatpush.msra.mxu0 0.0
        %2994 = vmatpush.msra.mxu0 0.0
        %2995 = vmatpush.msra.mxu0 0.0
        %2996 = vmatpush.msra.mxu0 0.0
        %2997 = vmatpush.msra.mxu0 0.0
        %2998 = vmatpush.msra.mxu0 %v2935
        %2999 = vmatmul.f32.gmra.mxu0 %v2708
        %v3000 = vpop.f32.mrf.mxu0
        %v3001 = vadd.f32 0.0, %v3000
        %3002 = vdwg.mxu0
        %v3004 = vsel %vm2657, %v3001, 0
        %3006 = vmatpush.msra.mxu0 0.0
        %3007 = vmatpush.msra.mxu0 0.0
        %3008 = vmatpush.msra.mxu0 0.0
        %3009 = vmatpush.msra.mxu0 0.0
        %3010 = vmatpush.msra.mxu0 0.0
        %3011 = vmatpush.msra.mxu0 0.0
        %3012 = vmatpush.msra.mxu0 0.0
        %3013 = vmatpush.msra.mxu0 0.0
        %3014 = vmatpush.msra.mxu0 0.0
        %3015 = vmatpush.msra.mxu0 0.0
        %3016 = vmatpush.msra.mxu0 0.0
        %3017 = vmatpush.msra.mxu0 0.0
        %3018 = vmatpush.msra.mxu0 0.0
        %3019 = vmatpush.msra.mxu0 0.0
        %3020 = vmatpush.msra.mxu0 0.0
        %3021 = vmatpush.msra.mxu0 %v3004
        %3022 = vmatmul.f32.gmra.mxu0 %v2958
        %v3023 = vpop.f32.mrf.mxu0
        %v3024 = vadd.f32 0.0, %v3023
        %3025 = vdwg.mxu0
        %v3026 = vld [vmem:[%s10] sm:$0x3]
        %v3027 = vld [vmem:[%s11] sm:$0xf]
        %vm3028 = vcmask 31744
        %v3030 = vsel %vm3028, %v2981, 0
        %vm3032 = vcmask 1043456
        %v3034 = vsel %vm3032, %v3027, 0
        %3036 = vmatpush.msra.mxu0 0.0
        %3037 = vmatpush.msra.mxu0 0.0
        %3038 = vmatpush.msra.mxu0 0.0
        %3039 = vmatpush.msra.mxu0 0.0
        %3040 = vmatpush.msra.mxu0 0.0
        %3041 = vmatpush.msra.mxu0 0.0
        %3042 = vmatpush.msra.mxu0 0.0
        %3043 = vmatpush.msra.mxu0 0.0
        %3044 = vmatpush.msra.mxu0 0.0
        %3045 = vmatpush.msra.mxu0 0.0
        %3046 = vmatpush.msra.mxu0 0.0
        %3047 = vmatpush.msra.mxu0 0.0
        %3048 = vmatpush.msra.mxu0 0.0
        %3049 = vmatpush.msra.mxu0 0.0
        %3050 = vmatpush.msra.mxu0 0.0
        %3051 = vmatpush.msra.mxu0 %v3034
        %3052 = vmatmul.f32.gmra.mxu0 %v3030
        %v3053 = vpop.f32.mrf.mxu0
        %v3054 = vadd.f32 0.0, %v3053
        %3055 = vdwg.mxu0
        %v3057 = vsel %vm3028, %v3026, 0
        %v3060 = vsel %vm3032, %v3054, 0
        %3062 = vmatpush.msra.mxu0 0.0
        %3063 = vmatpush.msra.mxu0 0.0
        %3064 = vmatpush.msra.mxu0 0.0
        %3065 = vmatpush.msra.mxu0 0.0
        %3066 = vmatpush.msra.mxu0 0.0
        %3067 = vmatpush.msra.mxu0 0.0
        %3068 = vmatpush.msra.mxu0 0.0
        %3069 = vmatpush.msra.mxu0 0.0
        %3070 = vmatpush.msra.mxu0 0.0
        %3071 = vmatpush.msra.mxu0 0.0
        %3072 = vmatpush.msra.mxu0 0.0
        %3073 = vmatpush.msra.mxu0 0.0
        %3074 = vmatpush.msra.mxu0 0.0
        %3075 = vmatpush.msra.mxu0 0.0
        %3076 = vmatpush.msra.mxu0 0.0
        %3077 = vmatpush.msra.mxu0 %v3060
        %3078 = vmatmul.f32.gmra.mxu0 %v3057
        %v3079 = vpop.f32.mrf.mxu0
        %v3080 = vadd.f32 0.0, %v3079
        %3081 = vdwg.mxu0
        %v3083 = vsel %vm3028, %v3024, 0
        %3085 = vmatpush.msra.mxu0 0.0
        %3086 = vmatpush.msra.mxu0 0.0
        %3087 = vmatpush.msra.mxu0 0.0
        %3088 = vmatpush.msra.mxu0 0.0
        %3089 = vmatpush.msra.mxu0 0.0
        %3090 = vmatpush.msra.mxu0 0.0
        %3091 = vmatpush.msra.mxu0 0.0
        %3092 = vmatpush.msra.mxu0 0.0
        %3093 = vmatpush.msra.mxu0 0.0
        %3094 = vmatpush.msra.mxu0 0.0
        %3095 = vmatpush.msra.mxu0 0.0
        %3096 = vmatpush.msra.mxu0 0.0
        %3097 = vmatpush.msra.mxu0 0.0
        %3098 = vmatpush.msra.mxu0 0.0
        %3099 = vmatpush.msra.mxu0 0.0
        %3100 = vmatpush.msra.mxu0 %v3034
        %3101 = vmatmul.f32.gmra.mxu0 %v3083
        %v3102 = vpop.f32.mrf.mxu0
        %v3103 = vadd.f32 0.0, %v3102
        %3104 = vdwg.mxu0
        %v3106 = vsel %vm3032, %v3103, 0
        %3108 = vmatpush.msra.mxu0 0.0
        %3109 = vmatpush.msra.mxu0 0.0
        %3110 = vmatpush.msra.mxu0 0.0
        %3111 = vmatpush.msra.mxu0 0.0
        %3112 = vmatpush.msra.mxu0 0.0
        %3113 = vmatpush.msra.mxu0 0.0
        %3114 = vmatpush.msra.mxu0 0.0
        %3115 = vmatpush.msra.mxu0 0.0
        %3116 = vmatpush.msra.mxu0 0.0
        %3117 = vmatpush.msra.mxu0 0.0
        %3118 = vmatpush.msra.mxu0 0.0
        %3119 = vmatpush.msra.mxu0 0.0
        %3120 = vmatpush.msra.mxu0 0.0
        %3121 = vmatpush.msra.mxu0 0.0
        %3122 = vmatpush.msra.mxu0 0.0
        %3123 = vmatpush.msra.mxu0 %v3106
        %3124 = vmatmul.f32.gmra.mxu0 %v3057
        %v3125 = vpop.f32.mrf.mxu0
        %v3126 = vadd.f32 0.0, %v3125
        %3127 = vdwg.mxu0
        %v3128 = vmul.f32 %v2981, %v2981
        %v3130 = vsel %vm3028, %v3128, 0
        %3132 = vmatpush.msra.mxu0 0.0
        %3133 = vmatpush.msra.mxu0 0.0
        %3134 = vmatpush.msra.mxu0 0.0
        %3135 = vmatpush.msra.mxu0 0.0
        %3136 = vmatpush.msra.mxu0 0.0
        %3137 = vmatpush.msra.mxu0 0.0
        %3138 = vmatpush.msra.mxu0 0.0
        %3139 = vmatpush.msra.mxu0 0.0
        %3140 = vmatpush.msra.mxu0 0.0
        %3141 = vmatpush.msra.mxu0 0.0
        %3142 = vmatpush.msra.mxu0 0.0
        %3143 = vmatpush.msra.mxu0 0.0
        %3144 = vmatpush.msra.mxu0 0.0
        %3145 = vmatpush.msra.mxu0 0.0
        %3146 = vmatpush.msra.mxu0 0.0
        %3147 = vmatpush.msra.mxu0 %v3034
        %3148 = vmatmul.f32.gmra.mxu0 %v3130
        %v3149 = vpop.f32.mrf.mxu0
        %v3150 = vadd.f32 0.0, %v3149
        %3151 = vdwg.mxu0
        %v3153 = vsel %vm3032, %v3150, 0
        %3155 = vmatpush.msra.mxu0 0.0
        %3156 = vmatpush.msra.mxu0 0.0
        %3157 = vmatpush.msra.mxu0 0.0
        %3158 = vmatpush.msra.mxu0 0.0
        %3159 = vmatpush.msra.mxu0 0.0
        %3160 = vmatpush.msra.mxu0 0.0
        %3161 = vmatpush.msra.mxu0 0.0
        %3162 = vmatpush.msra.mxu0 0.0
        %3163 = vmatpush.msra.mxu0 0.0
        %3164 = vmatpush.msra.mxu0 0.0
        %3165 = vmatpush.msra.mxu0 0.0
        %3166 = vmatpush.msra.mxu0 0.0
        %3167 = vmatpush.msra.mxu0 0.0
        %3168 = vmatpush.msra.mxu0 0.0
        %3169 = vmatpush.msra.mxu0 0.0
        %3170 = vmatpush.msra.mxu0 %v3153
        %3171 = vmatmul.f32.gmra.mxu0 %v3057
        %v3172 = vpop.f32.mrf.mxu0
        %v3173 = vadd.f32 0.0, %v3172
        %3174 = vdwg.mxu0
        %v3175 = vmul.f32 %v3024, %v3024
        %v3177 = vsel %vm3028, %v3175, 0
        %3179 = vmatpush.msra.mxu0 0.0
        %3180 = vmatpush.msra.mxu0 0.0
        %3181 = vmatpush.msra.mxu0 0.0
        %3182 = vmatpush.msra.mxu0 0.0
        %3183 = vmatpush.msra.mxu0 0.0
        %3184 = vmatpush.msra.mxu0 0.0
        %3185 = vmatpush.msra.mxu0 0.0
        %3186 = vmatpush.msra.mxu0 0.0
        %3187 = vmatpush.msra.mxu0 0.0
        %3188 = vmatpush.msra.mxu0 0.0
        %3189 = vmatpush.msra.mxu0 0.0
        %3190 = vmatpush.msra.mxu0 0.0
        %3191 = vmatpush.msra.mxu0 0.0
        %3192 = vmatpush.msra.mxu0 0.0
        %3193 = vmatpush.msra.mxu0 0.0
        %3194 = vmatpush.msra.mxu0 %v3034
        %3195 = vmatmul.f32.gmra.mxu0 %v3177
        %v3196 = vpop.f32.mrf.mxu0
        %v3197 = vadd.f32 0.0, %v3196
        %3198 = vdwg.mxu0
        %v3200 = vsel %vm3032, %v3197, 0
        %3202 = vmatpush.msra.mxu0 0.0
        %3203 = vmatpush.msra.mxu0 0.0
        %3204 = vmatpush.msra.mxu0 0.0
        %3205 = vmatpush.msra.mxu0 0.0
        %3206 = vmatpush.msra.mxu0 0.0
        %3207 = vmatpush.msra.mxu0 0.0
        %3208 = vmatpush.msra.mxu0 0.0
        %3209 = vmatpush.msra.mxu0 0.0
        %3210 = vmatpush.msra.mxu0 0.0
        %3211 = vmatpush.msra.mxu0 0.0
        %3212 = vmatpush.msra.mxu0 0.0
        %3213 = vmatpush.msra.mxu0 0.0
        %3214 = vmatpush.msra.mxu0 0.0
        %3215 = vmatpush.msra.mxu0 0.0
        %3216 = vmatpush.msra.mxu0 0.0
        %3217 = vmatpush.msra.mxu0 %v3200
        %3218 = vmatmul.f32.gmra.mxu0 %v3057
        %v3219 = vpop.f32.mrf.mxu0
        %v3220 = vadd.f32 0.0, %v3219
        %3221 = vdwg.mxu0
        %v3222 = vmul.f32 %v2981, %v3024
        %v3224 = vsel %vm3028, %v3222, 0
        %3226 = vmatpush.msra.mxu0 0.0
        %3227 = vmatpush.msra.mxu0 0.0
        %3228 = vmatpush.msra.mxu0 0.0
        %3229 = vmatpush.msra.mxu0 0.0
        %3230 = vmatpush.msra.mxu0 0.0
        %3231 = vmatpush.msra.mxu0 0.0
        %3232 = vmatpush.msra.mxu0 0.0
        %3233 = vmatpush.msra.mxu0 0.0
        %3234 = vmatpush.msra.mxu0 0.0
        %3235 = vmatpush.msra.mxu0 0.0
        %3236 = vmatpush.msra.mxu0 0.0
        %3237 = vmatpush.msra.mxu0 0.0
        %3238 = vmatpush.msra.mxu0 0.0
        %3239 = vmatpush.msra.mxu0 0.0
        %3240 = vmatpush.msra.mxu0 0.0
        %3241 = vmatpush.msra.mxu0 %v3034
        %3242 = vmatmul.f32.gmra.mxu0 %v3224
        %v3243 = vpop.f32.mrf.mxu0
        %v3244 = vadd.f32 0.0, %v3243
        %3245 = vdwg.mxu0
        %v3247 = vsel %vm3032, %v3244, 0
        %3249 = vmatpush.msra.mxu0 0.0
        %3250 = vmatpush.msra.mxu0 0.0
        %3251 = vmatpush.msra.mxu0 0.0
        %3252 = vmatpush.msra.mxu0 0.0
        %3253 = vmatpush.msra.mxu0 0.0
        %3254 = vmatpush.msra.mxu0 0.0
        %3255 = vmatpush.msra.mxu0 0.0
        %3256 = vmatpush.msra.mxu0 0.0
        %3257 = vmatpush.msra.mxu0 0.0
        %3258 = vmatpush.msra.mxu0 0.0
        %3259 = vmatpush.msra.mxu0 0.0
        %3260 = vmatpush.msra.mxu0 0.0
        %3261 = vmatpush.msra.mxu0 0.0
        %3262 = vmatpush.msra.mxu0 0.0
        %3263 = vmatpush.msra.mxu0 0.0
        %3264 = vmatpush.msra.mxu0 %v3247
        %3265 = vmatmul.f32.gmra.mxu0 %v3057
        %v3266 = vpop.f32.mrf.mxu0
        %v3267 = vadd.f32 0.0, %v3266
        %3268 = vdwg.mxu0
        %v3269 = vmul.f32 %v3080, %v3080
        %v3270 = vmul.f32 %v3126, %v3126
        %v3271 = vmul.f32 %v3080, %v3126
        %v3272 = vsub.f32 %v3173, %v3269
        %v3273 = vsub.f32 %v3220, %v3270
        %v3274 = vsub.f32 %v3267, %v3271
        %v3275 = vmul.f32 %v3274, 2.0
        %v3276 = vadd.f32 %v3275, 0.0009
        %v3277 = vadd.f32 %v3272, %v3273
        %v3278 = vadd.f32 %v3277, 0.0009
        %v3279 = vrcp.pop %v3278
        %v3280 = vmul.f32 %v3278, %v3279
        %v3281 = vsub.f32 1.0, %v3280
        %v3282 = vmul.f32 %v3279, %v3281
        %v3283 = vadd.f32 %v3279, %v3282
        %vm3284 = vweird.f32 %v3278
        %vm3285 = vweird.f32 %v3279
        %vm3286 = vmor %vm3284, %vm3285
        %v3287 = vsel %vm3286, %v3279, %v3283
        %v3288 = vand.u32 2147483647, %v3278
        %vm3289 = vcmp.eq.f32.partialorder %v3288, 8.507059e+37
        %v3290 = vand.u32 %v3278, 2147483648
        %v3291 = vor.u32 1.1754944e-38, %v3290
        %v3292 = vsel %vm3289, %v3291, %v3287
        %v3293 = vmul.f32 %v3276, %v3292
        %v3294 = vmul.f32 %v3271, 2.0
        %v3295 = vadd.f32 %v3294, 0.0001
        %v3296 = vadd.f32 %v3269, %v3270
        %v3297 = vadd.f32 %v3296, 0.0001
        %v3298 = vrcp.pop %v3297
        %v3299 = vmul.f32 %v3297, %v3298
        %v3300 = vsub.f32 1.0, %v3299
        %v3301 = vmul.f32 %v3298, %v3300
        %v3302 = vadd.f32 %v3298, %v3301
        %vm3303 = vweird.f32 %v3297
        %vm3304 = vweird.f32 %v3298
        %vm3305 = vmor %vm3303, %vm3304
        %v3306 = vsel %vm3305, %v3298, %v3302
        %v3307 = vand.u32 2147483647, %v3297
        %vm3308 = vcmp.eq.f32.partialorder %v3307, 8.507059e+37
        %v3309 = vand.u32 %v3297, 2147483648
        %v3310 = vor.u32 1.1754944e-38, %v3309
        %v3311 = vsel %vm3308, %v3310, %v3306
        %v3312 = vmul.f32 %v3295, %v3311
        %v3313 = vmul.f32 %v3312, %v3293
        %vm3314 = vcmask 9216
        %v3315 = vsel %vm3314, %v3313, 0.0
        %3316 = vadd.xlane.f32.xlu0 %v3315
        %v3317 = vpop.xlane.xlu0 %3316
        %v3318 = vrot.slane %v3317, 4
        %v3319 = vadd.f32 %v3317, %v3318
        %v3320 = vrot.slane %v3319, 2
        %v3321 = vadd.f32 %v3319, %v3320
        %v3322 = vrot.slane %v3321, 1
        %v3323 = vadd.f32 %v3321, %v3322
        %s3324 = vtos %v3323
        %v3325 = vstv %s3324
        %v3326 = vmul.f32 %v3325, 0.25
        %v3327 = vlaneseq
        %v3328 = vshrl.u32 %v3327, 7
        %vm3329 = vcmp.eq.s32.totalorder %v3328, 0
        %v3330 = vsel %vm3329, %v1420, 0.0
        %vm3331 = vcmp.eq.s32.totalorder %v3328, 1
        %v3332 = vsel %vm3331, %v2062, %v3330
        %vm3333 = vcmp.eq.s32.totalorder %v3328, 2
        %v3334 = vsel %vm3333, %v2549, %v3332
        %vm3335 = vcmp.eq.s32.totalorder %v3328, 3
        %v3336 = vsel %vm3335, %v2931, %v3334
        %vm3337 = vcmp.eq.s32.totalorder %v3328, 4
        %v3338 = vsel %vm3337, %v3326, %v3336
        %3339 = vst [vmem:[%s691] sm:$0xff] %v3338
        %s3340 = sand.u32 %s478, 1
        %s3341 = scalar_lea.sflag [#allocation4], %s3340
        %s3342 = sand.u32 %s478, 1
        %s3343 = smul.addr %s3342, 8
        %s3344 = scalar_lea.vmem [#allocation7], %s3343
        // Predicated region
        $region109: #{tpu_custom_call.1} parent=99 // pred_check
          %p3345 = pneg %p488
        $region110: #{tpu_custom_call.1} parent=99 // pred_check_branch
          %3347 = sbr.rel (%p3345) target = $region112
        $region111: #{tpu_custom_call.1} parent=99 // pred_region
          %3349 = vsyncadd %s3341, 0
          %s3350 = smul.addr %s40, 8
          %s3351 = scalar_lea.hbm %s20, %s3350
          %s3353 = sshll.u32 %s3344, 4
          %s3354 = int_to_ptr.vmem [resolvable:$true] %s3353
          %s3355 = sshll.u32 %s3351, 4
          %s3356 = int_to_ptr.hbm [resolvable:$true] %s3355
          %3358 = dma.vmem_to_hbm [thread:$0]  %s3354, 128, %s3356, %s3341
        $region112: #{tpu_custom_call.1} parent=99 // pred_fallthru
          _
      $region100: #{tpu_custom_call.1} parent=5 // pred_fallthru
        _
      %p3359 = scmp.le.s32.totalorder 2, %s35
      // Predicated region
      $region113: #{tpu_custom_call.1} parent=5 // pred_check
        %p3360 = pneg %p3359
      $region114: #{tpu_custom_call.1} parent=5 // pred_check_branch
        %3362 = sbr.rel (%p3360) target = $region116
      $region115: #{tpu_custom_call.1} parent=5 // pred_region
        %s3363 = ssub.s32 %s35, 2
        // Predicated region
        $region117: #{tpu_custom_call.1} parent=115 // pred_check
          %p3364 = pneg %p494
        $region118: #{tpu_custom_call.1} parent=115 // pred_check_branch
          %3366 = sbr.rel (%p3364) target = $region120
        $region119: #{tpu_custom_call.1} parent=115 // pred_region
          %s3367 = sand.u32 %s479, 1
          %s3368 = scalar_lea.sflag [#allocation4], %s3367
          %s3369 = sand.u32 %s479, 1
          %s3370 = smul.addr %s3369, 8
          %s3371 = scalar_lea.vmem [#allocation7], %s3370
          %3373 = dma.done %s3368, 128
        $region120: #{tpu_custom_call.1} parent=115 // pred_fallthru
          _
      $region116: #{tpu_custom_call.1} parent=5 // pred_fallthru
        _
    $region6: #{tpu_custom_call.1} parent=1 // loop_footer
      %s39 = sadd.s32 1, %s35
    $region7: #{tpu_custom_call.1} parent=1 // loop_footer_branch
      %34 = sbr.rel target = $region3
    $region8: #{tpu_custom_call.1} parent=1 // loop_exit
      _
    %3374 = vsyncpa [#allocation3], 1
    %s3375 = scalar_lea.sflag [#allocation3], 1
    %3376 = vsyncpa %s3375, 1
    %3377 = vsyncpa [#allocation6], 1
    %s3378 = scalar_lea.sflag [#allocation6], 1
    %3379 = vsyncpa %s3378, 1
    %3380 = vsyncpa [#allocation4], 1
    %s3381 = scalar_lea.sflag [#allocation4], 1
    %3382 = vsyncpa %s3381, 1

</llo_original>
